<compile_context>
chip_gen: v7x
topology: tpu7x:2x2x1
jax: 0.10.0
libtpu: 0.0.40
codegen_flags: <defaults>
</compile_context>

<pallas_src>
import functools

import jax
import jax.numpy as jnp
import numpy as np
from jax.experimental import pallas as pl
from jax.experimental.pallas import tpu as pltpu

LANES = 128                       # conv activations channel-padded to one lane group
CIN0_PAD = 8                      # network input channels (3) padded to 8
TAP_GROUP = 2                     # taps fused per MXU push: K = 2*128 = 256
VMEM_LIMIT_BYTES = 48 * 1024 * 1024   # fits v5e/v6e (128 MiB) and v7x (64 MiB)


# ----------------------------------------------------------------------------
# Shared helper: tap-split shifted-window matmul, `group` taps per MXU push.
#   sum_t dot(tap_t(hw, cin), W[t*cin:(t+1)*cin, :])  with f32 accumulation.
# ----------------------------------------------------------------------------
def _grouped_matmul(tap_fns, w_ref, cin, group):
    acc = None
    for g0 in range(0, len(tap_fns), group):
        fns = tap_fns[g0:g0 + group]
        cols = [f() for f in fns]
        col = cols[0] if len(cols) == 1 else jnp.concatenate(cols, axis=-1)
        part = jnp.dot(col.astype(jnp.bfloat16),
                       w_ref[pl.ds(g0 * cin, len(fns) * cin), :],
                       preferred_element_type=jnp.float32)
        acc = part if acc is None else acc + part
    return acc


# ----------------------------------------------------------------------------
# Kernel 1: fused stem = layer0 (3x3 s1 Conv+BN+SiLU) -> layer1 (3x3 s2).
#   y0 stays entirely in VMEM.  Layer 0 is computed once per output parity
#   phase (reading a space-to-depth'd padded RAW input, prepared once in the
#   wrapper on the tiny 8-channel tensor), so layer 1's stride-2 taps are
#   contiguous reads of the phase buffers -- no strided ds, no HBM round trip.
# ----------------------------------------------------------------------------
def _fused_stem_kernel(xs_ref, w0_ref, b0_ref, w1_ref, b1_ref, o_ref, y0s_ref,
                       *, ho, wo, cin0, c, group):
    hw = ho * wo
    # Zero only the leading pad row / pad col of each phase buffer; the
    # interior is fully overwritten every grid step (saves a full vst pass).
    for ph in range(4):
        y0s_ref[ph, pl.ds(0, 1), :, :] = jnp.zeros((1, wo + 1, c), y0s_ref.dtype)
        y0s_ref[ph, :, pl.ds(0, 1), :] = jnp.zeros((ho + 1, 1, c), y0s_ref.dtype)

    # ---- layer 0: per output phase (p, q); one K=9*cin0 matmul per phase.
    for p in range(2):
        for q in range(2):
            def tap0(t, _p=p, _q=q):
                kh, kw = divmod(t, 3)
                u, v = _p + kh, _q + kw
                return xs_ref[0, (u % 2) * 2 + (v % 2),
                              pl.ds(u // 2, ho), pl.ds(v // 2, wo),
                              :].reshape(hw, cin0)
            a0 = _grouped_matmul([functools.partial(tap0, t) for t in range(9)],
                                 w0_ref, cin0, 9)
            a0 = a0 + b0_ref[...]
            y0 = a0 * jax.nn.sigmoid(a0)                      # SiLU in f32
            y0s_ref[p * 2 + q, pl.ds(1, ho), pl.ds(1, wo), :] = (
                y0.reshape(ho, wo, c))

    # ---- layer 1: stride-2 3x3; tap (kh,kw) reads phase ((kh+1)%2,(kw+1)%2)
    #      of y0 at offset 0 (hits the zero pad for kh/kw == 0) or 1.
    def tap1(t):
        kh, kw = divmod(t, 3)
        phase = ((kh + 1) % 2) * 2 + ((kw + 1) % 2)
        r0 = 0 if kh == 0 else 1
        c0 = 0 if kw == 0 else 1
        return y0s_ref[phase, pl.ds(r0, ho), pl.ds(c0, wo), :].reshape(hw, c)

    a1 = _grouped_matmul([functools.partial(tap1, t) for t in range(9)],
                         w1_ref, c, group)
    a1 = a1 + b1_ref[...]
    x1 = a1 * jax.nn.sigmoid(a1)
    o_ref[0] = x1.astype(o_ref.dtype)


def fused_stem(x_nhwc, p, *, tap_group=TAP_GROUP):
    n, h, w, cin0 = x_nhwc.shape
    assert h % 2 == 0 and w % 2 == 0
    ho, wo = h // 2, w // 2
    # 'same' pad for layer 0 + 2x2 space-to-depth of the RAW (8-ch) input so
    # every in-kernel read of both convs is a contiguous window.  This is the
    # only wrapper-side layout pass and it runs on the smallest tensor.
    xp = jnp.pad(x_nhwc, ((0, 0), (1, 1), (1, 1), (0, 0)))
    xs = (xp.reshape(n, ho + 1, 2, wo + 1, 2, cin0)
            .transpose(0, 2, 4, 1, 3, 5)
            .reshape(n, 4, ho + 1, wo + 1, cin0))
    kern = functools.partial(_fused_stem_kernel, ho=ho, wo=wo, cin0=cin0,
                             c=LANES, group=tap_group)
    return pl.pallas_call(
        kern,
        out_shape=jax.ShapeDtypeStruct((n, ho * wo, LANES), jnp.bfloat16),
        grid=(n,),
        in_specs=[
            pl.BlockSpec((1, 4, ho + 1, wo + 1, cin0),
                         lambda i: (i, 0, 0, 0, 0)),
            pl.BlockSpec(p["w0"].shape, lambda i: (0, 0)),
            pl.BlockSpec((1, LANES), lambda i: (0, 0)),
            pl.BlockSpec(p["w1"].shape, lambda i: (0, 0)),
            pl.BlockSpec((1, LANES), lambda i: (0, 0)),
        ],
        out_specs=pl.BlockSpec((1, ho * wo, LANES), lambda i: (i, 0, 0)),
        scratch_shapes=[pltpu.VMEM((4, ho + 1, wo + 1, LANES), jnp.float32)],
        compiler_params=pltpu.CompilerParams(
            dimension_semantics=("parallel",),
            vmem_limit_bytes=VMEM_LIMIT_BYTES),
    )(xs, p["w0"], p["b0"], p["w1"], p["b1"])


# ----------------------------------------------------------------------------
# Kernel 2: fused tail = layer2 (1x1) -> layer3 (3x3) -> layer4 (Concat[-1,1])
#           -> layer5 (1x1).  All intermediates stay in VMEM/vregs; the Concat
#           + 1x1 is a single K=2c matmul, never materialized in HBM.
# ----------------------------------------------------------------------------
def _fused_tail_kernel(x1_ref, w2_ref, b2_ref, w3_ref, b3_ref, w5_ref, b5_ref,
                       o_ref, xpad_ref, *, h, w, c, group):
    hw = h * w
    x1 = x1_ref[0]                                    # (hw, c) bf16 saved skip

    # layer 2: 1x1 Conv+BN+SiLU (single K=c matmul)
    a2 = jnp.dot(x1, w2_ref[...], preferred_element_type=jnp.float32)
    a2 = a2 + b2_ref[...]
    x2 = a2 * jax.nn.sigmoid(a2)

    # layer 3: 3x3 'same' Conv+BN+SiLU.  Zero only the 4 border strips of the
    # pad buffer (interior fully overwritten); tap-split matmuls, no im2col.
    xpad_ref[pl.ds(0, 1), :, :] = jnp.zeros((1, w + 2, c), xpad_ref.dtype)
    xpad_ref[pl.ds(h + 1, 1), :, :] = jnp.zeros((1, w + 2, c), xpad_ref.dtype)
    xpad_ref[:, pl.ds(0, 1), :] = jnp.zeros((h + 2, 1, c), xpad_ref.dtype)
    xpad_ref[:, pl.ds(w + 1, 1), :] = jnp.zeros((h + 2, 1, c), xpad_ref.dtype)
    xpad_ref[pl.ds(1, h), pl.ds(1, w), :] = x2.reshape(h, w, c)

    def tap3(t):
        kh, kw = divmod(t, 3)
        return xpad_ref[pl.ds(kh, h), pl.ds(kw, w), :].reshape(hw, c)

    a3 = _grouped_matmul([functools.partial(tap3, t) for t in range(9)],
                         w3_ref, c, group)
    a3 = a3 + b3_ref[...]
    x3 = a3 * jax.nn.sigmoid(a3)

    # layers 4+5: Concat[-1, 1] + 1x1 as ONE K=2c matmul; x1 is re-read from
    # its VMEM block at point of use (no bf16 copy kept live across layer 3).
    cat = jnp.concatenate([x3.astype(jnp.bfloat16), x1], axis=-1)
    a5 = jnp.dot(cat, w5_ref[...], preferred_element_type=jnp.float32)
    a5 = a5 + b5_ref[...]
    x5 = a5 * jax.nn.sigmoid(a5)
    o_ref[0] = x5.astype(o_ref.dtype)


def fused_tail(x1, p, *, h, w, tap_group=TAP_GROUP):
    n, hw, c = x1.shape
    assert hw == h * w and c == LANES
    kern = functools.partial(_fused_tail_kernel, h=h, w=w, c=c, group=tap_group)

    def wspec(shape):
        return pl.BlockSpec(shape, lambda i: tuple(0 for _ in shape))

    return pl.pallas_call(
        kern,
        out_shape=jax.ShapeDtypeStruct((n, hw, c), jnp.bfloat16),
        grid=(n,),
        in_specs=[
            pl.BlockSpec((1, hw, c), lambda i: (i, 0, 0)),   # x1 (saved skip)
            wspec(p["w2"].shape), wspec(p["b2"].shape),
            wspec(p["w3"].shape), wspec(p["b3"].shape),
            wspec(p["w5"].shape), wspec(p["b5"].shape),
        ],
        out_specs=pl.BlockSpec((1, hw, c), lambda i: (i, 0, 0)),
        scratch_shapes=[pltpu.VMEM((h + 2, w + 2, c), jnp.float32)],
        compiler_params=pltpu.CompilerParams(
            dimension_semantics=("parallel",),
            vmem_limit_bytes=VMEM_LIMIT_BYTES),
    )(x1, p["w2"], p["b2"], p["w3"], p["b3"], p["w5"], p["b5"])


# ----------------------------------------------------------------------------
# Layer objects mirroring the yolov5 module attributes (.f, .i)
# ----------------------------------------------------------------------------
class Conv:
    """YOLOv5 Conv block: Conv2d(bias=False) + BatchNorm2d + SiLU.
    BN is folded into the conv weight/bias (synthetic deterministic init)."""

    def __init__(self, i, f, c1, c2, k, s, key):
        self.i, self.f = i, f
        self.c1, self.c2, self.k, self.s, self.p = c1, c2, k, s, k // 2
        kw_, kb_ = jax.random.split(key)
        scale = 1.0 / np.sqrt(c1 * k * k)
        # PyTorch conv weight layout (Cout, Cin, KH, KW) -> HWIO.
        w_oihw = jax.random.normal(kw_, (c2, c1, k, k), jnp.float32) * scale
        self.w = jnp.transpose(w_oihw, (2, 3, 1, 0))       # (KH, KW, Cin, Cout)
        self.b = jax.random.normal(kb_, (c2,), jnp.float32) * 0.1

    def __call__(self, x):                                  # pure-JAX reference op
        return _conv_ref(x, self.w, self.b, self.s, self.p)


class Concat:
    """YOLO Concat (dim=1 in NCHW == last axis in NHWC layout)."""

    def __init__(self, i, f):
        self.i, self.f = i, f

    def __call__(self, xs):
        return jnp.concatenate(xs, axis=-1)


# ----------------------------------------------------------------------------
# Pallas execution plan: pack / lane-pad params and run the fused pipeline.
# Computes exactly the same DAG as YOLOBackbone.forward over `layers`.
# ----------------------------------------------------------------------------
def _pack(w_hwio, b, cin_pad, cout_pad=LANES):
    kh, kw, cin, cout = w_hwio.shape
    wp = jnp.pad(w_hwio, ((0, 0), (0, 0),
                          (0, cin_pad - cin), (0, cout_pad - cout)))
    w2d = wp.reshape(kh * kw * cin_pad, cout_pad).astype(jnp.bfloat16)
    bp = jnp.pad(b, (0, cout_pad - cout)).reshape(1, cout_pad).astype(jnp.float32)
    return w2d, bp


def build_pallas_params(layers):
    l0, l1, l2, l3, l4, l5 = layers
    assert isinstance(l4, Concat) and list(l4.f) == [-1, 1]
    assert (l0.k, l0.s) == (3, 1) and (l1.k, l1.s) == (3, 2)
    assert (l2.k, l2.s) == (1, 1) and (l3.k, l3.s) == (3, 1)
    assert (l5.k, l5.s) == (1, 1)

    p = {}
    p["w0"], p["b0"] = _pack(l0.w, l0.b, CIN0_PAD)          # (72, 128)
    p["w1"], p["b1"] = _pack(l1.w, l1.b, LANES)             # (1152, 128)
    p["w2"], p["b2"] = _pack(l2.w, l2.b, LANES)             # (128, 128)
    p["w3"], p["b3"] = _pack(l3.w, l3.b, LANES)             # (1152, 128)
    ch = l3.c2                                              # concat split: [x3 | x1(saved)]
    w5a, p["b5"] = _pack(l5.w[:, :, :ch, :], l5.b, LANES)
    w5b, _ = _pack(l5.w[:, :, ch:, :], l5.b, LANES)
    p["w5"] = jnp.concatenate([w5a, w5b], axis=0)           # (256, 128) K-stacked
    return p


def backbone_forward_pallas(params, x_nchw, *, cout_final):
    n, cin, h, w = x_nchw.shape
    x = jnp.transpose(x_nchw, (0, 2, 3, 1))                       # NCHW -> NHWC
    x = jnp.pad(x, ((0, 0), (0, 0), (0, 0), (0, CIN0_PAD - cin)))
    # layers 0+1 fused: Conv(3->8,k3,s1) -> Conv(8->16,k3,s2); y0 never hits HBM.
    y1 = fused_stem(x, params)                                    # (n, h*w//4, 128) bf16
    # layers 2..5 fused: 1x1 -> 3x3 -> Concat[-1,1] -> 1x1
    y5 = fused_tail(y1, params, h=h // 2, w=w // 2)               # (n, h*w//4, 128) bf16
    out = (y5.reshape(n, h // 2, w // 2, LANES)[..., :cout_final]
             .astype(jnp.float32))                                # drop lane pad
    return jnp.transpose(out, (0, 3, 1, 2))                       # back to NCHW


# ----------------------------------------------------------------------------
# Pure-JAX reference: exact reproduction of YOLOBackbone.forward routing
# ----------------------------------------------------------------------------
def _conv_ref(x, w, b, stride, padding):
    y = jax.lax.conv_general_dilated(
        x, w, window_strides=(stride, stride),
        padding=[(padding, padding), (padding, padding)],
        dimension_numbers=("NHWC", "HWIO", "NHWC"),
        precision=jax.lax.Precision.HIGHEST)
    y = y + b
    return y * jax.nn.sigmoid(y)


def yolo_backbone_forward_ref(layers, save, x):
    y = []
    for m in layers:
        if m.f != -1:
            if isinstance(m.f, int):
                x = y[m.f]
            else:
                x = [x if j == -1 else y[j] for j in m.f]
        x = m(x)
        y.append(x if m.i in save else None)
    return x


# ----------------------------------------------------------------------------
# Main
# ----------------------------------------------------------------------------
if __name__ == "__main__":
    key = jax.random.PRNGKey(0)
    kx, k0, k1, k2, k3_, k5 = jax.random.split(key, 6)

    # Representative backbone (same routing semantics as the spec):
    #   0: Conv(3->8,  k3, s1)  f=-1
    #   1: Conv(8->16, k3, s2)  f=-1   (16x16 -> 8x8, saved)
    #   2: Conv(16->16,k1, s1)  f=-1
    #   3: Conv(16->16,k3, s1)  f=-1
    #   4: Concat f=[-1, 1]            (16 + 16 = 32 channels)
    #   5: Conv(32->16,k1, s1)  f=-1
    layers = [
        Conv(0, -1, 3, 8, 3, 1, k0),
        Conv(1, -1, 8, 16, 3, 2, k1),
        Conv(2, -1, 16, 16, 1, 1, k2),
        Conv(3, -1, 16, 16, 3, 1, k3_),
        Concat(4, [-1, 1]),
        Conv(5, -1, 32, 16, 1, 1, k5),
    ]
    save = {1}

    # Input in PyTorch NCHW convention.
    x_nchw = jax.random.normal(kx, (2, 3, 16, 16), jnp.float32)

    params = build_pallas_params(layers)
    fwd = jax.jit(functools.partial(backbone_forward_pallas,
                                    cout_final=int(layers[-1].c2)))
    out_nchw = fwd(params, x_nchw)
    jax.block_until_ready(out_nchw)

    # Correctness: compare against the verbatim routing-loop reference (f32).
    x_nhwc = jnp.transpose(x_nchw, (0, 2, 3, 1))
    ref_nhwc = yolo_backbone_forward_ref(layers, save, x_nhwc)
    ref_nchw = jnp.transpose(ref_nhwc, (0, 3, 1, 2))

    assert out_nchw.shape == (2, 16, 8, 8), out_nchw.shape
    # Tolerance reflects bf16 MXU operands + bf16 HBM intermediates (per perf
    # review) versus the f32 Precision.HIGHEST reference.
    np.testing.assert_allclose(np.asarray(out_nchw), np.asarray(ref_nchw),
                               rtol=2.5e-2, atol=2.5e-2)

    print("KERNEL_OK")
</pallas_src>

<mosaic_0001>
module attributes {stable_mosaic.version = 11 : i64} {
  func.func @_fused_stem_kernel(%arg0: i32, %arg1: memref<1x4x9x9x8xf32, #tpu.memory_space<vmem>>, %arg2: memref<72x128xbf16, #tpu.memory_space<vmem>>, %arg3: memref<1x128xf32, #tpu.memory_space<vmem>>, %arg4: memref<1152x128xbf16, #tpu.memory_space<vmem>>, %arg5: memref<1x128xf32, #tpu.memory_space<vmem>>, %arg6: memref<1x64x128xbf16, #tpu.memory_space<vmem>>, %arg7: memref<4x9x9x128xf32, #tpu.memory_space<vmem>>) attributes {dimension_semantics = [#tpu.dimension_semantics<parallel>], iteration_bounds = array<i64: 2>, scalar_prefetch = 0 : i64, scratch_operands = 1 : i64, tpu.core_type = #tpu.core_type<tc>, window_params = [{transform_indices = @transform_0, window_bounds = array<i64: 1, 4, 9, 9, 8>}, {pipeline_mode = #tpu.pipeline_mode<synchronous>, transform_indices = @transform_1, window_bounds = array<i64: 72, 128>}, {pipeline_mode = #tpu.pipeline_mode<synchronous>, transform_indices = @transform_2, window_bounds = array<i64: 1, 128>}, {pipeline_mode = #tpu.pipeline_mode<synchronous>, transform_indices = @transform_3, window_bounds = array<i64: 1152, 128>}, {pipeline_mode = #tpu.pipeline_mode<synchronous>, transform_indices = @transform_4, window_bounds = array<i64: 1, 128>}, {transform_indices = @transform_5, window_bounds = array<i64: 1, 64, 128>}]} {
    %cst = arith.constant 0.000000e+00 : f32
    %0 = vector.broadcast %cst : f32 to vector<1x9x128xf32>
    %c0 = arith.constant 0 : index
    %c0_0 = arith.constant 0 : index
    %c0_1 = arith.constant 0 : index
    %c0_2 = arith.constant 0 : index
    %1 = vector.load %arg7[%c0, %c0_0, %c0_1, %c0_2] : memref<4x9x9x128xf32, #tpu.memory_space<vmem>>, vector<1x1x9x128xf32>
    %2 = vector.shape_cast %1 : vector<1x1x9x128xf32> to vector<1x9x128xf32>
    %3 = vector.shape_cast %0 : vector<1x9x128xf32> to vector<1x1x9x128xf32>
    tpu.vector_store %arg7[%c0, %c0_0, %c0_1, %c0_2], %3 {strides = array<i32>} : memref<4x9x9x128xf32, #tpu.memory_space<vmem>>, vector<1x1x9x128xf32>,
    %cst_3 = arith.constant 0.000000e+00 : f32
    %4 = vector.broadcast %cst_3 : f32 to vector<9x1x128xf32>
    %c0_4 = arith.constant 0 : index
    %c0_5 = arith.constant 0 : index
    %c0_6 = arith.constant 0 : index
    %c0_7 = arith.constant 0 : index
    %5 = vector.load %arg7[%c0_4, %c0_5, %c0_6, %c0_7] : memref<4x9x9x128xf32, #tpu.memory_space<vmem>>, vector<1x9x1x128xf32>
    %6 = vector.shape_cast %5 : vector<1x9x1x128xf32> to vector<9x1x128xf32>
    %7 = vector.shape_cast %4 : vector<9x1x128xf32> to vector<1x9x1x128xf32>
    tpu.vector_store %arg7[%c0_4, %c0_5, %c0_6, %c0_7], %7 {strides = array<i32>} : memref<4x9x9x128xf32, #tpu.memory_space<vmem>>, vector<1x9x1x128xf32>,
    %cst_8 = arith.constant 0.000000e+00 : f32
    %8 = vector.broadcast %cst_8 : f32 to vector<1x9x128xf32>
    %c1 = arith.constant 1 : index
    %c0_9 = arith.constant 0 : index
    %c0_10 = arith.constant 0 : index
    %c0_11 = arith.constant 0 : index
    %9 = vector.load %arg7[%c1, %c0_9, %c0_10, %c0_11] : memref<4x9x9x128xf32, #tpu.memory_space<vmem>>, vector<1x1x9x128xf32>
    %10 = vector.shape_cast %9 : vector<1x1x9x128xf32> to vector<1x9x128xf32>
    %11 = vector.shape_cast %8 : vector<1x9x128xf32> to vector<1x1x9x128xf32>
    tpu.vector_store %arg7[%c1, %c0_9, %c0_10, %c0_11], %11 {strides = array<i32>} : memref<4x9x9x128xf32, #tpu.memory_space<vmem>>, vector<1x1x9x128xf32>,
    %cst_12 = arith.constant 0.000000e+00 : f32
    %12 = vector.broadcast %cst_12 : f32 to vector<9x1x128xf32>
    %c1_13 = arith.constant 1 : index
    %c0_14 = arith.constant 0 : index
    %c0_15 = arith.constant 0 : index
    %c0_16 = arith.constant 0 : index
    %13 = vector.load %arg7[%c1_13, %c0_14, %c0_15, %c0_16] : memref<4x9x9x128xf32, #tpu.memory_space<vmem>>, vector<1x9x1x128xf32>
    %14 = vector.shape_cast %13 : vector<1x9x1x128xf32> to vector<9x1x128xf32>
    %15 = vector.shape_cast %12 : vector<9x1x128xf32> to vector<1x9x1x128xf32>
    tpu.vector_store %arg7[%c1_13, %c0_14, %c0_15, %c0_16], %15 {strides = array<i32>} : memref<4x9x9x128xf32, #tpu.memory_space<vmem>>, vector<1x9x1x128xf32>,
    %cst_17 = arith.constant 0.000000e+00 : f32
    %16 = vector.broadcast %cst_17 : f32 to vector<1x9x128xf32>
    %c2 = arith.constant 2 : index
    %c0_18 = arith.constant 0 : index
    %c0_19 = arith.constant 0 : index
    %c0_20 = arith.constant 0 : index
    %17 = vector.load %arg7[%c2, %c0_18, %c0_19, %c0_20] : memref<4x9x9x128xf32, #tpu.memory_space<vmem>>, vector<1x1x9x128xf32>
    %18 = vector.shape_cast %17 : vector<1x1x9x128xf32> to vector<1x9x128xf32>
    %19 = vector.shape_cast %16 : vector<1x9x128xf32> to vector<1x1x9x128xf32>
    tpu.vector_store %arg7[%c2, %c0_18, %c0_19, %c0_20], %19 {strides = array<i32>} : memref<4x9x9x128xf32, #tpu.memory_space<vmem>>, vector<1x1x9x128xf32>,
    %cst_21 = arith.constant 0.000000e+00 : f32
    %20 = vector.broadcast %cst_21 : f32 to vector<9x1x128xf32>
    %c2_22 = arith.constant 2 : index
    %c0_23 = arith.constant 0 : index
    %c0_24 = arith.constant 0 : index
    %c0_25 = arith.constant 0 : index
    %21 = vector.load %arg7[%c2_22, %c0_23, %c0_24, %c0_25] : memref<4x9x9x128xf32, #tpu.memory_space<vmem>>, vector<1x9x1x128xf32>
    %22 = vector.shape_cast %21 : vector<1x9x1x128xf32> to vector<9x1x128xf32>
    %23 = vector.shape_cast %20 : vector<9x1x128xf32> to vector<1x9x1x128xf32>
    tpu.vector_store %arg7[%c2_22, %c0_23, %c0_24, %c0_25], %23 {strides = array<i32>} : memref<4x9x9x128xf32, #tpu.memory_space<vmem>>, vector<1x9x1x128xf32>,
    %cst_26 = arith.constant 0.000000e+00 : f32
    %24 = vector.broadcast %cst_26 : f32 to vector<1x9x128xf32>
    %c3 = arith.constant 3 : index
    %c0_27 = arith.constant 0 : index
    %c0_28 = arith.constant 0 : index
    %c0_29 = arith.constant 0 : index
    %25 = vector.load %arg7[%c3, %c0_27, %c0_28, %c0_29] : memref<4x9x9x128xf32, #tpu.memory_space<vmem>>, vector<1x1x9x128xf32>
    %26 = vector.shape_cast %25 : vector<1x1x9x128xf32> to vector<1x9x128xf32>
    %27 = vector.shape_cast %24 : vector<1x9x128xf32> to vector<1x1x9x128xf32>
    tpu.vector_store %arg7[%c3, %c0_27, %c0_28, %c0_29], %27 {strides = array<i32>} : memref<4x9x9x128xf32, #tpu.memory_space<vmem>>, vector<1x1x9x128xf32>,
    %cst_30 = arith.constant 0.000000e+00 : f32
    %28 = vector.broadcast %cst_30 : f32 to vector<9x1x128xf32>
    %c3_31 = arith.constant 3 : index
    %c0_32 = arith.constant 0 : index
    %c0_33 = arith.constant 0 : index
    %c0_34 = arith.constant 0 : index
    %29 = vector.load %arg7[%c3_31, %c0_32, %c0_33, %c0_34] : memref<4x9x9x128xf32, #tpu.memory_space<vmem>>, vector<1x9x1x128xf32>
    %30 = vector.shape_cast %29 : vector<1x9x1x128xf32> to vector<9x1x128xf32>
    %31 = vector.shape_cast %28 : vector<9x1x128xf32> to vector<1x9x1x128xf32>
    tpu.vector_store %arg7[%c3_31, %c0_32, %c0_33, %c0_34], %31 {strides = array<i32>} : memref<4x9x9x128xf32, #tpu.memory_space<vmem>>, vector<1x9x1x128xf32>,
    %c0_35 = arith.constant 0 : index
    %c0_36 = arith.constant 0 : index
    %c0_37 = arith.constant 0 : index
    %c0_38 = arith.constant 0 : index
    %c0_39 = arith.constant 0 : index
    %32 = vector.load %arg1[%c0_35, %c0_36, %c0_37, %c0_38, %c0_39] : memref<1x4x9x9x8xf32, #tpu.memory_space<vmem>>, vector<1x1x8x8x8xf32>
    %33 = vector.shape_cast %32 : vector<1x1x8x8x8xf32> to vector<8x8x8xf32>
    %34 = vector.shape_cast %33 : vector<8x8x8xf32> to vector<64x8xf32>
    %c0_40 = arith.constant 0 : index
    %c1_41 = arith.constant 1 : index
    %c0_42 = arith.constant 0 : index
    %c0_43 = arith.constant 0 : index
    %c0_44 = arith.constant 0 : index
    %35 = vector.load %arg1[%c0_40, %c1_41, %c0_42, %c0_43, %c0_44] : memref<1x4x9x9x8xf32, #tpu.memory_space<vmem>>, vector<1x1x8x8x8xf32>
    %36 = vector.shape_cast %35 : vector<1x1x8x8x8xf32> to vector<8x8x8xf32>
    %37 = vector.shape_cast %36 : vector<8x8x8xf32> to vector<64x8xf32>
    %c0_45 = arith.constant 0 : index
    %c0_46 = arith.constant 0 : index
    %c0_47 = arith.constant 0 : index
    %c1_48 = arith.constant 1 : index
    %c0_49 = arith.constant 0 : index
    %38 = vector.load %arg1[%c0_45, %c0_46, %c0_47, %c1_48, %c0_49] : memref<1x4x9x9x8xf32, #tpu.memory_space<vmem>>, vector<1x1x8x8x8xf32>
    %39 = vector.shape_cast %38 : vector<1x1x8x8x8xf32> to vector<8x8x8xf32>
    %40 = vector.shape_cast %39 : vector<8x8x8xf32> to vector<64x8xf32>
    %c0_50 = arith.constant 0 : index
    %c2_51 = arith.constant 2 : index
    %c0_52 = arith.constant 0 : index
    %c0_53 = arith.constant 0 : index
    %c0_54 = arith.constant 0 : index
    %41 = vector.load %arg1[%c0_50, %c2_51, %c0_52, %c0_53, %c0_54] : memref<1x4x9x9x8xf32, #tpu.memory_space<vmem>>, vector<1x1x8x8x8xf32>
    %42 = vector.shape_cast %41 : vector<1x1x8x8x8xf32> to vector<8x8x8xf32>
    %43 = vector.shape_cast %42 : vector<8x8x8xf32> to vector<64x8xf32>
    %c0_55 = arith.constant 0 : index
    %c3_56 = arith.constant 3 : index
    %c0_57 = arith.constant 0 : index
    %c0_58 = arith.constant 0 : index
    %c0_59 = arith.constant 0 : index
    %44 = vector.load %arg1[%c0_55, %c3_56, %c0_57, %c0_58, %c0_59] : memref<1x4x9x9x8xf32, #tpu.memory_space<vmem>>, vector<1x1x8x8x8xf32>
    %45 = vector.shape_cast %44 : vector<1x1x8x8x8xf32> to vector<8x8x8xf32>
    %46 = vector.shape_cast %45 : vector<8x8x8xf32> to vector<64x8xf32>
    %c0_60 = arith.constant 0 : index
    %c2_61 = arith.constant 2 : index
    %c0_62 = arith.constant 0 : index
    %c1_63 = arith.constant 1 : index
    %c0_64 = arith.constant 0 : index
    %47 = vector.load %arg1[%c0_60, %c2_61, %c0_62, %c1_63, %c0_64] : memref<1x4x9x9x8xf32, #tpu.memory_space<vmem>>, vector<1x1x8x8x8xf32>
    %48 = vector.shape_cast %47 : vector<1x1x8x8x8xf32> to vector<8x8x8xf32>
    %49 = vector.shape_cast %48 : vector<8x8x8xf32> to vector<64x8xf32>
    %c0_65 = arith.constant 0 : index
    %c0_66 = arith.constant 0 : index
    %c1_67 = arith.constant 1 : index
    %c0_68 = arith.constant 0 : index
    %c0_69 = arith.constant 0 : index
    %50 = vector.load %arg1[%c0_65, %c0_66, %c1_67, %c0_68, %c0_69] : memref<1x4x9x9x8xf32, #tpu.memory_space<vmem>>, vector<1x1x8x8x8xf32>
    %51 = vector.shape_cast %50 : vector<1x1x8x8x8xf32> to vector<8x8x8xf32>
    %52 = vector.shape_cast %51 : vector<8x8x8xf32> to vector<64x8xf32>
    %c0_70 = arith.constant 0 : index
    %c1_71 = arith.constant 1 : index
    %c1_72 = arith.constant 1 : index
    %c0_73 = arith.constant 0 : index
    %c0_74 = arith.constant 0 : index
    %53 = vector.load %arg1[%c0_70, %c1_71, %c1_72, %c0_73, %c0_74] : memref<1x4x9x9x8xf32, #tpu.memory_space<vmem>>, vector<1x1x8x8x8xf32>
    %54 = vector.shape_cast %53 : vector<1x1x8x8x8xf32> to vector<8x8x8xf32>
    %55 = vector.shape_cast %54 : vector<8x8x8xf32> to vector<64x8xf32>
    %c0_75 = arith.constant 0 : index
    %c0_76 = arith.constant 0 : index
    %c1_77 = arith.constant 1 : index
    %c1_78 = arith.constant 1 : index
    %c0_79 = arith.constant 0 : index
    %56 = vector.load %arg1[%c0_75, %c0_76, %c1_77, %c1_78, %c0_79] : memref<1x4x9x9x8xf32, #tpu.memory_space<vmem>>, vector<1x1x8x8x8xf32>
    %57 = vector.shape_cast %56 : vector<1x1x8x8x8xf32> to vector<8x8x8xf32>
    %58 = vector.shape_cast %57 : vector<8x8x8xf32> to vector<64x8xf32>
    %59 = tpu.concatenate %34, %37, %40, %43, %46, %49, %52, %55, %58 in 1 : vector<64x8xf32>, vector<64x8xf32>, vector<64x8xf32>, vector<64x8xf32>, vector<64x8xf32>, vector<64x8xf32>, vector<64x8xf32>, vector<64x8xf32>, vector<64x8xf32> -> vector<64x72xf32>
    %60 = arith.truncf %59 : vector<64x72xf32> to vector<64x72xbf16>
    %c0_80 = arith.constant 0 : index
    %c0_81 = arith.constant 0 : index
    %61 = vector.load %arg2[%c0_80, %c0_81] : memref<72x128xbf16, #tpu.memory_space<vmem>>, vector<72x128xbf16>
    %cst_82 = arith.constant dense<0.000000e+00> : vector<64x128xf32>
    %62 = tpu.matmul %60, %61, %cst_82 {dimension_numbers = #tpu.dot_dimension_numbers<[1], [0], [0], [1], [0, 0, 1, 1], [], []>} : vector<64x72xbf16>, vector<72x128xbf16>, vector<64x128xf32> -> vector<64x128xf32>
    %c0_83 = arith.constant 0 : index
    %c0_84 = arith.constant 0 : index
    %63 = vector.load %arg3[%c0_83, %c0_84] : memref<1x128xf32, #tpu.memory_space<vmem>>, vector<1x128xf32>
    %64 = vector.broadcast %63 : vector<1x128xf32> to vector<64x128xf32>
    %65 = arith.addf %62, %64 : vector<64x128xf32>
    %66 = arith.negf %65 : vector<64x128xf32>
    %67 = math.exp %66 : vector<64x128xf32>
    %cst_85 = arith.constant 1.000000e+00 : f32
    %68 = vector.broadcast %cst_85 : f32 to vector<64x128xf32>
    %69 = arith.addf %68, %67 : vector<64x128xf32>
    %70 = arith.divf %68, %69 : vector<64x128xf32>
    %71 = arith.mulf %65, %70 : vector<64x128xf32>
    %72 = vector.shape_cast %71 : vector<64x128xf32> to vector<8x8x128xf32>
    %c0_86 = arith.constant 0 : index
    %c1_87 = arith.constant 1 : index
    %c1_88 = arith.constant 1 : index
    %c0_89 = arith.constant 0 : index
    %73 = vector.load %arg7[%c0_86, %c1_87, %c1_88, %c0_89] : memref<4x9x9x128xf32, #tpu.memory_space<vmem>>, vector<1x8x8x128xf32>
    %74 = vector.shape_cast %73 : vector<1x8x8x128xf32> to vector<8x8x128xf32>
    %75 = vector.shape_cast %72 : vector<8x8x128xf32> to vector<1x8x8x128xf32>
    tpu.vector_store %arg7[%c0_86, %c1_87, %c1_88, %c0_89], %75 {strides = array<i32>} : memref<4x9x9x128xf32, #tpu.memory_space<vmem>>, vector<1x8x8x128xf32>,
    %c0_90 = arith.constant 0 : index
    %c1_91 = arith.constant 1 : index
    %c0_92 = arith.constant 0 : index
    %c0_93 = arith.constant 0 : index
    %c0_94 = arith.constant 0 : index
    %76 = vector.load %arg1[%c0_90, %c1_91, %c0_92, %c0_93, %c0_94] : memref<1x4x9x9x8xf32, #tpu.memory_space<vmem>>, vector<1x1x8x8x8xf32>
    %77 = vector.shape_cast %76 : vector<1x1x8x8x8xf32> to vector<8x8x8xf32>
    %78 = vector.shape_cast %77 : vector<8x8x8xf32> to vector<64x8xf32>
    %c0_95 = arith.constant 0 : index
    %c0_96 = arith.constant 0 : index
    %c0_97 = arith.constant 0 : index
    %c1_98 = arith.constant 1 : index
    %c0_99 = arith.constant 0 : index
    %79 = vector.load %arg1[%c0_95, %c0_96, %c0_97, %c1_98, %c0_99] : memref<1x4x9x9x8xf32, #tpu.memory_space<vmem>>, vector<1x1x8x8x8xf32>
    %80 = vector.shape_cast %79 : vector<1x1x8x8x8xf32> to vector<8x8x8xf32>
    %81 = vector.shape_cast %80 : vector<8x8x8xf32> to vector<64x8xf32>
    %c0_100 = arith.constant 0 : index
    %c1_101 = arith.constant 1 : index
    %c0_102 = arith.constant 0 : index
    %c1_103 = arith.constant 1 : index
    %c0_104 = arith.constant 0 : index
    %82 = vector.load %arg1[%c0_100, %c1_101, %c0_102, %c1_103, %c0_104] : memref<1x4x9x9x8xf32, #tpu.memory_space<vmem>>, vector<1x1x8x8x8xf32>
    %83 = vector.shape_cast %82 : vector<1x1x8x8x8xf32> to vector<8x8x8xf32>
    %84 = vector.shape_cast %83 : vector<8x8x8xf32> to vector<64x8xf32>
    %c0_105 = arith.constant 0 : index
    %c3_106 = arith.constant 3 : index
    %c0_107 = arith.constant 0 : index
    %c0_108 = arith.constant 0 : index
    %c0_109 = arith.constant 0 : index
    %85 = vector.load %arg1[%c0_105, %c3_106, %c0_107, %c0_108, %c0_109] : memref<1x4x9x9x8xf32, #tpu.memory_space<vmem>>, vector<1x1x8x8x8xf32>
    %86 = vector.shape_cast %85 : vector<1x1x8x8x8xf32> to vector<8x8x8xf32>
    %87 = vector.shape_cast %86 : vector<8x8x8xf32> to vector<64x8xf32>
    %c0_110 = arith.constant 0 : index
    %c2_111 = arith.constant 2 : index
    %c0_112 = arith.constant 0 : index
    %c1_113 = arith.constant 1 : index
    %c0_114 = arith.constant 0 : index
    %88 = vector.load %arg1[%c0_110, %c2_111, %c0_112, %c1_113, %c0_114] : memref<1x4x9x9x8xf32, #tpu.memory_space<vmem>>, vector<1x1x8x8x8xf32>
    %89 = vector.shape_cast %88 : vector<1x1x8x8x8xf32> to vector<8x8x8xf32>
    %90 = vector.shape_cast %89 : vector<8x8x8xf32> to vector<64x8xf32>
    %c0_115 = arith.constant 0 : index
    %c3_116 = arith.constant 3 : index
    %c0_117 = arith.constant 0 : index
    %c1_118 = arith.constant 1 : index
    %c0_119 = arith.constant 0 : index
    %91 = vector.load %arg1[%c0_115, %c3_116, %c0_117, %c1_118, %c0_119] : memref<1x4x9x9x8xf32, #tpu.memory_space<vmem>>, vector<1x1x8x8x8xf32>
    %92 = vector.shape_cast %91 : vector<1x1x8x8x8xf32> to vector<8x8x8xf32>
    %93 = vector.shape_cast %92 : vector<8x8x8xf32> to vector<64x8xf32>
    %c0_120 = arith.constant 0 : index
    %c1_121 = arith.constant 1 : index
    %c1_122 = arith.constant 1 : index
    %c0_123 = arith.constant 0 : index
    %c0_124 = arith.constant 0 : index
    %94 = vector.load %arg1[%c0_120, %c1_121, %c1_122, %c0_123, %c0_124] : memref<1x4x9x9x8xf32, #tpu.memory_space<vmem>>, vector<1x1x8x8x8xf32>
    %95 = vector.shape_cast %94 : vector<1x1x8x8x8xf32> to vector<8x8x8xf32>
    %96 = vector.shape_cast %95 : vector<8x8x8xf32> to vector<64x8xf32>
    %c0_125 = arith.constant 0 : index
    %c0_126 = arith.constant 0 : index
    %c1_127 = arith.constant 1 : index
    %c1_128 = arith.constant 1 : index
    %c0_129 = arith.constant 0 : index
    %97 = vector.load %arg1[%c0_125, %c0_126, %c1_127, %c1_128, %c0_129] : memref<1x4x9x9x8xf32, #tpu.memory_space<vmem>>, vector<1x1x8x8x8xf32>
    %98 = vector.shape_cast %97 : vector<1x1x8x8x8xf32> to vector<8x8x8xf32>
    %99 = vector.shape_cast %98 : vector<8x8x8xf32> to vector<64x8xf32>
    %c0_130 = arith.constant 0 : index
    %c1_131 = arith.constant 1 : index
    %c1_132 = arith.constant 1 : index
    %c1_133 = arith.constant 1 : index
    %c0_134 = arith.constant 0 : index
    %100 = vector.load %arg1[%c0_130, %c1_131, %c1_132, %c1_133, %c0_134] : memref<1x4x9x9x8xf32, #tpu.memory_space<vmem>>, vector<1x1x8x8x8xf32>
    %101 = vector.shape_cast %100 : vector<1x1x8x8x8xf32> to vector<8x8x8xf32>
    %102 = vector.shape_cast %101 : vector<8x8x8xf32> to vector<64x8xf32>
    %103 = tpu.concatenate %78, %81, %84, %87, %90, %93, %96, %99, %102 in 1 : vector<64x8xf32>, vector<64x8xf32>, vector<64x8xf32>, vector<64x8xf32>, vector<64x8xf32>, vector<64x8xf32>, vector<64x8xf32>, vector<64x8xf32>, vector<64x8xf32> -> vector<64x72xf32>
    %104 = arith.truncf %103 : vector<64x72xf32> to vector<64x72xbf16>
    %c0_135 = arith.constant 0 : index
    %c0_136 = arith.constant 0 : index
    %105 = vector.load %arg2[%c0_135, %c0_136] : memref<72x128xbf16, #tpu.memory_space<vmem>>, vector<72x128xbf16>
    %cst_137 = arith.constant dense<0.000000e+00> : vector<64x128xf32>
    %106 = tpu.matmul %104, %105, %cst_137 {dimension_numbers = #tpu.dot_dimension_numbers<[1], [0], [0], [1], [0, 0, 1, 1], [], []>} : vector<64x72xbf16>, vector<72x128xbf16>, vector<64x128xf32> -> vector<64x128xf32>
    %c0_138 = arith.constant 0 : index
    %c0_139 = arith.constant 0 : index
    %107 = vector.load %arg3[%c0_138, %c0_139] : memref<1x128xf32, #tpu.memory_space<vmem>>, vector<1x128xf32>
    %108 = vector.broadcast %107 : vector<1x128xf32> to vector<64x128xf32>
    %109 = arith.addf %106, %108 : vector<64x128xf32>
    %110 = arith.negf %109 : vector<64x128xf32>
    %111 = math.exp %110 : vector<64x128xf32>
    %cst_140 = arith.constant 1.000000e+00 : f32
    %112 = vector.broadcast %cst_140 : f32 to vector<64x128xf32>
    %113 = arith.addf %112, %111 : vector<64x128xf32>
    %114 = arith.divf %112, %113 : vector<64x128xf32>
    %115 = arith.mulf %109, %114 : vector<64x128xf32>
    %116 = vector.shape_cast %115 : vector<64x128xf32> to vector<8x8x128xf32>
    %c1_141 = arith.constant 1 : index
    %c1_142 = arith.constant 1 : index
    %c1_143 = arith.constant 1 : index
    %c0_144 = arith.constant 0 : index
    %117 = vector.load %arg7[%c1_141, %c1_142, %c1_143, %c0_144] : memref<4x9x9x128xf32, #tpu.memory_space<vmem>>, vector<1x8x8x128xf32>
    %118 = vector.shape_cast %117 : vector<1x8x8x128xf32> to vector<8x8x128xf32>
    %119 = vector.shape_cast %116 : vector<8x8x128xf32> to vector<1x8x8x128xf32>
    tpu.vector_store %arg7[%c1_141, %c1_142, %c1_143, %c0_144], %119 {strides = array<i32>} : memref<4x9x9x128xf32, #tpu.memory_space<vmem>>, vector<1x8x8x128xf32>,
    %c0_145 = arith.constant 0 : index
    %c2_146 = arith.constant 2 : index
    %c0_147 = arith.constant 0 : index
    %c0_148 = arith.constant 0 : index
    %c0_149 = arith.constant 0 : index
    %120 = vector.load %arg1[%c0_145, %c2_146, %c0_147, %c0_148, %c0_149] : memref<1x4x9x9x8xf32, #tpu.memory_space<vmem>>, vector<1x1x8x8x8xf32>
    %121 = vector.shape_cast %120 : vector<1x1x8x8x8xf32> to vector<8x8x8xf32>
    %122 = vector.shape_cast %121 : vector<8x8x8xf32> to vector<64x8xf32>
    %c0_150 = arith.constant 0 : index
    %c3_151 = arith.constant 3 : index
    %c0_152 = arith.constant 0 : index
    %c0_153 = arith.constant 0 : index
    %c0_154 = arith.constant 0 : index
    %123 = vector.load %arg1[%c0_150, %c3_151, %c0_152, %c0_153, %c0_154] : memref<1x4x9x9x8xf32, #tpu.memory_space<vmem>>, vector<1x1x8x8x8xf32>
    %124 = vector.shape_cast %123 : vector<1x1x8x8x8xf32> to vector<8x8x8xf32>
    %125 = vector.shape_cast %124 : vector<8x8x8xf32> to vector<64x8xf32>
    %c0_155 = arith.constant 0 : index
    %c2_156 = arith.constant 2 : index
    %c0_157 = arith.constant 0 : index
    %c1_158 = arith.constant 1 : index
    %c0_159 = arith.constant 0 : index
    %126 = vector.load %arg1[%c0_155, %c2_156, %c0_157, %c1_158, %c0_159] : memref<1x4x9x9x8xf32, #tpu.memory_space<vmem>>, vector<1x1x8x8x8xf32>
    %127 = vector.shape_cast %126 : vector<1x1x8x8x8xf32> to vector<8x8x8xf32>
    %128 = vector.shape_cast %127 : vector<8x8x8xf32> to vector<64x8xf32>
    %c0_160 = arith.constant 0 : index
    %c0_161 = arith.constant 0 : index
    %c1_162 = arith.constant 1 : index
    %c0_163 = arith.constant 0 : index
    %c0_164 = arith.constant 0 : index
    %129 = vector.load %arg1[%c0_160, %c0_161, %c1_162, %c0_163, %c0_164] : memref<1x4x9x9x8xf32, #tpu.memory_space<vmem>>, vector<1x1x8x8x8xf32>
    %130 = vector.shape_cast %129 : vector<1x1x8x8x8xf32> to vector<8x8x8xf32>
    %131 = vector.shape_cast %130 : vector<8x8x8xf32> to vector<64x8xf32>
    %c0_165 = arith.constant 0 : index
    %c1_166 = arith.constant 1 : index
    %c1_167 = arith.constant 1 : index
    %c0_168 = arith.constant 0 : index
    %c0_169 = arith.constant 0 : index
    %132 = vector.load %arg1[%c0_165, %c1_166, %c1_167, %c0_168, %c0_169] : memref<1x4x9x9x8xf32, #tpu.memory_space<vmem>>, vector<1x1x8x8x8xf32>
    %133 = vector.shape_cast %132 : vector<1x1x8x8x8xf32> to vector<8x8x8xf32>
    %134 = vector.shape_cast %133 : vector<8x8x8xf32> to vector<64x8xf32>
    %c0_170 = arith.constant 0 : index
    %c0_171 = arith.constant 0 : index
    %c1_172 = arith.constant 1 : index
    %c1_173 = arith.constant 1 : index
    %c0_174 = arith.constant 0 : index
    %135 = vector.load %arg1[%c0_170, %c0_171, %c1_172, %c1_173, %c0_174] : memref<1x4x9x9x8xf32, #tpu.memory_space<vmem>>, vector<1x1x8x8x8xf32>
    %136 = vector.shape_cast %135 : vector<1x1x8x8x8xf32> to vector<8x8x8xf32>
    %137 = vector.shape_cast %136 : vector<8x8x8xf32> to vector<64x8xf32>
    %c0_175 = arith.constant 0 : index
    %c2_176 = arith.constant 2 : index
    %c1_177 = arith.constant 1 : index
    %c0_178 = arith.constant 0 : index
    %c0_179 = arith.constant 0 : index
    %138 = vector.load %arg1[%c0_175, %c2_176, %c1_177, %c0_178, %c0_179] : memref<1x4x9x9x8xf32, #tpu.memory_space<vmem>>, vector<1x1x8x8x8xf32>
    %139 = vector.shape_cast %138 : vector<1x1x8x8x8xf32> to vector<8x8x8xf32>
    %140 = vector.shape_cast %139 : vector<8x8x8xf32> to vector<64x8xf32>
    %c0_180 = arith.constant 0 : index
    %c3_181 = arith.constant 3 : index
    %c1_182 = arith.constant 1 : index
    %c0_183 = arith.constant 0 : index
    %c0_184 = arith.constant 0 : index
    %141 = vector.load %arg1[%c0_180, %c3_181, %c1_182, %c0_183, %c0_184] : memref<1x4x9x9x8xf32, #tpu.memory_space<vmem>>, vector<1x1x8x8x8xf32>
    %142 = vector.shape_cast %141 : vector<1x1x8x8x8xf32> to vector<8x8x8xf32>
    %143 = vector.shape_cast %142 : vector<8x8x8xf32> to vector<64x8xf32>
    %c0_185 = arith.constant 0 : index
    %c2_186 = arith.constant 2 : index
    %c1_187 = arith.constant 1 : index
    %c1_188 = arith.constant 1 : index
    %c0_189 = arith.constant 0 : index
    %144 = vector.load %arg1[%c0_185, %c2_186, %c1_187, %c1_188, %c0_189] : memref<1x4x9x9x8xf32, #tpu.memory_space<vmem>>, vector<1x1x8x8x8xf32>
    %145 = vector.shape_cast %144 : vector<1x1x8x8x8xf32> to vector<8x8x8xf32>
    %146 = vector.shape_cast %145 : vector<8x8x8xf32> to vector<64x8xf32>
    %147 = tpu.concatenate %122, %125, %128, %131, %134, %137, %140, %143, %146 in 1 : vector<64x8xf32>, vector<64x8xf32>, vector<64x8xf32>, vector<64x8xf32>, vector<64x8xf32>, vector<64x8xf32>, vector<64x8xf32>, vector<64x8xf32>, vector<64x8xf32> -> vector<64x72xf32>
    %148 = arith.truncf %147 : vector<64x72xf32> to vector<64x72xbf16>
    %c0_190 = arith.constant 0 : index
    %c0_191 = arith.constant 0 : index
    %149 = vector.load %arg2[%c0_190, %c0_191] : memref<72x128xbf16, #tpu.memory_space<vmem>>, vector<72x128xbf16>
    %cst_192 = arith.constant dense<0.000000e+00> : vector<64x128xf32>
    %150 = tpu.matmul %148, %149, %cst_192 {dimension_numbers = #tpu.dot_dimension_numbers<[1], [0], [0], [1], [0, 0, 1, 1], [], []>} : vector<64x72xbf16>, vector<72x128xbf16>, vector<64x128xf32> -> vector<64x128xf32>
    %c0_193 = arith.constant 0 : index
    %c0_194 = arith.constant 0 : index
    %151 = vector.load %arg3[%c0_193, %c0_194] : memref<1x128xf32, #tpu.memory_space<vmem>>, vector<1x128xf32>
    %152 = vector.broadcast %151 : vector<1x128xf32> to vector<64x128xf32>
    %153 = arith.addf %150, %152 : vector<64x128xf32>
    %154 = arith.negf %153 : vector<64x128xf32>
    %155 = math.exp %154 : vector<64x128xf32>
    %cst_195 = arith.constant 1.000000e+00 : f32
    %156 = vector.broadcast %cst_195 : f32 to vector<64x128xf32>
    %157 = arith.addf %156, %155 : vector<64x128xf32>
    %158 = arith.divf %156, %157 : vector<64x128xf32>
    %159 = arith.mulf %153, %158 : vector<64x128xf32>
    %160 = vector.shape_cast %159 : vector<64x128xf32> to vector<8x8x128xf32>
    %c2_196 = arith.constant 2 : index
    %c1_197 = arith.constant 1 : index
    %c1_198 = arith.constant 1 : index
    %c0_199 = arith.constant 0 : index
    %161 = vector.load %arg7[%c2_196, %c1_197, %c1_198, %c0_199] : memref<4x9x9x128xf32, #tpu.memory_space<vmem>>, vector<1x8x8x128xf32>
    %162 = vector.shape_cast %161 : vector<1x8x8x128xf32> to vector<8x8x128xf32>
    %163 = vector.shape_cast %160 : vector<8x8x128xf32> to vector<1x8x8x128xf32>
    tpu.vector_store %arg7[%c2_196, %c1_197, %c1_198, %c0_199], %163 {strides = array<i32>} : memref<4x9x9x128xf32, #tpu.memory_space<vmem>>, vector<1x8x8x128xf32>,
    %c0_200 = arith.constant 0 : index
    %c3_201 = arith.constant 3 : index
    %c0_202 = arith.constant 0 : index
    %c0_203 = arith.constant 0 : index
    %c0_204 = arith.constant 0 : index
    %164 = vector.load %arg1[%c0_200, %c3_201, %c0_202, %c0_203, %c0_204] : memref<1x4x9x9x8xf32, #tpu.memory_space<vmem>>, vector<1x1x8x8x8xf32>
    %165 = vector.shape_cast %164 : vector<1x1x8x8x8xf32> to vector<8x8x8xf32>
    %166 = vector.shape_cast %165 : vector<8x8x8xf32> to vector<64x8xf32>
    %c0_205 = arith.constant 0 : index
    %c2_206 = arith.constant 2 : index
    %c0_207 = arith.constant 0 : index
    %c1_208 = arith.constant 1 : index
    %c0_209 = arith.constant 0 : index
    %167 = vector.load %arg1[%c0_205, %c2_206, %c0_207, %c1_208, %c0_209] : memref<1x4x9x9x8xf32, #tpu.memory_space<vmem>>, vector<1x1x8x8x8xf32>
    %168 = vector.shape_cast %167 : vector<1x1x8x8x8xf32> to vector<8x8x8xf32>
    %169 = vector.shape_cast %168 : vector<8x8x8xf32> to vector<64x8xf32>
    %c0_210 = arith.constant 0 : index
    %c3_211 = arith.constant 3 : index
    %c0_212 = arith.constant 0 : index
    %c1_213 = arith.constant 1 : index
    %c0_214 = arith.constant 0 : index
    %170 = vector.load %arg1[%c0_210, %c3_211, %c0_212, %c1_213, %c0_214] : memref<1x4x9x9x8xf32, #tpu.memory_space<vmem>>, vector<1x1x8x8x8xf32>
    %171 = vector.shape_cast %170 : vector<1x1x8x8x8xf32> to vector<8x8x8xf32>
    %172 = vector.shape_cast %171 : vector<8x8x8xf32> to vector<64x8xf32>
    %c0_215 = arith.constant 0 : index
    %c1_216 = arith.constant 1 : index
    %c1_217 = arith.constant 1 : index
    %c0_218 = arith.constant 0 : index
    %c0_219 = arith.constant 0 : index
    %173 = vector.load %arg1[%c0_215, %c1_216, %c1_217, %c0_218, %c0_219] : memref<1x4x9x9x8xf32, #tpu.memory_space<vmem>>, vector<1x1x8x8x8xf32>
    %174 = vector.shape_cast %173 : vector<1x1x8x8x8xf32> to vector<8x8x8xf32>
    %175 = vector.shape_cast %174 : vector<8x8x8xf32> to vector<64x8xf32>
    %c0_220 = arith.constant 0 : index
    %c0_221 = arith.constant 0 : index
    %c1_222 = arith.constant 1 : index
    %c1_223 = arith.constant 1 : index
    %c0_224 = arith.constant 0 : index
    %176 = vector.load %arg1[%c0_220, %c0_221, %c1_222, %c1_223, %c0_224] : memref<1x4x9x9x8xf32, #tpu.memory_space<vmem>>, vector<1x1x8x8x8xf32>
    %177 = vector.shape_cast %176 : vector<1x1x8x8x8xf32> to vector<8x8x8xf32>
    %178 = vector.shape_cast %177 : vector<8x8x8xf32> to vector<64x8xf32>
    %c0_225 = arith.constant 0 : index
    %c1_226 = arith.constant 1 : index
    %c1_227 = arith.constant 1 : index
    %c1_228 = arith.constant 1 : index
    %c0_229 = arith.constant 0 : index
    %179 = vector.load %arg1[%c0_225, %c1_226, %c1_227, %c1_228, %c0_229] : memref<1x4x9x9x8xf32, #tpu.memory_space<vmem>>, vector<1x1x8x8x8xf32>
    %180 = vector.shape_cast %179 : vector<1x1x8x8x8xf32> to vector<8x8x8xf32>
    %181 = vector.shape_cast %180 : vector<8x8x8xf32> to vector<64x8xf32>
    %c0_230 = arith.constant 0 : index
    %c3_231 = arith.constant 3 : index
    %c1_232 = arith.constant 1 : index
    %c0_233 = arith.constant 0 : index
    %c0_234 = arith.constant 0 : index
    %182 = vector.load %arg1[%c0_230, %c3_231, %c1_232, %c0_233, %c0_234] : memref<1x4x9x9x8xf32, #tpu.memory_space<vmem>>, vector<1x1x8x8x8xf32>
    %183 = vector.shape_cast %182 : vector<1x1x8x8x8xf32> to vector<8x8x8xf32>
    %184 = vector.shape_cast %183 : vector<8x8x8xf32> to vector<64x8xf32>
    %c0_235 = arith.constant 0 : index
    %c2_236 = arith.constant 2 : index
    %c1_237 = arith.constant 1 : index
    %c1_238 = arith.constant 1 : index
    %c0_239 = arith.constant 0 : index
    %185 = vector.load %arg1[%c0_235, %c2_236, %c1_237, %c1_238, %c0_239] : memref<1x4x9x9x8xf32, #tpu.memory_space<vmem>>, vector<1x1x8x8x8xf32>
    %186 = vector.shape_cast %185 : vector<1x1x8x8x8xf32> to vector<8x8x8xf32>
    %187 = vector.shape_cast %186 : vector<8x8x8xf32> to vector<64x8xf32>
    %c0_240 = arith.constant 0 : index
    %c3_241 = arith.constant 3 : index
    %c1_242 = arith.constant 1 : index
    %c1_243 = arith.constant 1 : index
    %c0_244 = arith.constant 0 : index
    %188 = vector.load %arg1[%c0_240, %c3_241, %c1_242, %c1_243, %c0_244] : memref<1x4x9x9x8xf32, #tpu.memory_space<vmem>>, vector<1x1x8x8x8xf32>
    %189 = vector.shape_cast %188 : vector<1x1x8x8x8xf32> to vector<8x8x8xf32>
    %190 = vector.shape_cast %189 : vector<8x8x8xf32> to vector<64x8xf32>
    %191 = tpu.concatenate %166, %169, %172, %175, %178, %181, %184, %187, %190 in 1 : vector<64x8xf32>, vector<64x8xf32>, vector<64x8xf32>, vector<64x8xf32>, vector<64x8xf32>, vector<64x8xf32>, vector<64x8xf32>, vector<64x8xf32>, vector<64x8xf32> -> vector<64x72xf32>
    %192 = arith.truncf %191 : vector<64x72xf32> to vector<64x72xbf16>
    %c0_245 = arith.constant 0 : index
    %c0_246 = arith.constant 0 : index
    %193 = vector.load %arg2[%c0_245, %c0_246] : memref<72x128xbf16, #tpu.memory_space<vmem>>, vector<72x128xbf16>
    %cst_247 = arith.constant dense<0.000000e+00> : vector<64x128xf32>
    %194 = tpu.matmul %192, %193, %cst_247 {dimension_numbers = #tpu.dot_dimension_numbers<[1], [0], [0], [1], [0, 0, 1, 1], [], []>} : vector<64x72xbf16>, vector<72x128xbf16>, vector<64x128xf32> -> vector<64x128xf32>
    %c0_248 = arith.constant 0 : index
    %c0_249 = arith.constant 0 : index
    %195 = vector.load %arg3[%c0_248, %c0_249] : memref<1x128xf32, #tpu.memory_space<vmem>>, vector<1x128xf32>
    %196 = vector.broadcast %195 : vector<1x128xf32> to vector<64x128xf32>
    %197 = arith.addf %194, %196 : vector<64x128xf32>
    %198 = arith.negf %197 : vector<64x128xf32>
    %199 = math.exp %198 : vector<64x128xf32>
    %cst_250 = arith.constant 1.000000e+00 : f32
    %200 = vector.broadcast %cst_250 : f32 to vector<64x128xf32>
    %201 = arith.addf %200, %199 : vector<64x128xf32>
    %202 = arith.divf %200, %201 : vector<64x128xf32>
    %203 = arith.mulf %197, %202 : vector<64x128xf32>
    %204 = vector.shape_cast %203 : vector<64x128xf32> to vector<8x8x128xf32>
    %c3_251 = arith.constant 3 : index
    %c1_252 = arith.constant 1 : index
    %c1_253 = arith.constant 1 : index
    %c0_254 = arith.constant 0 : index
    %205 = vector.load %arg7[%c3_251, %c1_252, %c1_253, %c0_254] : memref<4x9x9x128xf32, #tpu.memory_space<vmem>>, vector<1x8x8x128xf32>
    %206 = vector.shape_cast %205 : vector<1x8x8x128xf32> to vector<8x8x128xf32>
    %207 = vector.shape_cast %204 : vector<8x8x128xf32> to vector<1x8x8x128xf32>
    tpu.vector_store %arg7[%c3_251, %c1_252, %c1_253, %c0_254], %207 {strides = array<i32>} : memref<4x9x9x128xf32, #tpu.memory_space<vmem>>, vector<1x8x8x128xf32>,
    %c3_255 = arith.constant 3 : index
    %c0_256 = arith.constant 0 : index
    %c0_257 = arith.constant 0 : index
    %c0_258 = arith.constant 0 : index
    %208 = vector.load %arg7[%c3_255, %c0_256, %c0_257, %c0_258] : memref<4x9x9x128xf32, #tpu.memory_space<vmem>>, vector<1x8x8x128xf32>
    %209 = vector.shape_cast %208 : vector<1x8x8x128xf32> to vector<8x8x128xf32>
    %210 = vector.shape_cast %209 : vector<8x8x128xf32> to vector<64x128xf32>
    %c2_259 = arith.constant 2 : index
    %c0_260 = arith.constant 0 : index
    %c1_261 = arith.constant 1 : index
    %c0_262 = arith.constant 0 : index
    %211 = vector.load %arg7[%c2_259, %c0_260, %c1_261, %c0_262] : memref<4x9x9x128xf32, #tpu.memory_space<vmem>>, vector<1x8x8x128xf32>
    %212 = vector.shape_cast %211 : vector<1x8x8x128xf32> to vector<8x8x128xf32>
    %213 = vector.shape_cast %212 : vector<8x8x128xf32> to vector<64x128xf32>
    %214 = tpu.concatenate %210, %213 in 1 : vector<64x128xf32>, vector<64x128xf32> -> vector<64x256xf32>
    %215 = arith.truncf %214 : vector<64x256xf32> to vector<64x256xbf16>
    %c0_263 = arith.constant 0 : index
    %c0_264 = arith.constant 0 : index
    %216 = vector.load %arg4[%c0_263, %c0_264] : memref<1152x128xbf16, #tpu.memory_space<vmem>>, vector<256x128xbf16>
    %cst_265 = arith.constant dense<0.000000e+00> : vector<64x128xf32>
    %217 = tpu.matmul %215, %216, %cst_265 {dimension_numbers = #tpu.dot_dimension_numbers<[1], [0], [0], [1], [0, 0, 1, 1], [], []>} : vector<64x256xbf16>, vector<256x128xbf16>, vector<64x128xf32> -> vector<64x128xf32>
    %c3_266 = arith.constant 3 : index
    %c0_267 = arith.constant 0 : index
    %c1_268 = arith.constant 1 : index
    %c0_269 = arith.constant 0 : index
    %218 = vector.load %arg7[%c3_266, %c0_267, %c1_268, %c0_269] : memref<4x9x9x128xf32, #tpu.memory_space<vmem>>, vector<1x8x8x128xf32>
    %219 = vector.shape_cast %218 : vector<1x8x8x128xf32> to vector<8x8x128xf32>
    %220 = vector.shape_cast %219 : vector<8x8x128xf32> to vector<64x128xf32>
    %c1_270 = arith.constant 1 : index
    %c1_271 = arith.constant 1 : index
    %c0_272 = arith.constant 0 : index
    %c0_273 = arith.constant 0 : index
    %221 = vector.load %arg7[%c1_270, %c1_271, %c0_272, %c0_273] : memref<4x9x9x128xf32, #tpu.memory_space<vmem>>, vector<1x8x8x128xf32>
    %222 = vector.shape_cast %221 : vector<1x8x8x128xf32> to vector<8x8x128xf32>
    %223 = vector.shape_cast %222 : vector<8x8x128xf32> to vector<64x128xf32>
    %224 = tpu.concatenate %220, %223 in 1 : vector<64x128xf32>, vector<64x128xf32> -> vector<64x256xf32>
    %225 = arith.truncf %224 : vector<64x256xf32> to vector<64x256xbf16>
    %c256 = arith.constant 256 : index
    %c0_274 = arith.constant 0 : index
    %226 = vector.load %arg4[%c256, %c0_274] : memref<1152x128xbf16, #tpu.memory_space<vmem>>, vector<256x128xbf16>
    %cst_275 = arith.constant dense<0.000000e+00> : vector<64x128xf32>
    %227 = tpu.matmul %225, %226, %cst_275 {dimension_numbers = #tpu.dot_dimension_numbers<[1], [0], [0], [1], [0, 0, 1, 1], [], []>} : vector<64x256xbf16>, vector<256x128xbf16>, vector<64x128xf32> -> vector<64x128xf32>
    %228 = arith.addf %217, %227 : vector<64x128xf32>
    %c0_276 = arith.constant 0 : index
    %c1_277 = arith.constant 1 : index
    %c1_278 = arith.constant 1 : index
    %c0_279 = arith.constant 0 : index
    %229 = vector.load %arg7[%c0_276, %c1_277, %c1_278, %c0_279] : memref<4x9x9x128xf32, #tpu.memory_space<vmem>>, vector<1x8x8x128xf32>
    %230 = vector.shape_cast %229 : vector<1x8x8x128xf32> to vector<8x8x128xf32>
    %231 = vector.shape_cast %230 : vector<8x8x128xf32> to vector<64x128xf32>
    %c1_280 = arith.constant 1 : index
    %c1_281 = arith.constant 1 : index
    %c1_282 = arith.constant 1 : index
    %c0_283 = arith.constant 0 : index
    %232 = vector.load %arg7[%c1_280, %c1_281, %c1_282, %c0_283] : memref<4x9x9x128xf32, #tpu.memory_space<vmem>>, vector<1x8x8x128xf32>
    %233 = vector.shape_cast %232 : vector<1x8x8x128xf32> to vector<8x8x128xf32>
    %234 = vector.shape_cast %233 : vector<8x8x128xf32> to vector<64x128xf32>
    %235 = tpu.concatenate %231, %234 in 1 : vector<64x128xf32>, vector<64x128xf32> -> vector<64x256xf32>
    %236 = arith.truncf %235 : vector<64x256xf32> to vector<64x256xbf16>
    %c512 = arith.constant 512 : index
    %c0_284 = arith.constant 0 : index
    %237 = vector.load %arg4[%c512, %c0_284] : memref<1152x128xbf16, #tpu.memory_space<vmem>>, vector<256x128xbf16>
    %cst_285 = arith.constant dense<0.000000e+00> : vector<64x128xf32>
    %238 = tpu.matmul %236, %237, %cst_285 {dimension_numbers = #tpu.dot_dimension_numbers<[1], [0], [0], [1], [0, 0, 1, 1], [], []>} : vector<64x256xbf16>, vector<256x128xbf16>, vector<64x128xf32> -> vector<64x128xf32>
    %239 = arith.addf %228, %238 : vector<64x128xf32>
    %c3_286 = arith.constant 3 : index
    %c1_287 = arith.constant 1 : index
    %c0_288 = arith.constant 0 : index
    %c0_289 = arith.constant 0 : index
    %240 = vector.load %arg7[%c3_286, %c1_287, %c0_288, %c0_289] : memref<4x9x9x128xf32, #tpu.memory_space<vmem>>, vector<1x8x8x128xf32>
    %241 = vector.shape_cast %240 : vector<1x8x8x128xf32> to vector<8x8x128xf32>
    %242 = vector.shape_cast %241 : vector<8x8x128xf32> to vector<64x128xf32>
    %c2_290 = arith.constant 2 : index
    %c1_291 = arith.constant 1 : index
    %c1_292 = arith.constant 1 : index
    %c0_293 = arith.constant 0 : index
    %243 = vector.load %arg7[%c2_290, %c1_291, %c1_292, %c0_293] : memref<4x9x9x128xf32, #tpu.memory_space<vmem>>, vector<1x8x8x128xf32>
    %244 = vector.shape_cast %243 : vector<1x8x8x128xf32> to vector<8x8x128xf32>
    %245 = vector.shape_cast %244 : vector<8x8x128xf32> to vector<64x128xf32>
    %246 = tpu.concatenate %242, %245 in 1 : vector<64x128xf32>, vector<64x128xf32> -> vector<64x256xf32>
    %247 = arith.truncf %246 : vector<64x256xf32> to vector<64x256xbf16>
    %c768 = arith.constant 768 : index
    %c0_294 = arith.constant 0 : index
    %248 = vector.load %arg4[%c768, %c0_294] : memref<1152x128xbf16, #tpu.memory_space<vmem>>, vector<256x128xbf16>
    %cst_295 = arith.constant dense<0.000000e+00> : vector<64x128xf32>
    %249 = tpu.matmul %247, %248, %cst_295 {dimension_numbers = #tpu.dot_dimension_numbers<[1], [0], [0], [1], [0, 0, 1, 1], [], []>} : vector<64x256xbf16>, vector<256x128xbf16>, vector<64x128xf32> -> vector<64x128xf32>
    %250 = arith.addf %239, %249 : vector<64x128xf32>
    %c3_296 = arith.constant 3 : index
    %c1_297 = arith.constant 1 : index
    %c1_298 = arith.constant 1 : index
    %c0_299 = arith.constant 0 : index
    %251 = vector.load %arg7[%c3_296, %c1_297, %c1_298, %c0_299] : memref<4x9x9x128xf32, #tpu.memory_space<vmem>>, vector<1x8x8x128xf32>
    %252 = vector.shape_cast %251 : vector<1x8x8x128xf32> to vector<8x8x128xf32>
    %253 = vector.shape_cast %252 : vector<8x8x128xf32> to vector<64x128xf32>
    %254 = arith.truncf %253 : vector<64x128xf32> to vector<64x128xbf16>
    %c1024 = arith.constant 1024 : index
    %c0_300 = arith.constant 0 : index
    %255 = vector.load %arg4[%c1024, %c0_300] : memref<1152x128xbf16, #tpu.memory_space<vmem>>, vector<128x128xbf16>
    %cst_301 = arith.constant dense<0.000000e+00> : vector<64x128xf32>
    %256 = tpu.matmul %254, %255, %cst_301 {dimension_numbers = #tpu.dot_dimension_numbers<[1], [0], [0], [1], [0, 0, 1, 1], [], []>} : vector<64x128xbf16>, vector<128x128xbf16>, vector<64x128xf32> -> vector<64x128xf32>
    %257 = arith.addf %250, %256 : vector<64x128xf32>
    %c0_302 = arith.constant 0 : index
    %c0_303 = arith.constant 0 : index
    %258 = vector.load %arg5[%c0_302, %c0_303] : memref<1x128xf32, #tpu.memory_space<vmem>>, vector<1x128xf32>
    %259 = vector.broadcast %258 : vector<1x128xf32> to vector<64x128xf32>
    %260 = arith.addf %257, %259 : vector<64x128xf32>
    %261 = arith.negf %260 : vector<64x128xf32>
    %262 = math.exp %261 : vector<64x128xf32>
    %cst_304 = arith.constant 1.000000e+00 : f32
    %263 = vector.broadcast %cst_304 : f32 to vector<64x128xf32>
    %264 = arith.addf %263, %262 : vector<64x128xf32>
    %265 = arith.divf %263, %264 : vector<64x128xf32>
    %266 = arith.mulf %260, %265 : vector<64x128xf32>
    %267 = arith.truncf %266 : vector<64x128xf32> to vector<64x128xbf16>
    %c0_305 = arith.constant 0 : index
    %c0_306 = arith.constant 0 : index
    %c0_307 = arith.constant 0 : index
    %268 = vector.load %arg6[%c0_305, %c0_306, %c0_307] : memref<1x64x128xbf16, #tpu.memory_space<vmem>>, vector<1x64x128xbf16>
    %269 = vector.shape_cast %268 : vector<1x64x128xbf16> to vector<64x128xbf16>
    %270 = vector.shape_cast %267 : vector<64x128xbf16> to vector<1x64x128xbf16>
    tpu.vector_store %arg6[%c0_305, %c0_306, %c0_307], %270 {strides = array<i32>} : memref<1x64x128xbf16, #tpu.memory_space<vmem>>, vector<1x64x128xbf16>,
    return
  }
  func.func @transform_0(%arg0: i32) -> (i32, i32, i32, i32, i32) {
    %c0_i32 = arith.constant 0 : i32
    %c0_i32_0 = arith.constant 0 : i32
    %c0_i32_1 = arith.constant 0 : i32
    %c0_i32_2 = arith.constant 0 : i32
    %c0_i32_3 = arith.constant 0 : i32
    return %arg0, %c0_i32, %c0_i32_0, %c0_i32_1, %c0_i32_2 : i32, i32, i32, i32, i32
  }
  func.func @transform_1(%arg0: i32) -> (i32, i32) {
    %c0_i32 = arith.constant 0 : i32
    %c0_i32_0 = arith.constant 0 : i32
    %c0_i32_1 = arith.constant 0 : i32
    return %c0_i32, %c0_i32_0 : i32, i32
  }
  func.func @transform_2(%arg0: i32) -> (i32, i32) {
    %c0_i32 = arith.constant 0 : i32
    %c0_i32_0 = arith.constant 0 : i32
    %c0_i32_1 = arith.constant 0 : i32
    return %c0_i32, %c0_i32_0 : i32, i32
  }
  func.func @transform_3(%arg0: i32) -> (i32, i32) {
    %c0_i32 = arith.constant 0 : i32
    %c0_i32_0 = arith.constant 0 : i32
    %c0_i32_1 = arith.constant 0 : i32
    return %c0_i32, %c0_i32_0 : i32, i32
  }
  func.func @transform_4(%arg0: i32) -> (i32, i32) {
    %c0_i32 = arith.constant 0 : i32
    %c0_i32_0 = arith.constant 0 : i32
    %c0_i32_1 = arith.constant 0 : i32
    return %c0_i32, %c0_i32_0 : i32, i32
  }
  func.func @transform_5(%arg0: i32) -> (i32, i32, i32) {
    %c0_i32 = arith.constant 0 : i32
    %c0_i32_0 = arith.constant 0 : i32
    %c0_i32_1 = arith.constant 0 : i32
    return %arg0, %c0_i32, %c0_i32_0 : i32, i32, i32
  }
}

module attributes {stable_mosaic.version = 11 : i64} {
  func.func @_fused_tail_kernel(%arg0: i32, %arg1: memref<1x64x128xbf16, #tpu.memory_space<vmem>>, %arg2: memref<128x128xbf16, #tpu.memory_space<vmem>>, %arg3: memref<1x128xf32, #tpu.memory_space<vmem>>, %arg4: memref<1152x128xbf16, #tpu.memory_space<vmem>>, %arg5: memref<1x128xf32, #tpu.memory_space<vmem>>, %arg6: memref<256x128xbf16, #tpu.memory_space<vmem>>, %arg7: memref<1x128xf32, #tpu.memory_space<vmem>>, %arg8: memref<1x64x128xbf16, #tpu.memory_space<vmem>>, %arg9: memref<10x10x128xf32, #tpu.memory_space<vmem>>) attributes {dimension_semantics = [#tpu.dimension_semantics<parallel>], iteration_bounds = array<i64: 2>, scalar_prefetch = 0 : i64, scratch_operands = 1 : i64, tpu.core_type = #tpu.core_type<tc>, window_params = [{transform_indices = @transform_0, window_bounds = array<i64: 1, 64, 128>}, {pipeline_mode = #tpu.pipeline_mode<synchronous>, transform_indices = @transform_1, window_bounds = array<i64: 128, 128>}, {pipeline_mode = #tpu.pipeline_mode<synchronous>, transform_indices = @transform_2, window_bounds = array<i64: 1, 128>}, {pipeline_mode = #tpu.pipeline_mode<synchronous>, transform_indices = @transform_3, window_bounds = array<i64: 1152, 128>}, {pipeline_mode = #tpu.pipeline_mode<synchronous>, transform_indices = @transform_4, window_bounds = array<i64: 1, 128>}, {pipeline_mode = #tpu.pipeline_mode<synchronous>, transform_indices = @transform_5, window_bounds = array<i64: 256, 128>}, {pipeline_mode = #tpu.pipeline_mode<synchronous>, transform_indices = @transform_6, window_bounds = array<i64: 1, 128>}, {transform_indices = @transform_7, window_bounds = array<i64: 1, 64, 128>}]} {
    %c0 = arith.constant 0 : index
    %c0_0 = arith.constant 0 : index
    %c0_1 = arith.constant 0 : index
    %0 = vector.load %arg1[%c0, %c0_0, %c0_1] : memref<1x64x128xbf16, #tpu.memory_space<vmem>>, vector<1x64x128xbf16>
    %1 = vector.shape_cast %0 : vector<1x64x128xbf16> to vector<64x128xbf16>
    %c0_2 = arith.constant 0 : index
    %c0_3 = arith.constant 0 : index
    %2 = vector.load %arg2[%c0_2, %c0_3] : memref<128x128xbf16, #tpu.memory_space<vmem>>, vector<128x128xbf16>
    %cst = arith.constant dense<0.000000e+00> : vector<64x128xf32>
    %3 = tpu.matmul %1, %2, %cst {dimension_numbers = #tpu.dot_dimension_numbers<[1], [0], [0], [1], [0, 0, 1, 1], [], []>} : vector<64x128xbf16>, vector<128x128xbf16>, vector<64x128xf32> -> vector<64x128xf32>
    %c0_4 = arith.constant 0 : index
    %c0_5 = arith.constant 0 : index
    %4 = vector.load %arg3[%c0_4, %c0_5] : memref<1x128xf32, #tpu.memory_space<vmem>>, vector<1x128xf32>
    %5 = vector.broadcast %4 : vector<1x128xf32> to vector<64x128xf32>
    %6 = arith.addf %3, %5 : vector<64x128xf32>
    %7 = arith.negf %6 : vector<64x128xf32>
    %8 = math.exp %7 : vector<64x128xf32>
    %cst_6 = arith.constant 1.000000e+00 : f32
    %9 = vector.broadcast %cst_6 : f32 to vector<64x128xf32>
    %10 = arith.addf %9, %8 : vector<64x128xf32>
    %11 = arith.divf %9, %10 : vector<64x128xf32>
    %12 = arith.mulf %6, %11 : vector<64x128xf32>
    %cst_7 = arith.constant 0.000000e+00 : f32
    %13 = vector.broadcast %cst_7 : f32 to vector<1x10x128xf32>
    %c0_8 = arith.constant 0 : index
    %c0_9 = arith.constant 0 : index
    %c0_10 = arith.constant 0 : index
    %14 = vector.load %arg9[%c0_8, %c0_9, %c0_10] : memref<10x10x128xf32, #tpu.memory_space<vmem>>, vector<1x10x128xf32>
    tpu.vector_store %arg9[%c0_8, %c0_9, %c0_10], %13 {strides = array<i32>} : memref<10x10x128xf32, #tpu.memory_space<vmem>>, vector<1x10x128xf32>,
    %cst_11 = arith.constant 0.000000e+00 : f32
    %15 = vector.broadcast %cst_11 : f32 to vector<1x10x128xf32>
    %c9 = arith.constant 9 : index
    %c0_12 = arith.constant 0 : index
    %c0_13 = arith.constant 0 : index
    %16 = vector.load %arg9[%c9, %c0_12, %c0_13] : memref<10x10x128xf32, #tpu.memory_space<vmem>>, vector<1x10x128xf32>
    tpu.vector_store %arg9[%c9, %c0_12, %c0_13], %15 {strides = array<i32>} : memref<10x10x128xf32, #tpu.memory_space<vmem>>, vector<1x10x128xf32>,
    %cst_14 = arith.constant 0.000000e+00 : f32
    %17 = vector.broadcast %cst_14 : f32 to vector<10x1x128xf32>
    %c0_15 = arith.constant 0 : index
    %c0_16 = arith.constant 0 : index
    %c0_17 = arith.constant 0 : index
    %18 = vector.load %arg9[%c0_15, %c0_16, %c0_17] : memref<10x10x128xf32, #tpu.memory_space<vmem>>, vector<10x1x128xf32>
    tpu.vector_store %arg9[%c0_15, %c0_16, %c0_17], %17 {strides = array<i32>} : memref<10x10x128xf32, #tpu.memory_space<vmem>>, vector<10x1x128xf32>,
    %cst_18 = arith.constant 0.000000e+00 : f32
    %19 = vector.broadcast %cst_18 : f32 to vector<10x1x128xf32>
    %c0_19 = arith.constant 0 : index
    %c9_20 = arith.constant 9 : index
    %c0_21 = arith.constant 0 : index
    %20 = vector.load %arg9[%c0_19, %c9_20, %c0_21] : memref<10x10x128xf32, #tpu.memory_space<vmem>>, vector<10x1x128xf32>
    tpu.vector_store %arg9[%c0_19, %c9_20, %c0_21], %19 {strides = array<i32>} : memref<10x10x128xf32, #tpu.memory_space<vmem>>, vector<10x1x128xf32>,
    %21 = vector.shape_cast %12 : vector<64x128xf32> to vector<8x8x128xf32>
    %c1 = arith.constant 1 : index
    %c1_22 = arith.constant 1 : index
    %c0_23 = arith.constant 0 : index
    %22 = vector.load %arg9[%c1, %c1_22, %c0_23] : memref<10x10x128xf32, #tpu.memory_space<vmem>>, vector<8x8x128xf32>
    tpu.vector_store %arg9[%c1, %c1_22, %c0_23], %21 {strides = array<i32>} : memref<10x10x128xf32, #tpu.memory_space<vmem>>, vector<8x8x128xf32>,
    %c0_24 = arith.constant 0 : index
    %c0_25 = arith.constant 0 : index
    %c0_26 = arith.constant 0 : index
    %23 = vector.load %arg9[%c0_24, %c0_25, %c0_26] : memref<10x10x128xf32, #tpu.memory_space<vmem>>, vector<8x8x128xf32>
    %24 = vector.shape_cast %23 : vector<8x8x128xf32> to vector<64x128xf32>
    %c0_27 = arith.constant 0 : index
    %c1_28 = arith.constant 1 : index
    %c0_29 = arith.constant 0 : index
    %25 = vector.load %arg9[%c0_27, %c1_28, %c0_29] : memref<10x10x128xf32, #tpu.memory_space<vmem>>, vector<8x8x128xf32>
    %26 = vector.shape_cast %25 : vector<8x8x128xf32> to vector<64x128xf32>
    %27 = tpu.concatenate %24, %26 in 1 : vector<64x128xf32>, vector<64x128xf32> -> vector<64x256xf32>
    %28 = arith.truncf %27 : vector<64x256xf32> to vector<64x256xbf16>
    %c0_30 = arith.constant 0 : index
    %c0_31 = arith.constant 0 : index
    %29 = vector.load %arg4[%c0_30, %c0_31] : memref<1152x128xbf16, #tpu.memory_space<vmem>>, vector<256x128xbf16>
    %cst_32 = arith.constant dense<0.000000e+00> : vector<64x128xf32>
    %30 = tpu.matmul %28, %29, %cst_32 {dimension_numbers = #tpu.dot_dimension_numbers<[1], [0], [0], [1], [0, 0, 1, 1], [], []>} : vector<64x256xbf16>, vector<256x128xbf16>, vector<64x128xf32> -> vector<64x128xf32>
    %c0_33 = arith.constant 0 : index
    %c2 = arith.constant 2 : index
    %c0_34 = arith.constant 0 : index
    %31 = vector.load %arg9[%c0_33, %c2, %c0_34] : memref<10x10x128xf32, #tpu.memory_space<vmem>>, vector<8x8x128xf32>
    %32 = vector.shape_cast %31 : vector<8x8x128xf32> to vector<64x128xf32>
    %c1_35 = arith.constant 1 : index
    %c0_36 = arith.constant 0 : index
    %c0_37 = arith.constant 0 : index
    %33 = vector.load %arg9[%c1_35, %c0_36, %c0_37] : memref<10x10x128xf32, #tpu.memory_space<vmem>>, vector<8x8x128xf32>
    %34 = vector.shape_cast %33 : vector<8x8x128xf32> to vector<64x128xf32>
    %35 = tpu.concatenate %32, %34 in 1 : vector<64x128xf32>, vector<64x128xf32> -> vector<64x256xf32>
    %36 = arith.truncf %35 : vector<64x256xf32> to vector<64x256xbf16>
    %c256 = arith.constant 256 : index
    %c0_38 = arith.constant 0 : index
    %37 = vector.load %arg4[%c256, %c0_38] : memref<1152x128xbf16, #tpu.memory_space<vmem>>, vector<256x128xbf16>
    %cst_39 = arith.constant dense<0.000000e+00> : vector<64x128xf32>
    %38 = tpu.matmul %36, %37, %cst_39 {dimension_numbers = #tpu.dot_dimension_numbers<[1], [0], [0], [1], [0, 0, 1, 1], [], []>} : vector<64x256xbf16>, vector<256x128xbf16>, vector<64x128xf32> -> vector<64x128xf32>
    %39 = arith.addf %30, %38 : vector<64x128xf32>
    %c1_40 = arith.constant 1 : index
    %c1_41 = arith.constant 1 : index
    %c0_42 = arith.constant 0 : index
    %40 = vector.load %arg9[%c1_40, %c1_41, %c0_42] : memref<10x10x128xf32, #tpu.memory_space<vmem>>, vector<8x8x128xf32>
    %41 = vector.shape_cast %40 : vector<8x8x128xf32> to vector<64x128xf32>
    %c1_43 = arith.constant 1 : index
    %c2_44 = arith.constant 2 : index
    %c0_45 = arith.constant 0 : index
    %42 = vector.load %arg9[%c1_43, %c2_44, %c0_45] : memref<10x10x128xf32, #tpu.memory_space<vmem>>, vector<8x8x128xf32>
    %43 = vector.shape_cast %42 : vector<8x8x128xf32> to vector<64x128xf32>
    %44 = tpu.concatenate %41, %43 in 1 : vector<64x128xf32>, vector<64x128xf32> -> vector<64x256xf32>
    %45 = arith.truncf %44 : vector<64x256xf32> to vector<64x256xbf16>
    %c512 = arith.constant 512 : index
    %c0_46 = arith.constant 0 : index
    %46 = vector.load %arg4[%c512, %c0_46] : memref<1152x128xbf16, #tpu.memory_space<vmem>>, vector<256x128xbf16>
    %cst_47 = arith.constant dense<0.000000e+00> : vector<64x128xf32>
    %47 = tpu.matmul %45, %46, %cst_47 {dimension_numbers = #tpu.dot_dimension_numbers<[1], [0], [0], [1], [0, 0, 1, 1], [], []>} : vector<64x256xbf16>, vector<256x128xbf16>, vector<64x128xf32> -> vector<64x128xf32>
    %48 = arith.addf %39, %47 : vector<64x128xf32>
    %c2_48 = arith.constant 2 : index
    %c0_49 = arith.constant 0 : index
    %c0_50 = arith.constant 0 : index
    %49 = vector.load %arg9[%c2_48, %c0_49, %c0_50] : memref<10x10x128xf32, #tpu.memory_space<vmem>>, vector<8x8x128xf32>
    %50 = vector.shape_cast %49 : vector<8x8x128xf32> to vector<64x128xf32>
    %c2_51 = arith.constant 2 : index
    %c1_52 = arith.constant 1 : index
    %c0_53 = arith.constant 0 : index
    %51 = vector.load %arg9[%c2_51, %c1_52, %c0_53] : memref<10x10x128xf32, #tpu.memory_space<vmem>>, vector<8x8x128xf32>
    %52 = vector.shape_cast %51 : vector<8x8x128xf32> to vector<64x128xf32>
    %53 = tpu.concatenate %50, %52 in 1 : vector<64x128xf32>, vector<64x128xf32> -> vector<64x256xf32>
    %54 = arith.truncf %53 : vector<64x256xf32> to vector<64x256xbf16>
    %c768 = arith.constant 768 : index
    %c0_54 = arith.constant 0 : index
    %55 = vector.load %arg4[%c768, %c0_54] : memref<1152x128xbf16, #tpu.memory_space<vmem>>, vector<256x128xbf16>
    %cst_55 = arith.constant dense<0.000000e+00> : vector<64x128xf32>
    %56 = tpu.matmul %54, %55, %cst_55 {dimension_numbers = #tpu.dot_dimension_numbers<[1], [0], [0], [1], [0, 0, 1, 1], [], []>} : vector<64x256xbf16>, vector<256x128xbf16>, vector<64x128xf32> -> vector<64x128xf32>
    %57 = arith.addf %48, %56 : vector<64x128xf32>
    %c2_56 = arith.constant 2 : index
    %c2_57 = arith.constant 2 : index
    %c0_58 = arith.constant 0 : index
    %58 = vector.load %arg9[%c2_56, %c2_57, %c0_58] : memref<10x10x128xf32, #tpu.memory_space<vmem>>, vector<8x8x128xf32>
    %59 = vector.shape_cast %58 : vector<8x8x128xf32> to vector<64x128xf32>
    %60 = arith.truncf %59 : vector<64x128xf32> to vector<64x128xbf16>
    %c1024 = arith.constant 1024 : index
    %c0_59 = arith.constant 0 : index
    %61 = vector.load %arg4[%c1024, %c0_59] : memref<1152x128xbf16, #tpu.memory_space<vmem>>, vector<128x128xbf16>
    %cst_60 = arith.constant dense<0.000000e+00> : vector<64x128xf32>
    %62 = tpu.matmul %60, %61, %cst_60 {dimension_numbers = #tpu.dot_dimension_numbers<[1], [0], [0], [1], [0, 0, 1, 1], [], []>} : vector<64x128xbf16>, vector<128x128xbf16>, vector<64x128xf32> -> vector<64x128xf32>
    %63 = arith.addf %57, %62 : vector<64x128xf32>
    %c0_61 = arith.constant 0 : index
    %c0_62 = arith.constant 0 : index
    %64 = vector.load %arg5[%c0_61, %c0_62] : memref<1x128xf32, #tpu.memory_space<vmem>>, vector<1x128xf32>
    %65 = vector.broadcast %64 : vector<1x128xf32> to vector<64x128xf32>
    %66 = arith.addf %63, %65 : vector<64x128xf32>
    %67 = arith.negf %66 : vector<64x128xf32>
    %68 = math.exp %67 : vector<64x128xf32>
    %cst_63 = arith.constant 1.000000e+00 : f32
    %69 = vector.broadcast %cst_63 : f32 to vector<64x128xf32>
    %70 = arith.addf %69, %68 : vector<64x128xf32>
    %71 = arith.divf %69, %70 : vector<64x128xf32>
    %72 = arith.mulf %66, %71 : vector<64x128xf32>
    %73 = arith.truncf %72 : vector<64x128xf32> to vector<64x128xbf16>
    %74 = tpu.concatenate %73, %1 in 1 : vector<64x128xbf16>, vector<64x128xbf16> -> vector<64x256xbf16>
    %c0_64 = arith.constant 0 : index
    %c0_65 = arith.constant 0 : index
    %75 = vector.load %arg6[%c0_64, %c0_65] : memref<256x128xbf16, #tpu.memory_space<vmem>>, vector<256x128xbf16>
    %cst_66 = arith.constant dense<0.000000e+00> : vector<64x128xf32>
    %76 = tpu.matmul %74, %75, %cst_66 {dimension_numbers = #tpu.dot_dimension_numbers<[1], [0], [0], [1], [0, 0, 1, 1], [], []>} : vector<64x256xbf16>, vector<256x128xbf16>, vector<64x128xf32> -> vector<64x128xf32>
    %c0_67 = arith.constant 0 : index
    %c0_68 = arith.constant 0 : index
    %77 = vector.load %arg7[%c0_67, %c0_68] : memref<1x128xf32, #tpu.memory_space<vmem>>, vector<1x128xf32>
    %78 = vector.broadcast %77 : vector<1x128xf32> to vector<64x128xf32>
    %79 = arith.addf %76, %78 : vector<64x128xf32>
    %80 = arith.negf %79 : vector<64x128xf32>
    %81 = math.exp %80 : vector<64x128xf32>
    %cst_69 = arith.constant 1.000000e+00 : f32
    %82 = vector.broadcast %cst_69 : f32 to vector<64x128xf32>
    %83 = arith.addf %82, %81 : vector<64x128xf32>
    %84 = arith.divf %82, %83 : vector<64x128xf32>
    %85 = arith.mulf %79, %84 : vector<64x128xf32>
    %86 = arith.truncf %85 : vector<64x128xf32> to vector<64x128xbf16>
    %c0_70 = arith.constant 0 : index
    %c0_71 = arith.constant 0 : index
    %c0_72 = arith.constant 0 : index
    %87 = vector.load %arg8[%c0_70, %c0_71, %c0_72] : memref<1x64x128xbf16, #tpu.memory_space<vmem>>, vector<1x64x128xbf16>
    %88 = vector.shape_cast %87 : vector<1x64x128xbf16> to vector<64x128xbf16>
    %89 = vector.shape_cast %86 : vector<64x128xbf16> to vector<1x64x128xbf16>
    tpu.vector_store %arg8[%c0_70, %c0_71, %c0_72], %89 {strides = array<i32>} : memref<1x64x128xbf16, #tpu.memory_space<vmem>>, vector<1x64x128xbf16>,
    return
  }
  func.func @transform_0(%arg0: i32) -> (i32, i32, i32) {
    %c0_i32 = arith.constant 0 : i32
    %c0_i32_0 = arith.constant 0 : i32
    %c0_i32_1 = arith.constant 0 : i32
    return %arg0, %c0_i32, %c0_i32_0 : i32, i32, i32
  }
  func.func @transform_1(%arg0: i32) -> (i32, i32) {
    %c0_i32 = arith.constant 0 : i32
    %c0_i32_0 = arith.constant 0 : i32
    %c0_i32_1 = arith.constant 0 : i32
    return %c0_i32, %c0_i32_0 : i32, i32
  }
  func.func @transform_2(%arg0: i32) -> (i32, i32) {
    %c0_i32 = arith.constant 0 : i32
    %c0_i32_0 = arith.constant 0 : i32
    %c0_i32_1 = arith.constant 0 : i32
    return %c0_i32, %c0_i32_0 : i32, i32
  }
  func.func @transform_3(%arg0: i32) -> (i32, i32) {
    %c0_i32 = arith.constant 0 : i32
    %c0_i32_0 = arith.constant 0 : i32
    %c0_i32_1 = arith.constant 0 : i32
    return %c0_i32, %c0_i32_0 : i32, i32
  }
  func.func @transform_4(%arg0: i32) -> (i32, i32) {
    %c0_i32 = arith.constant 0 : i32
    %c0_i32_0 = arith.constant 0 : i32
    %c0_i32_1 = arith.constant 0 : i32
    return %c0_i32, %c0_i32_0 : i32, i32
  }
  func.func @transform_5(%arg0: i32) -> (i32, i32) {
    %c0_i32 = arith.constant 0 : i32
    %c0_i32_0 = arith.constant 0 : i32
    %c0_i32_1 = arith.constant 0 : i32
    return %c0_i32, %c0_i32_0 : i32, i32
  }
  func.func @transform_6(%arg0: i32) -> (i32, i32) {
    %c0_i32 = arith.constant 0 : i32
    %c0_i32_0 = arith.constant 0 : i32
    %c0_i32_1 = arith.constant 0 : i32
    return %c0_i32, %c0_i32_0 : i32, i32
  }
  func.func @transform_7(%arg0: i32) -> (i32, i32, i32) {
    %c0_i32 = arith.constant 0 : i32
    %c0_i32_0 = arith.constant 0 : i32
    %c0_i32_1 = arith.constant 0 : i32
    return %arg0, %c0_i32, %c0_i32_0 : i32, i32, i32
  }
}

</mosaic_0001>

<llo_original>
// kernel: backbone_forward_pallas.3
$region0: #{backbone_forward_pallas.3}
  #allocation0 [shape = 'u32[]', space=smem, size = 0x4, offset = 0x4, fixed_abs, tag = 'smem constant byte address 0x4 - core index']
  #allocation1 [shape = 'u32[144,128]{1,0:T(1,128)}', space=vmem, size = 0x12000, scoped, tag = 'internal scratch']
  #allocation2 [shape = 'f32[10,10,128]{2,1,0:T(8,128)}', space=vmem, size = 0x14000, scoped, tag = 'scratch operand']
  %s0 = inlined_call_operand.vmem [shape: bf16[2,64,128], index: 0, kind: input, shape index: {}]
  %s1 = inlined_call_operand.vmem [shape: bf16[128,128], index: 1, kind: input, shape index: {}]
  %s2 = inlined_call_operand.vmem [shape: f32[1,128], index: 2, kind: input, shape index: {}]
  %s3 = inlined_call_operand.vmem [shape: bf16[1152,128], index: 3, kind: input, shape index: {}]
  %s4 = inlined_call_operand.vmem [shape: f32[1,128], index: 4, kind: input, shape index: {}]
  %s5 = inlined_call_operand.vmem [shape: bf16[256,128], index: 5, kind: input, shape index: {}]
  %s6 = inlined_call_operand.vmem [shape: f32[1,128], index: 6, kind: input, shape index: {}]
  %s7 = inlined_call_operand.vmem [shape: bf16[2,64,128], index: 7, kind: output, shape index: {}]
  %s8 = sld [smem:[#allocation0]]
  $region61: #{backbone_forward_pallas.3} parent=0
    _
  %s10 = ssub.s32 1, %s8
  %s11 = scalar_select 0, %s10, %s8
  loop: start=0, step=1, limit=4
  $region2: #{backbone_forward_pallas.3} parent=0 // loop_pre_header
    _
  $region3: #{backbone_forward_pallas.3} parent=0 // loop_header
    %s13 = sphi 0, %s17
    %p14 = scmp.ge.s32.totalorder %s13, 4
    %s23 = sphi 0, %s25
    %s26 = sphi 0, %s23
    %s27 = sphi 0, %s26
    %s43 = sphi 0, %s27
    %s47 = sphi 0, %s47
    %s49 = sphi 0, %s47
    %s50 = sphi 0, %s49
    %s64 = sphi 0, %s50
    %s68 = sphi 0, %s68
    %s70 = sphi 0, %s68
    %s71 = sphi 0, %s70
    %s85 = sphi 0, %s71
    %s89 = sphi 0, %s89
    %s91 = sphi 0, %s89
    %s92 = sphi 0, %s91
    %s106 = sphi 0, %s92
    %s110 = sphi 0, %s110
    %s112 = sphi 0, %s110
    %s113 = sphi 0, %s112
    %s127 = sphi 0, %s113
    %s131 = sphi 0, %s131
    %s133 = sphi 0, %s131
    %s134 = sphi 0, %s133
    %s148 = sphi 0, %s134
    %s152 = sphi 0, %s152
    %s154 = sphi 0, %s152
    %s155 = sphi 0, %s154
    %s169 = sphi 0, %s155
    %s175 = sphi 0, %s177
    %s178 = sphi 0, %s175
    %s179 = sphi 0, %s178
    %s195 = sphi 0, %s179
  $region4: #{backbone_forward_pallas.3} parent=0 // loop_header_branch
    %16 = sbr.rel (%p14) target = $region8
  $region5: #{backbone_forward_pallas.3} parent=0 // loop_body
    %s18 = ssub.s32 %s13, 1
    %s19 = ssub.s32 %s13, 2
    %s20 = sadd.s32 %s13, 1
    %s21 = ssub.s32 %s13, %s20
    %p22 = scmp.eq.s32.totalorder %s21, 0
    %s24 = sadd.s32 %s23, 1
    %s25 = scalar_select %p22, %s23, %s24
    %p28 = pneg %p22
    %p29 = scmp.eq.s32.totalorder %s13, 1
    %p30 = por %p28, %p29
    %p31 = scmp.ne.s32.totalorder %s23, %s26
    %p32 = scmp.eq.s32.totalorder %s13, 0
    %p33 = por %p31, %p32
    %p34 = scmp.ne.s32.totalorder %s23, %s26
    %p35 = scmp.eq.s32.totalorder %s18, 1
    %p36 = por %p34, %p35
    %p37 = scmp.ne.s32.totalorder %s26, %s27
    %p38 = scmp.eq.s32.totalorder %s18, 0
    %p39 = por %p37, %p38
    %p40 = scmp.ne.s32.totalorder %s26, %s27
    %p41 = scmp.eq.s32.totalorder %s19, 1
    %p42 = por %p40, %p41
    %p44 = scmp.ne.s32.totalorder %s27, %s43
    %p45 = scmp.eq.s32.totalorder %s19, 0
    %p46 = por %p44, %p45
    %s48 = sadd.s32 %s47, 1
    %p51 = scmp.eq.s32.totalorder %s13, 1
    %p52 = scmp.ne.s32.totalorder %s47, %s49
    %p53 = scmp.eq.s32.totalorder %s13, 0
    %p54 = por %p52, %p53
    %p55 = scmp.ne.s32.totalorder %s47, %s49
    %p56 = scmp.eq.s32.totalorder %s18, 1
    %p57 = por %p55, %p56
    %p58 = scmp.ne.s32.totalorder %s49, %s50
    %p59 = scmp.eq.s32.totalorder %s18, 0
    %p60 = por %p58, %p59
    %p61 = scmp.ne.s32.totalorder %s49, %s50
    %p62 = scmp.eq.s32.totalorder %s19, 1
    %p63 = por %p61, %p62
    %p65 = scmp.ne.s32.totalorder %s50, %s64
    %p66 = scmp.eq.s32.totalorder %s19, 0
    %p67 = por %p65, %p66
    %s69 = sadd.s32 %s68, 1
    %p72 = scmp.eq.s32.totalorder %s13, 1
    %p73 = scmp.ne.s32.totalorder %s68, %s70
    %p74 = scmp.eq.s32.totalorder %s13, 0
    %p75 = por %p73, %p74
    %p76 = scmp.ne.s32.totalorder %s68, %s70
    %p77 = scmp.eq.s32.totalorder %s18, 1
    %p78 = por %p76, %p77
    %p79 = scmp.ne.s32.totalorder %s70, %s71
    %p80 = scmp.eq.s32.totalorder %s18, 0
    %p81 = por %p79, %p80
    %p82 = scmp.ne.s32.totalorder %s70, %s71
    %p83 = scmp.eq.s32.totalorder %s19, 1
    %p84 = por %p82, %p83
    %p86 = scmp.ne.s32.totalorder %s71, %s85
    %p87 = scmp.eq.s32.totalorder %s19, 0
    %p88 = por %p86, %p87
    %s90 = sadd.s32 %s89, 1
    %p93 = scmp.eq.s32.totalorder %s13, 1
    %p94 = scmp.ne.s32.totalorder %s89, %s91
    %p95 = scmp.eq.s32.totalorder %s13, 0
    %p96 = por %p94, %p95
    %p97 = scmp.ne.s32.totalorder %s89, %s91
    %p98 = scmp.eq.s32.totalorder %s18, 1
    %p99 = por %p97, %p98
    %p100 = scmp.ne.s32.totalorder %s91, %s92
    %p101 = scmp.eq.s32.totalorder %s18, 0
    %p102 = por %p100, %p101
    %p103 = scmp.ne.s32.totalorder %s91, %s92
    %p104 = scmp.eq.s32.totalorder %s19, 1
    %p105 = por %p103, %p104
    %p107 = scmp.ne.s32.totalorder %s92, %s106
    %p108 = scmp.eq.s32.totalorder %s19, 0
    %p109 = por %p107, %p108
    %s111 = sadd.s32 %s110, 1
    %p114 = scmp.eq.s32.totalorder %s13, 1
    %p115 = scmp.ne.s32.totalorder %s110, %s112
    %p116 = scmp.eq.s32.totalorder %s13, 0
    %p117 = por %p115, %p116
    %p118 = scmp.ne.s32.totalorder %s110, %s112
    %p119 = scmp.eq.s32.totalorder %s18, 1
    %p120 = por %p118, %p119
    %p121 = scmp.ne.s32.totalorder %s112, %s113
    %p122 = scmp.eq.s32.totalorder %s18, 0
    %p123 = por %p121, %p122
    %p124 = scmp.ne.s32.totalorder %s112, %s113
    %p125 = scmp.eq.s32.totalorder %s19, 1
    %p126 = por %p124, %p125
    %p128 = scmp.ne.s32.totalorder %s113, %s127
    %p129 = scmp.eq.s32.totalorder %s19, 0
    %p130 = por %p128, %p129
    %s132 = sadd.s32 %s131, 1
    %p135 = scmp.eq.s32.totalorder %s13, 1
    %p136 = scmp.ne.s32.totalorder %s131, %s133
    %p137 = scmp.eq.s32.totalorder %s13, 0
    %p138 = por %p136, %p137
    %p139 = scmp.ne.s32.totalorder %s131, %s133
    %p140 = scmp.eq.s32.totalorder %s18, 1
    %p141 = por %p139, %p140
    %p142 = scmp.ne.s32.totalorder %s133, %s134
    %p143 = scmp.eq.s32.totalorder %s18, 0
    %p144 = por %p142, %p143
    %p145 = scmp.ne.s32.totalorder %s133, %s134
    %p146 = scmp.eq.s32.totalorder %s19, 1
    %p147 = por %p145, %p146
    %p149 = scmp.ne.s32.totalorder %s134, %s148
    %p150 = scmp.eq.s32.totalorder %s19, 0
    %p151 = por %p149, %p150
    %s153 = sadd.s32 %s152, 1
    %p156 = scmp.eq.s32.totalorder %s13, 1
    %p157 = scmp.ne.s32.totalorder %s152, %s154
    %p158 = scmp.eq.s32.totalorder %s13, 0
    %p159 = por %p157, %p158
    %p160 = scmp.ne.s32.totalorder %s152, %s154
    %p161 = scmp.eq.s32.totalorder %s18, 1
    %p162 = por %p160, %p161
    %p163 = scmp.ne.s32.totalorder %s154, %s155
    %p164 = scmp.eq.s32.totalorder %s18, 0
    %p165 = por %p163, %p164
    %p166 = scmp.ne.s32.totalorder %s154, %s155
    %p167 = scmp.eq.s32.totalorder %s19, 1
    %p168 = por %p166, %p167
    %p170 = scmp.ne.s32.totalorder %s155, %s169
    %p171 = scmp.eq.s32.totalorder %s19, 0
    %p172 = por %p170, %p171
    %s173 = ssub.s32 %s13, %s20
    %p174 = scmp.eq.s32.totalorder %s173, 0
    %s176 = sadd.s32 %s175, 1
    %s177 = scalar_select %p174, %s175, %s176
    %p180 = pneg %p174
    %p181 = scmp.eq.s32.totalorder %s13, 1
    %p182 = por %p180, %p181
    %p183 = scmp.ne.s32.totalorder %s175, %s178
    %p184 = scmp.eq.s32.totalorder %s13, 0
    %p185 = por %p183, %p184
    %p186 = scmp.ne.s32.totalorder %s175, %s178
    %p187 = scmp.eq.s32.totalorder %s18, 1
    %p188 = por %p186, %p187
    %p189 = scmp.ne.s32.totalorder %s178, %s179
    %p190 = scmp.eq.s32.totalorder %s18, 0
    %p191 = por %p189, %p190
    %p192 = scmp.ne.s32.totalorder %s178, %s179
    %p193 = scmp.eq.s32.totalorder %s19, 1
    %p194 = por %p192, %p193
    %p196 = scmp.ne.s32.totalorder %s179, %s195
    %p197 = scmp.eq.s32.totalorder %s19, 0
    %p198 = por %p196, %p197
    %p199 = scmp.le.s32.totalorder 1, %s13
    %p200 = scmp.lt.s32.totalorder %s13, 3
    %p201 = pnand %p199, %p200
    %p202 = pneg %p201
    // Predicated region
    $region9: #{backbone_forward_pallas.3} parent=5 // pred_check
      _
    $region10: #{backbone_forward_pallas.3} parent=5 // pred_check_branch
      %204 = sbr.rel (%p201) target = $region12
    $region11: #{backbone_forward_pallas.3} parent=5 // pred_region
      %s205 = ssub.s32 %s13, 1
      // Predicated region
      $region13: #{backbone_forward_pallas.3} parent=11 // pred_check
        %p206 = pneg %p60
      $region14: #{backbone_forward_pallas.3} parent=11 // pred_check_branch
        %208 = sbr.rel (%p206) target = $region16
      $region15: #{backbone_forward_pallas.3} parent=11 // pred_region
        _
      $region16: #{backbone_forward_pallas.3} parent=11 // pred_fallthru
        _
      // Predicated region
      $region17: #{backbone_forward_pallas.3} parent=11 // pred_check
        %p209 = pneg %p81
      $region18: #{backbone_forward_pallas.3} parent=11 // pred_check_branch
        %211 = sbr.rel (%p209) target = $region20
      $region19: #{backbone_forward_pallas.3} parent=11 // pred_region
        _
      $region20: #{backbone_forward_pallas.3} parent=11 // pred_fallthru
        _
      // Predicated region
      $region21: #{backbone_forward_pallas.3} parent=11 // pred_check
        %p212 = pneg %p102
      $region22: #{backbone_forward_pallas.3} parent=11 // pred_check_branch
        %214 = sbr.rel (%p212) target = $region24
      $region23: #{backbone_forward_pallas.3} parent=11 // pred_region
        _
      $region24: #{backbone_forward_pallas.3} parent=11 // pred_fallthru
        _
      // Predicated region
      $region25: #{backbone_forward_pallas.3} parent=11 // pred_check
        %p215 = pneg %p123
      $region26: #{backbone_forward_pallas.3} parent=11 // pred_check_branch
        %217 = sbr.rel (%p215) target = $region28
      $region27: #{backbone_forward_pallas.3} parent=11 // pred_region
        _
      $region28: #{backbone_forward_pallas.3} parent=11 // pred_fallthru
        _
      // Predicated region
      $region29: #{backbone_forward_pallas.3} parent=11 // pred_check
        %p218 = pneg %p144
      $region30: #{backbone_forward_pallas.3} parent=11 // pred_check_branch
        %220 = sbr.rel (%p218) target = $region32
      $region31: #{backbone_forward_pallas.3} parent=11 // pred_region
        _
      $region32: #{backbone_forward_pallas.3} parent=11 // pred_fallthru
        _
      // Predicated region
      $region33: #{backbone_forward_pallas.3} parent=11 // pred_check
        %p221 = pneg %p165
      $region34: #{backbone_forward_pallas.3} parent=11 // pred_check_branch
        %223 = sbr.rel (%p221) target = $region36
      $region35: #{backbone_forward_pallas.3} parent=11 // pred_region
        _
      $region36: #{backbone_forward_pallas.3} parent=11 // pred_fallthru
        _
    $region12: #{backbone_forward_pallas.3} parent=5 // pred_fallthru
      _
    %p224 = scmp.lt.s32.totalorder %s13, 2
    // Predicated region
    $region37: #{backbone_forward_pallas.3} parent=5 // pred_check
      %p225 = pneg %p224
    $region38: #{backbone_forward_pallas.3} parent=5 // pred_check_branch
      %227 = sbr.rel (%p225) target = $region40
    $region39: #{backbone_forward_pallas.3} parent=5 // pred_region
      // Predicated region
      $region41: #{backbone_forward_pallas.3} parent=39 // pred_check
        %p228 = pneg %p33
      $region42: #{backbone_forward_pallas.3} parent=39 // pred_check_branch
        %230 = sbr.rel (%p228) target = $region44
      $region43: #{backbone_forward_pallas.3} parent=39 // pred_region
        %p231 = scmp.lt.s32.totalorder %s13, 1
        %s232 = scalar_select %p231, %s13, 1
        %s233 = smul.addr %s232, 8
        %s234 = smul.addr %s233, 4
        %s235 = scalar_lea.vmem %s0, %s234
      $region44: #{backbone_forward_pallas.3} parent=39 // pred_fallthru
        _
    $region40: #{backbone_forward_pallas.3} parent=5 // pred_fallthru
      _
    %p236 = scmp.le.s32.totalorder 1, %s13
    %p237 = scmp.lt.s32.totalorder %s13, 3
    %p238 = pnand %p236, %p237
    %p239 = pneg %p238
    // Predicated region
    $region45: #{backbone_forward_pallas.3} parent=5 // pred_check
      _
    $region46: #{backbone_forward_pallas.3} parent=5 // pred_check_branch
      %241 = sbr.rel (%p238) target = $region48
    $region47: #{backbone_forward_pallas.3} parent=5 // pred_region
      %s242 = ssub.s32 %s13, 1
      %p243 = scmp.lt.s32.totalorder %s18, 1
      %s244 = scalar_select %p243, %s18, 1
      %s245 = smul.addr %s244, 8
      %s246 = smul.addr %s245, 4
      %s247 = scalar_lea.vmem %s0, %s246
      %p248 = pneg %p39
      %p249 = pneg %p36
      %p250 = pneg %p60
      %p251 = pneg %p57
      %p252 = pneg %p81
      %p253 = pneg %p78
      %p254 = pneg %p102
      %p255 = pneg %p99
      %p256 = pneg %p123
      %p257 = pneg %p120
      %p258 = pneg %p144
      %p259 = pneg %p141
      %p260 = pneg %p165
      %p261 = pneg %p162
      %p262 = pneg %p191
      %p263 = pneg %p188
      %p264 = scmp.lt.s32.totalorder %s18, 1
      %s265 = scalar_select %p264, %s18, 1
      %s266 = smul.addr %s265, 8
      %s267 = smul.addr %s266, 4
      %s268 = scalar_lea.vmem %s7, %s267
      %p269 = scmp.lt.s32.totalorder %s18, 1
      %s270 = scalar_select %p269, %s18, 1
      %s271 = smul.addr %s270, 8
      %s272 = smul.addr %s271, 4
      %s273 = scalar_lea.vmem %s0, %s272
      %p274 = scmp.lt.s32.totalorder %s18, 1
      %s275 = scalar_select %p274, %s18, 1
      %s276 = smul.addr %s275, 8
      %s277 = smul.addr %s276, 4
      %s278 = scalar_lea.vmem %s7, %s277
      %v280 = vld [vmem:[%s273] sm:$0xf]
      %v281 = vld [vmem:[%s273 + $0x4] sm:$0xf]
      %v282 = vld [vmem:[%s273 + $0x8] sm:$0xf]
      %v283 = vld [vmem:[%s273 + $0xc] sm:$0xf]
      %v284 = vld [vmem:[%s273 + $0x10] sm:$0xf]
      %v285 = vld [vmem:[%s273 + $0x14] sm:$0xf]
      %v286 = vld [vmem:[%s273 + $0x18] sm:$0xf]
      %v287 = vld [vmem:[%s273 + $0x1c] sm:$0xf]
      %v288 = vld [vmem:[%s1] sm:$0xf]
      %v289 = vld [vmem:[%s1 + $0x4] sm:$0xf]
      %v290 = vld [vmem:[%s1 + $0x8] sm:$0xf]
      %v291 = vld [vmem:[%s1 + $0xc] sm:$0xf]
      %v292 = vld [vmem:[%s1 + $0x10] sm:$0xf]
      %v293 = vld [vmem:[%s1 + $0x14] sm:$0xf]
      %v294 = vld [vmem:[%s1 + $0x18] sm:$0xf]
      %v295 = vld [vmem:[%s1 + $0x1c] sm:$0xf]
      %v296 = vld [vmem:[%s1 + $0x20] sm:$0xf]
      %v297 = vld [vmem:[%s1 + $0x24] sm:$0xf]
      %v298 = vld [vmem:[%s1 + $0x28] sm:$0xf]
      %v299 = vld [vmem:[%s1 + $0x2c] sm:$0xf]
      %v300 = vld [vmem:[%s1 + $0x30] sm:$0xf]
      %v301 = vld [vmem:[%s1 + $0x34] sm:$0xf]
      %v302 = vld [vmem:[%s1 + $0x38] sm:$0xf]
      %v303 = vld [vmem:[%s1 + $0x3c] sm:$0xf]
      %v304 = vld [vmem:[%s2] sm:$0x1]
      %v306 = vlaneseq
      %v307 = vshrl.u32 %v306, 7
      %v308 = vsub.s32 0, %v307
      %v309 = vrot.slane %v304, %v308
      %v319 = vunpack.c.l.b16 %v280
      %v320 = vunpack.c.l.b16 %v281
      %v321 = vunpack.c.l.b16 %v282
      %v322 = vunpack.c.l.b16 %v283
      %v323 = vunpack.c.l.b16 %v284
      %v324 = vunpack.c.l.b16 %v285
      %v325 = vunpack.c.l.b16 %v286
      %v326 = vunpack.c.l.b16 %v287
      %v327 = vpack.c.b16 %v320, %v319
      %v328 = vpack.c.b16 %v322, %v321
      %v329 = vpack.c.b16 %v324, %v323
      %v330 = vpack.c.b16 %v326, %v325
      %v351 = vunpack.c.l.b16 %v288
      %v352 = vunpack.c.l.b16 %v289
      %v353 = vunpack.c.l.b16 %v290
      %v354 = vunpack.c.l.b16 %v291
      %v355 = vunpack.c.l.b16 %v292
      %v356 = vunpack.c.l.b16 %v293
      %v357 = vunpack.c.l.b16 %v294
      %v358 = vunpack.c.l.b16 %v295
      %v359 = vunpack.c.l.b16 %v296
      %v360 = vunpack.c.l.b16 %v297
      %v361 = vunpack.c.l.b16 %v298
      %v362 = vunpack.c.l.b16 %v299
      %v363 = vunpack.c.l.b16 %v300
      %v364 = vunpack.c.l.b16 %v301
      %v365 = vunpack.c.l.b16 %v302
      %v366 = vunpack.c.l.b16 %v303
      %v367 = vpack.c.b16 %v352, %v351
      %v368 = vpack.c.b16 %v354, %v353
      %v369 = vpack.c.b16 %v356, %v355
      %v370 = vpack.c.b16 %v358, %v357
      %v371 = vpack.c.b16 %v360, %v359
      %v372 = vpack.c.b16 %v362, %v361
      %v373 = vpack.c.b16 %v364, %v363
      %v374 = vpack.c.b16 %v366, %v365
      %383 = vmatprep.subr.bf16.mxu0 0
      %384 = vmatpush1.bf16.msra.mxu0 %v367
      %385 = vmatprep.subr.bf16.mxu0 0
      %386 = vmatpush1.bf16.msra.mxu0 %v368
      %387 = vmatprep.subr.bf16.mxu0 0
      %388 = vmatpush1.bf16.msra.mxu0 %v369
      %389 = vmatprep.subr.bf16.mxu0 0
      %390 = vmatpush1.bf16.msra.mxu0 %v370
      %391 = vmatprep.subr.bf16.mxu0 0
      %392 = vmatpush1.bf16.msra.mxu0 %v371
      %393 = vmatprep.subr.bf16.mxu0 0
      %394 = vmatpush1.bf16.msra.mxu0 %v372
      %395 = vmatprep.subr.bf16.mxu0 0
      %396 = vmatpush1.bf16.msra.mxu0 %v373
      %397 = vmatprep.subr.bf16.mxu0 0
      %398 = vmatpush1.bf16.msra.mxu0 %v374
      %399 = vmatprep.subr.bf16.mxu0 0
      %400 = vmatpush1.bf16.msra.mxu0 0
      %401 = vmatprep.subr.bf16.mxu0 0
      %402 = vmatpush1.bf16.msra.mxu0 0
      %403 = vmatprep.subr.bf16.mxu0 0
      %404 = vmatpush1.bf16.msra.mxu0 0
      %405 = vmatprep.subr.bf16.mxu0 0
      %406 = vmatpush1.bf16.msra.mxu0 0
      %407 = vmatprep.subr.bf16.mxu0 0
      %408 = vmatpush1.bf16.msra.mxu0 0
      %409 = vmatprep.subr.bf16.mxu0 0
      %410 = vmatpush1.bf16.msra.mxu0 0
      %411 = vmatprep.subr.bf16.mxu0 0
      %412 = vmatpush1.bf16.msra.mxu0 0
      %413 = vmatprep.subr.bf16.mxu0 0
      %414 = vmatpush1.bf16.msra.mxu0 0
      %415 = vmatprep.mubr.bf16.mxu0 0
      %416 = vmatmul.mubr.bf16.gmra.mrb[0].mxu0 %v327
      %v417 = vpop.f32.mrb[0].mxu0
      %v418 = vadd.f32 %v309, %v417
      %v419 = vpop.f32.mrb[0].mxu0
      %v420 = vpop.f32.mrb[0].mxu0
      %v421 = vadd.f32 %v309, %v420
      %v422 = vpop.f32.mrb[0].mxu0
      %423 = vmatprep.mubr.bf16.mxu0 0
      %424 = vmatmul.mubr.bf16.gmra.mrb[0].mxu0 %v328
      %v425 = vpop.f32.mrb[0].mxu0
      %v426 = vadd.f32 %v309, %v425
      %v427 = vpop.f32.mrb[0].mxu0
      %v428 = vpop.f32.mrb[0].mxu0
      %v429 = vadd.f32 %v309, %v428
      %v430 = vpop.f32.mrb[0].mxu0
      %431 = vmatprep.mubr.bf16.mxu0 0
      %432 = vmatmul.mubr.bf16.gmra.mrb[0].mxu0 %v329
      %v433 = vpop.f32.mrb[0].mxu0
      %v434 = vadd.f32 %v309, %v433
      %v435 = vpop.f32.mrb[0].mxu0
      %v436 = vpop.f32.mrb[0].mxu0
      %v437 = vadd.f32 %v309, %v436
      %v438 = vpop.f32.mrb[0].mxu0
      %439 = vmatprep.mubr.bf16.mxu0 0
      %440 = vmatmul.mubr.bf16.gmra.mrb[0].mxu0 %v330
      %v441 = vpop.f32.mrb[0].mxu0
      %v442 = vadd.f32 %v309, %v441
      %v443 = vpop.f32.mrb[0].mxu0
      %v444 = vpop.f32.mrb[0].mxu0
      %v445 = vadd.f32 %v309, %v444
      %v446 = vpop.f32.mrb[0].mxu0
      %447 = vdwg.mxu0
      %v448 = vxor.u32 %v418, 2147483648
      %v449 = vxor.u32 %v421, 2147483648
      %v450 = vxor.u32 %v426, 2147483648
      %v451 = vxor.u32 %v429, 2147483648
      %v452 = vxor.u32 %v434, 2147483648
      %v453 = vxor.u32 %v437, 2147483648
      %v454 = vxor.u32 %v442, 2147483648
      %v455 = vxor.u32 %v445, 2147483648
      %v456 = vmul.f32 %v448, 1.442695
      %v457 = vpow.pop %v456
      %v458 = vmul.f32 %v449, 1.442695
      %v459 = vpow.pop %v458
      %v460 = vmul.f32 %v450, 1.442695
      %v461 = vpow.pop %v460
      %v462 = vmul.f32 %v451, 1.442695
      %v463 = vpow.pop %v462
      %v464 = vmul.f32 %v452, 1.442695
      %v465 = vpow.pop %v464
      %v466 = vmul.f32 %v453, 1.442695
      %v467 = vpow.pop %v466
      %v468 = vmul.f32 %v454, 1.442695
      %v469 = vpow.pop %v468
      %v470 = vmul.f32 %v455, 1.442695
      %v471 = vpow.pop %v470
      %v472 = vadd.f32 %v457, 1.0
      %v473 = vadd.f32 %v459, 1.0
      %v474 = vadd.f32 %v461, 1.0
      %v475 = vadd.f32 %v463, 1.0
      %v476 = vadd.f32 %v465, 1.0
      %v477 = vadd.f32 %v467, 1.0
      %v478 = vadd.f32 %v469, 1.0
      %v479 = vadd.f32 %v471, 1.0
      %v480 = vrcp.pop %v472
      %v481 = vmul.f32 1.0, %v480
      %v482 = vrcp.pop %v473
      %v483 = vmul.f32 1.0, %v482
      %v484 = vrcp.pop %v474
      %v485 = vmul.f32 1.0, %v484
      %v486 = vrcp.pop %v475
      %v487 = vmul.f32 1.0, %v486
      %v488 = vrcp.pop %v476
      %v489 = vmul.f32 1.0, %v488
      %v490 = vrcp.pop %v477
      %v491 = vmul.f32 1.0, %v490
      %v492 = vrcp.pop %v478
      %v493 = vmul.f32 1.0, %v492
      %v494 = vrcp.pop %v479
      %v495 = vmul.f32 1.0, %v494
      %v496 = vmul.f32 %v418, %v481
      %v497 = vmul.f32 %v421, %v483
      %v498 = vmul.f32 %v426, %v485
      %v499 = vmul.f32 %v429, %v487
      %v500 = vmul.f32 %v434, %v489
      %v501 = vmul.f32 %v437, %v491
      %v502 = vmul.f32 %v442, %v493
      %v503 = vmul.f32 %v445, %v495
      %504 = vst [vmem:[#allocation2] sm:$0xff] 0.0
      %505 = vst [vmem:[#allocation2 + $0x8] sm:$0x3] 0.0
      %s506 = scalar_lea.vmem [#allocation2], 144
      %507 = vst [vmem:[%s506] sm:$0xff] 0.0
      %508 = vst [vmem:[%s506 + $0x8] sm:$0x3] 0.0
      %509 = vst [vmem:[#allocation2] sm:$0x1] 0.0
      %510 = vst [vmem:[#allocation2 + $0x10] sm:$0x1] 0.0
      %511 = vst [vmem:[#allocation2 + $0x20] sm:$0x1] 0.0
      %512 = vst [vmem:[#allocation2 + $0x30] sm:$0x1] 0.0
      %513 = vst [vmem:[#allocation2 + $0x40] sm:$0x1] 0.0
      %514 = vst [vmem:[#allocation2 + $0x50] sm:$0x1] 0.0
      %515 = vst [vmem:[#allocation2 + $0x60] sm:$0x1] 0.0
      %516 = vst [vmem:[#allocation2 + $0x70] sm:$0x1] 0.0
      %517 = vst [vmem:[#allocation2 + $0x80] sm:$0x1] 0.0
      %518 = vst [vmem:[#allocation2 + $0x90] sm:$0x1] 0.0
      %519 = vst [vmem:[#allocation2 + $0x9] sm:$0x1] 0.0
      %520 = vst [vmem:[#allocation2 + $0x19] sm:$0x1] 0.0
      %521 = vst [vmem:[#allocation2 + $0x29] sm:$0x1] 0.0
      %522 = vst [vmem:[#allocation2 + $0x39] sm:$0x1] 0.0
      %523 = vst [vmem:[#allocation2 + $0x49] sm:$0x1] 0.0
      %524 = vst [vmem:[#allocation2 + $0x59] sm:$0x1] 0.0
      %525 = vst [vmem:[#allocation2 + $0x69] sm:$0x1] 0.0
      %526 = vst [vmem:[#allocation2 + $0x79] sm:$0x1] 0.0
      %527 = vst [vmem:[#allocation2 + $0x89] sm:$0x1] 0.0
      %528 = vst [vmem:[#allocation2 + $0x99] sm:$0x1] 0.0
      %s529 = scalar_lea.vmem [#allocation2], 16
      %530 = vst [vmem:[%s529 + $0x1] sm:$0xff] %v496
      %531 = vst [vmem:[%s529 + $0x11] sm:$0xff] %v497
      %532 = vst [vmem:[%s529 + $0x21] sm:$0xff] %v498
      %533 = vst [vmem:[%s529 + $0x31] sm:$0xff] %v499
      %534 = vst [vmem:[%s529 + $0x41] sm:$0xff] %v500
      %535 = vst [vmem:[%s529 + $0x51] sm:$0xff] %v501
      %536 = vst [vmem:[%s529 + $0x61] sm:$0xff] %v502
      %537 = vst [vmem:[%s529 + $0x71] sm:$0xff] %v503
      %v538 = vld [vmem:[#allocation2] sm:$0xff]
      %v539 = vld [vmem:[#allocation2 + $0x10] sm:$0xff]
      %v540 = vld [vmem:[#allocation2 + $0x20] sm:$0xff]
      %v541 = vld [vmem:[#allocation2 + $0x30] sm:$0xff]
      %v542 = vld [vmem:[#allocation2 + $0x40] sm:$0xff]
      %v543 = vld [vmem:[#allocation2 + $0x50] sm:$0xff]
      %v544 = vld [vmem:[#allocation2 + $0x60] sm:$0xff]
      %v545 = vld [vmem:[#allocation2 + $0x70] sm:$0xff]
      %v546 = vld [vmem:[#allocation2 + $0x1] sm:$0xff]
      %v547 = vld [vmem:[#allocation2 + $0x11] sm:$0xff]
      %v548 = vld [vmem:[#allocation2 + $0x21] sm:$0xff]
      %v549 = vld [vmem:[#allocation2 + $0x31] sm:$0xff]
      %v550 = vld [vmem:[#allocation2 + $0x41] sm:$0xff]
      %v551 = vld [vmem:[#allocation2 + $0x51] sm:$0xff]
      %v552 = vld [vmem:[#allocation2 + $0x61] sm:$0xff]
      %v553 = vld [vmem:[#allocation2 + $0x71] sm:$0xff]
      %v554 = vpack.c.bf16 %v539, %v538
      %v555 = vpack.c.bf16 %v547, %v546
      %v556 = vpack.c.bf16 %v541, %v540
      %v557 = vpack.c.bf16 %v549, %v548
      %v558 = vpack.c.bf16 %v543, %v542
      %v559 = vpack.c.bf16 %v551, %v550
      %v560 = vpack.c.bf16 %v545, %v544
      %v561 = vpack.c.bf16 %v553, %v552
      %v562 = vld [vmem:[%s3] sm:$0xf]
      %v563 = vld [vmem:[%s3 + $0x4] sm:$0xf]
      %v564 = vld [vmem:[%s3 + $0x8] sm:$0xf]
      %v565 = vld [vmem:[%s3 + $0xc] sm:$0xf]
      %v566 = vld [vmem:[%s3 + $0x10] sm:$0xf]
      %v567 = vld [vmem:[%s3 + $0x14] sm:$0xf]
      %v568 = vld [vmem:[%s3 + $0x18] sm:$0xf]
      %v569 = vld [vmem:[%s3 + $0x1c] sm:$0xf]
      %v570 = vld [vmem:[%s3 + $0x20] sm:$0xf]
      %v571 = vld [vmem:[%s3 + $0x24] sm:$0xf]
      %v572 = vld [vmem:[%s3 + $0x28] sm:$0xf]
      %v573 = vld [vmem:[%s3 + $0x2c] sm:$0xf]
      %v574 = vld [vmem:[%s3 + $0x30] sm:$0xf]
      %v575 = vld [vmem:[%s3 + $0x34] sm:$0xf]
      %v576 = vld [vmem:[%s3 + $0x38] sm:$0xf]
      %v577 = vld [vmem:[%s3 + $0x3c] sm:$0xf]
      %v578 = vld [vmem:[%s3 + $0x40] sm:$0xf]
      %v579 = vld [vmem:[%s3 + $0x44] sm:$0xf]
      %v580 = vld [vmem:[%s3 + $0x48] sm:$0xf]
      %v581 = vld [vmem:[%s3 + $0x4c] sm:$0xf]
      %v582 = vld [vmem:[%s3 + $0x50] sm:$0xf]
      %v583 = vld [vmem:[%s3 + $0x54] sm:$0xf]
      %v584 = vld [vmem:[%s3 + $0x58] sm:$0xf]
      %v585 = vld [vmem:[%s3 + $0x5c] sm:$0xf]
      %v586 = vld [vmem:[%s3 + $0x60] sm:$0xf]
      %v587 = vld [vmem:[%s3 + $0x64] sm:$0xf]
      %v588 = vld [vmem:[%s3 + $0x68] sm:$0xf]
      %v589 = vld [vmem:[%s3 + $0x6c] sm:$0xf]
      %v590 = vld [vmem:[%s3 + $0x70] sm:$0xf]
      %v591 = vld [vmem:[%s3 + $0x74] sm:$0xf]
      %v592 = vld [vmem:[%s3 + $0x78] sm:$0xf]
      %v593 = vld [vmem:[%s3 + $0x7c] sm:$0xf]
      %v594 = vld [vmem:[#allocation2 + $0x2] sm:$0xff]
      %v595 = vld [vmem:[#allocation2 + $0x12] sm:$0xff]
      %v596 = vld [vmem:[#allocation2 + $0x22] sm:$0xff]
      %v597 = vld [vmem:[#allocation2 + $0x32] sm:$0xff]
      %v598 = vld [vmem:[#allocation2 + $0x42] sm:$0xff]
      %v599 = vld [vmem:[#allocation2 + $0x52] sm:$0xff]
      %v600 = vld [vmem:[#allocation2 + $0x62] sm:$0xff]
      %v601 = vld [vmem:[#allocation2 + $0x72] sm:$0xff]
      %v602 = vld [vmem:[%s529] sm:$0xff]
      %v603 = vld [vmem:[%s529 + $0x10] sm:$0xff]
      %v604 = vld [vmem:[%s529 + $0x20] sm:$0xff]
      %v605 = vld [vmem:[%s529 + $0x30] sm:$0xff]
      %v606 = vld [vmem:[%s529 + $0x40] sm:$0xff]
      %v607 = vld [vmem:[%s529 + $0x50] sm:$0xff]
      %v608 = vld [vmem:[%s529 + $0x60] sm:$0xff]
      %v609 = vld [vmem:[%s529 + $0x70] sm:$0xff]
      %v610 = vpack.c.bf16 %v595, %v594
      %v611 = vpack.c.bf16 %v603, %v602
      %v612 = vpack.c.bf16 %v597, %v596
      %v613 = vpack.c.bf16 %v605, %v604
      %v614 = vpack.c.bf16 %v599, %v598
      %v615 = vpack.c.bf16 %v607, %v606
      %v616 = vpack.c.bf16 %v601, %v600
      %v617 = vpack.c.bf16 %v609, %v608
      %v618 = vld [vmem:[%s3 + $0x80] sm:$0xf]
      %v619 = vld [vmem:[%s3 + $0x84] sm:$0xf]
      %v620 = vld [vmem:[%s3 + $0x88] sm:$0xf]
      %v621 = vld [vmem:[%s3 + $0x8c] sm:$0xf]
      %v622 = vld [vmem:[%s3 + $0x90] sm:$0xf]
      %v623 = vld [vmem:[%s3 + $0x94] sm:$0xf]
      %v624 = vld [vmem:[%s3 + $0x98] sm:$0xf]
      %v625 = vld [vmem:[%s3 + $0x9c] sm:$0xf]
      %v626 = vld [vmem:[%s3 + $0xa0] sm:$0xf]
      %v627 = vld [vmem:[%s3 + $0xa4] sm:$0xf]
      %v628 = vld [vmem:[%s3 + $0xa8] sm:$0xf]
      %v629 = vld [vmem:[%s3 + $0xac] sm:$0xf]
      %v630 = vld [vmem:[%s3 + $0xb0] sm:$0xf]
      %v631 = vld [vmem:[%s3 + $0xb4] sm:$0xf]
      %v632 = vld [vmem:[%s3 + $0xb8] sm:$0xf]
      %v633 = vld [vmem:[%s3 + $0xbc] sm:$0xf]
      %v634 = vld [vmem:[%s3 + $0xc0] sm:$0xf]
      %v635 = vld [vmem:[%s3 + $0xc4] sm:$0xf]
      %v636 = vld [vmem:[%s3 + $0xc8] sm:$0xf]
      %v637 = vld [vmem:[%s3 + $0xcc] sm:$0xf]
      %v638 = vld [vmem:[%s3 + $0xd0] sm:$0xf]
      %v639 = vld [vmem:[%s3 + $0xd4] sm:$0xf]
      %v640 = vld [vmem:[%s3 + $0xd8] sm:$0xf]
      %v641 = vld [vmem:[%s3 + $0xdc] sm:$0xf]
      %v642 = vld [vmem:[%s3 + $0xe0] sm:$0xf]
      %v643 = vld [vmem:[%s3 + $0xe4] sm:$0xf]
      %v644 = vld [vmem:[%s3 + $0xe8] sm:$0xf]
      %v645 = vld [vmem:[%s3 + $0xec] sm:$0xf]
      %v646 = vld [vmem:[%s3 + $0xf0] sm:$0xf]
      %v647 = vld [vmem:[%s3 + $0xf4] sm:$0xf]
      %v648 = vld [vmem:[%s3 + $0xf8] sm:$0xf]
      %v649 = vld [vmem:[%s3 + $0xfc] sm:$0xf]
      %v682 = vunpack.c.l.b16 %v618
      %v683 = vunpack.c.l.b16 %v619
      %v684 = vunpack.c.l.b16 %v620
      %v685 = vunpack.c.l.b16 %v621
      %v686 = vunpack.c.l.b16 %v622
      %v687 = vunpack.c.l.b16 %v623
      %v688 = vunpack.c.l.b16 %v624
      %v689 = vunpack.c.l.b16 %v625
      %v690 = vunpack.c.l.b16 %v626
      %v691 = vunpack.c.l.b16 %v627
      %v692 = vunpack.c.l.b16 %v628
      %v693 = vunpack.c.l.b16 %v629
      %v694 = vunpack.c.l.b16 %v630
      %v695 = vunpack.c.l.b16 %v631
      %v696 = vunpack.c.l.b16 %v632
      %v697 = vunpack.c.l.b16 %v633
      %v698 = vunpack.c.l.b16 %v634
      %v699 = vunpack.c.l.b16 %v635
      %v700 = vunpack.c.l.b16 %v636
      %v701 = vunpack.c.l.b16 %v637
      %v702 = vunpack.c.l.b16 %v638
      %v703 = vunpack.c.l.b16 %v639
      %v704 = vunpack.c.l.b16 %v640
      %v705 = vunpack.c.l.b16 %v641
      %v706 = vunpack.c.l.b16 %v642
      %v707 = vunpack.c.l.b16 %v643
      %v708 = vunpack.c.l.b16 %v644
      %v709 = vunpack.c.l.b16 %v645
      %v710 = vunpack.c.l.b16 %v646
      %v711 = vunpack.c.l.b16 %v647
      %v712 = vunpack.c.l.b16 %v648
      %v713 = vunpack.c.l.b16 %v649
      %v714 = vpack.c.b16 %v683, %v682
      %v715 = vpack.c.b16 %v685, %v684
      %v716 = vpack.c.b16 %v687, %v686
      %v717 = vpack.c.b16 %v689, %v688
      %v718 = vpack.c.b16 %v691, %v690
      %v719 = vpack.c.b16 %v693, %v692
      %v720 = vpack.c.b16 %v695, %v694
      %v721 = vpack.c.b16 %v697, %v696
      %v722 = vpack.c.b16 %v699, %v698
      %v723 = vpack.c.b16 %v701, %v700
      %v724 = vpack.c.b16 %v703, %v702
      %v725 = vpack.c.b16 %v705, %v704
      %v726 = vpack.c.b16 %v707, %v706
      %v727 = vpack.c.b16 %v709, %v708
      %v728 = vpack.c.b16 %v711, %v710
      %v729 = vpack.c.b16 %v713, %v712
      %746 = vmatprep.subr.bf16.mxu0 0
      %747 = vmatpush1.bf16.msra.mxu0 %v714
      %748 = vmatprep.subr.bf16.mxu0 0
      %749 = vmatpush1.bf16.msra.mxu0 %v715
      %750 = vmatprep.subr.bf16.mxu0 0
      %751 = vmatpush1.bf16.msra.mxu0 %v716
      %752 = vmatprep.subr.bf16.mxu0 0
      %753 = vmatpush1.bf16.msra.mxu0 %v717
      %754 = vmatprep.subr.bf16.mxu0 0
      %755 = vmatpush1.bf16.msra.mxu0 %v718
      %756 = vmatprep.subr.bf16.mxu0 0
      %757 = vmatpush1.bf16.msra.mxu0 %v719
      %758 = vmatprep.subr.bf16.mxu0 0
      %759 = vmatpush1.bf16.msra.mxu0 %v720
      %760 = vmatprep.subr.bf16.mxu0 0
      %761 = vmatpush1.bf16.msra.mxu0 %v721
      %762 = vmatprep.subr.bf16.mxu0 0
      %763 = vmatpush1.bf16.msra.mxu0 %v722
      %764 = vmatprep.subr.bf16.mxu0 0
      %765 = vmatpush1.bf16.msra.mxu0 %v723
      %766 = vmatprep.subr.bf16.mxu0 0
      %767 = vmatpush1.bf16.msra.mxu0 %v724
      %768 = vmatprep.subr.bf16.mxu0 0
      %769 = vmatpush1.bf16.msra.mxu0 %v725
      %770 = vmatprep.subr.bf16.mxu0 0
      %771 = vmatpush1.bf16.msra.mxu0 %v726
      %772 = vmatprep.subr.bf16.mxu0 0
      %773 = vmatpush1.bf16.msra.mxu0 %v727
      %774 = vmatprep.subr.bf16.mxu0 0
      %775 = vmatpush1.bf16.msra.mxu0 %v728
      %776 = vmatprep.subr.bf16.mxu0 0
      %777 = vmatpush1.bf16.msra.mxu0 %v729
      %778 = vmatprep.mubr.bf16.mxu0 %v611
      %779 = vmatmul.mubr.bf16.gmra.mrb[0].mxu0 %v610
      %v780 = vpop.f32.mrb[0].mxu0
      %v781 = vadd.f32 0.0, %v780
      %v782 = vpop.f32.mrb[0].mxu0
      %v783 = vpop.f32.mrb[0].mxu0
      %v784 = vadd.f32 0.0, %v783
      %v785 = vpop.f32.mrb[0].mxu0
      %786 = vmatprep.mubr.bf16.mxu0 %v613
      %787 = vmatmul.mubr.bf16.gmra.mrb[0].mxu0 %v612
      %v788 = vpop.f32.mrb[0].mxu0
      %v789 = vadd.f32 0.0, %v788
      %v790 = vpop.f32.mrb[0].mxu0
      %v791 = vpop.f32.mrb[0].mxu0
      %v792 = vadd.f32 0.0, %v791
      %v793 = vpop.f32.mrb[0].mxu0
      %794 = vmatprep.mubr.bf16.mxu0 %v615
      %795 = vmatmul.mubr.bf16.gmra.mrb[0].mxu0 %v614
      %v796 = vpop.f32.mrb[0].mxu0
      %v797 = vadd.f32 0.0, %v796
      %v798 = vpop.f32.mrb[0].mxu0
      %v799 = vpop.f32.mrb[0].mxu0
      %v800 = vadd.f32 0.0, %v799
      %v801 = vpop.f32.mrb[0].mxu0
      %802 = vmatprep.mubr.bf16.mxu0 %v617
      %803 = vmatmul.mubr.bf16.gmra.mrb[0].mxu0 %v616
      %v804 = vpop.f32.mrb[0].mxu0
      %v805 = vadd.f32 0.0, %v804
      %v806 = vpop.f32.mrb[0].mxu0
      %v807 = vpop.f32.mrb[0].mxu0
      %v808 = vadd.f32 0.0, %v807
      %v809 = vpop.f32.mrb[0].mxu0
      %810 = vdwg.mxu0
      %v843 = vunpack.c.l.b16 %v562
      %v844 = vunpack.c.l.b16 %v563
      %v845 = vunpack.c.l.b16 %v564
      %v846 = vunpack.c.l.b16 %v565
      %v847 = vunpack.c.l.b16 %v566
      %v848 = vunpack.c.l.b16 %v567
      %v849 = vunpack.c.l.b16 %v568
      %v850 = vunpack.c.l.b16 %v569
      %v851 = vunpack.c.l.b16 %v570
      %v852 = vunpack.c.l.b16 %v571
      %v853 = vunpack.c.l.b16 %v572
      %v854 = vunpack.c.l.b16 %v573
      %v855 = vunpack.c.l.b16 %v574
      %v856 = vunpack.c.l.b16 %v575
      %v857 = vunpack.c.l.b16 %v576
      %v858 = vunpack.c.l.b16 %v577
      %v859 = vunpack.c.l.b16 %v578
      %v860 = vunpack.c.l.b16 %v579
      %v861 = vunpack.c.l.b16 %v580
      %v862 = vunpack.c.l.b16 %v581
      %v863 = vunpack.c.l.b16 %v582
      %v864 = vunpack.c.l.b16 %v583
      %v865 = vunpack.c.l.b16 %v584
      %v866 = vunpack.c.l.b16 %v585
      %v867 = vunpack.c.l.b16 %v586
      %v868 = vunpack.c.l.b16 %v587
      %v869 = vunpack.c.l.b16 %v588
      %v870 = vunpack.c.l.b16 %v589
      %v871 = vunpack.c.l.b16 %v590
      %v872 = vunpack.c.l.b16 %v591
      %v873 = vunpack.c.l.b16 %v592
      %v874 = vunpack.c.l.b16 %v593
      %v875 = vpack.c.b16 %v844, %v843
      %v876 = vpack.c.b16 %v846, %v845
      %v877 = vpack.c.b16 %v848, %v847
      %v878 = vpack.c.b16 %v850, %v849
      %v879 = vpack.c.b16 %v852, %v851
      %v880 = vpack.c.b16 %v854, %v853
      %v881 = vpack.c.b16 %v856, %v855
      %v882 = vpack.c.b16 %v858, %v857
      %v883 = vpack.c.b16 %v860, %v859
      %v884 = vpack.c.b16 %v862, %v861
      %v885 = vpack.c.b16 %v864, %v863
      %v886 = vpack.c.b16 %v866, %v865
      %v887 = vpack.c.b16 %v868, %v867
      %v888 = vpack.c.b16 %v870, %v869
      %v889 = vpack.c.b16 %v872, %v871
      %v890 = vpack.c.b16 %v874, %v873
      %907 = vmatprep.subr.bf16.mxu0 0
      %908 = vmatpush1.bf16.msra.mxu0 %v875
      %909 = vmatprep.subr.bf16.mxu0 0
      %910 = vmatpush1.bf16.msra.mxu0 %v876
      %911 = vmatprep.subr.bf16.mxu0 0
      %912 = vmatpush1.bf16.msra.mxu0 %v877
      %913 = vmatprep.subr.bf16.mxu0 0
      %914 = vmatpush1.bf16.msra.mxu0 %v878
      %915 = vmatprep.subr.bf16.mxu0 0
      %916 = vmatpush1.bf16.msra.mxu0 %v879
      %917 = vmatprep.subr.bf16.mxu0 0
      %918 = vmatpush1.bf16.msra.mxu0 %v880
      %919 = vmatprep.subr.bf16.mxu0 0
      %920 = vmatpush1.bf16.msra.mxu0 %v881
      %921 = vmatprep.subr.bf16.mxu0 0
      %922 = vmatpush1.bf16.msra.mxu0 %v882
      %923 = vmatprep.subr.bf16.mxu0 0
      %924 = vmatpush1.bf16.msra.mxu0 %v883
      %925 = vmatprep.subr.bf16.mxu0 0
      %926 = vmatpush1.bf16.msra.mxu0 %v884
      %927 = vmatprep.subr.bf16.mxu0 0
      %928 = vmatpush1.bf16.msra.mxu0 %v885
      %929 = vmatprep.subr.bf16.mxu0 0
      %930 = vmatpush1.bf16.msra.mxu0 %v886
      %931 = vmatprep.subr.bf16.mxu0 0
      %932 = vmatpush1.bf16.msra.mxu0 %v887
      %933 = vmatprep.subr.bf16.mxu0 0
      %934 = vmatpush1.bf16.msra.mxu0 %v888
      %935 = vmatprep.subr.bf16.mxu0 0
      %936 = vmatpush1.bf16.msra.mxu0 %v889
      %937 = vmatprep.subr.bf16.mxu0 0
      %938 = vmatpush1.bf16.msra.mxu0 %v890
      %939 = vmatprep.mubr.bf16.mxu0 %v555
      %940 = vmatmul.mubr.bf16.gmra.mrb[0].mxu0 %v554
      %v941 = vpop.f32.mrb[0].mxu0
      %v942 = vadd.f32 %v781, %v941
      %v943 = vpop.f32.mrb[0].mxu0
      %v944 = vpop.f32.mrb[0].mxu0
      %v945 = vadd.f32 %v784, %v944
      %v946 = vpop.f32.mrb[0].mxu0
      %947 = vmatprep.mubr.bf16.mxu0 %v557
      %948 = vmatmul.mubr.bf16.gmra.mrb[0].mxu0 %v556
      %v949 = vpop.f32.mrb[0].mxu0
      %v950 = vadd.f32 %v789, %v949
      %v951 = vpop.f32.mrb[0].mxu0
      %v952 = vpop.f32.mrb[0].mxu0
      %v953 = vadd.f32 %v792, %v952
      %v954 = vpop.f32.mrb[0].mxu0
      %955 = vmatprep.mubr.bf16.mxu0 %v559
      %956 = vmatmul.mubr.bf16.gmra.mrb[0].mxu0 %v558
      %v957 = vpop.f32.mrb[0].mxu0
      %v958 = vadd.f32 %v797, %v957
      %v959 = vpop.f32.mrb[0].mxu0
      %v960 = vpop.f32.mrb[0].mxu0
      %v961 = vadd.f32 %v800, %v960
      %v962 = vpop.f32.mrb[0].mxu0
      %963 = vmatprep.mubr.bf16.mxu0 %v561
      %964 = vmatmul.mubr.bf16.gmra.mrb[0].mxu0 %v560
      %v965 = vpop.f32.mrb[0].mxu0
      %v966 = vadd.f32 %v805, %v965
      %v967 = vpop.f32.mrb[0].mxu0
      %v968 = vpop.f32.mrb[0].mxu0
      %v969 = vadd.f32 %v808, %v968
      %v970 = vpop.f32.mrb[0].mxu0
      %971 = vdwg.mxu0
      %v972 = vld [vmem:[%s529 + $0x1] sm:$0xff]
      %v973 = vld [vmem:[%s529 + $0x11] sm:$0xff]
      %v974 = vld [vmem:[%s529 + $0x21] sm:$0xff]
      %v975 = vld [vmem:[%s529 + $0x31] sm:$0xff]
      %v976 = vld [vmem:[%s529 + $0x41] sm:$0xff]
      %v977 = vld [vmem:[%s529 + $0x51] sm:$0xff]
      %v978 = vld [vmem:[%s529 + $0x61] sm:$0xff]
      %v979 = vld [vmem:[%s529 + $0x71] sm:$0xff]
      %v980 = vld [vmem:[%s529 + $0x2] sm:$0xff]
      %v981 = vld [vmem:[%s529 + $0x12] sm:$0xff]
      %v982 = vld [vmem:[%s529 + $0x22] sm:$0xff]
      %v983 = vld [vmem:[%s529 + $0x32] sm:$0xff]
      %v984 = vld [vmem:[%s529 + $0x42] sm:$0xff]
      %v985 = vld [vmem:[%s529 + $0x52] sm:$0xff]
      %v986 = vld [vmem:[%s529 + $0x62] sm:$0xff]
      %v987 = vld [vmem:[%s529 + $0x72] sm:$0xff]
      %v988 = vpack.c.bf16 %v973, %v972
      %v989 = vpack.c.bf16 %v981, %v980
      %v990 = vpack.c.bf16 %v975, %v974
      %v991 = vpack.c.bf16 %v983, %v982
      %v992 = vpack.c.bf16 %v977, %v976
      %v993 = vpack.c.bf16 %v985, %v984
      %v994 = vpack.c.bf16 %v979, %v978
      %v995 = vpack.c.bf16 %v987, %v986
      %v996 = vld [vmem:[%s3 + $0x100] sm:$0xf]
      %v997 = vld [vmem:[%s3 + $0x104] sm:$0xf]
      %v998 = vld [vmem:[%s3 + $0x108] sm:$0xf]
      %v999 = vld [vmem:[%s3 + $0x10c] sm:$0xf]
      %v1000 = vld [vmem:[%s3 + $0x110] sm:$0xf]
      %v1001 = vld [vmem:[%s3 + $0x114] sm:$0xf]
      %v1002 = vld [vmem:[%s3 + $0x118] sm:$0xf]
      %v1003 = vld [vmem:[%s3 + $0x11c] sm:$0xf]
      %v1004 = vld [vmem:[%s3 + $0x120] sm:$0xf]
      %v1005 = vld [vmem:[%s3 + $0x124] sm:$0xf]
      %v1006 = vld [vmem:[%s3 + $0x128] sm:$0xf]
      %v1007 = vld [vmem:[%s3 + $0x12c] sm:$0xf]
      %v1008 = vld [vmem:[%s3 + $0x130] sm:$0xf]
      %v1009 = vld [vmem:[%s3 + $0x134] sm:$0xf]
      %v1010 = vld [vmem:[%s3 + $0x138] sm:$0xf]
      %v1011 = vld [vmem:[%s3 + $0x13c] sm:$0xf]
      %v1012 = vld [vmem:[%s3 + $0x140] sm:$0xf]
      %v1013 = vld [vmem:[%s3 + $0x144] sm:$0xf]
      %v1014 = vld [vmem:[%s3 + $0x148] sm:$0xf]
      %v1015 = vld [vmem:[%s3 + $0x14c] sm:$0xf]
      %v1016 = vld [vmem:[%s3 + $0x150] sm:$0xf]
      %v1017 = vld [vmem:[%s3 + $0x154] sm:$0xf]
      %v1018 = vld [vmem:[%s3 + $0x158] sm:$0xf]
      %v1019 = vld [vmem:[%s3 + $0x15c] sm:$0xf]
      %v1020 = vld [vmem:[%s3 + $0x160] sm:$0xf]
      %v1021 = vld [vmem:[%s3 + $0x164] sm:$0xf]
      %v1022 = vld [vmem:[%s3 + $0x168] sm:$0xf]
      %v1023 = vld [vmem:[%s3 + $0x16c] sm:$0xf]
      %v1024 = vld [vmem:[%s3 + $0x170] sm:$0xf]
      %v1025 = vld [vmem:[%s3 + $0x174] sm:$0xf]
      %v1026 = vld [vmem:[%s3 + $0x178] sm:$0xf]
      %v1027 = vld [vmem:[%s3 + $0x17c] sm:$0xf]
      %v1060 = vunpack.c.l.b16 %v996
      %v1061 = vunpack.c.l.b16 %v997
      %v1062 = vunpack.c.l.b16 %v998
      %v1063 = vunpack.c.l.b16 %v999
      %v1064 = vunpack.c.l.b16 %v1000
      %v1065 = vunpack.c.l.b16 %v1001
      %v1066 = vunpack.c.l.b16 %v1002
      %v1067 = vunpack.c.l.b16 %v1003
      %v1068 = vunpack.c.l.b16 %v1004
      %v1069 = vunpack.c.l.b16 %v1005
      %v1070 = vunpack.c.l.b16 %v1006
      %v1071 = vunpack.c.l.b16 %v1007
      %v1072 = vunpack.c.l.b16 %v1008
      %v1073 = vunpack.c.l.b16 %v1009
      %v1074 = vunpack.c.l.b16 %v1010
      %v1075 = vunpack.c.l.b16 %v1011
      %v1076 = vunpack.c.l.b16 %v1012
      %v1077 = vunpack.c.l.b16 %v1013
      %v1078 = vunpack.c.l.b16 %v1014
      %v1079 = vunpack.c.l.b16 %v1015
      %v1080 = vunpack.c.l.b16 %v1016
      %v1081 = vunpack.c.l.b16 %v1017
      %v1082 = vunpack.c.l.b16 %v1018
      %v1083 = vunpack.c.l.b16 %v1019
      %v1084 = vunpack.c.l.b16 %v1020
      %v1085 = vunpack.c.l.b16 %v1021
      %v1086 = vunpack.c.l.b16 %v1022
      %v1087 = vunpack.c.l.b16 %v1023
      %v1088 = vunpack.c.l.b16 %v1024
      %v1089 = vunpack.c.l.b16 %v1025
      %v1090 = vunpack.c.l.b16 %v1026
      %v1091 = vunpack.c.l.b16 %v1027
      %v1092 = vpack.c.b16 %v1061, %v1060
      %v1093 = vpack.c.b16 %v1063, %v1062
      %v1094 = vpack.c.b16 %v1065, %v1064
      %v1095 = vpack.c.b16 %v1067, %v1066
      %v1096 = vpack.c.b16 %v1069, %v1068
      %v1097 = vpack.c.b16 %v1071, %v1070
      %v1098 = vpack.c.b16 %v1073, %v1072
      %v1099 = vpack.c.b16 %v1075, %v1074
      %v1100 = vpack.c.b16 %v1077, %v1076
      %v1101 = vpack.c.b16 %v1079, %v1078
      %v1102 = vpack.c.b16 %v1081, %v1080
      %v1103 = vpack.c.b16 %v1083, %v1082
      %v1104 = vpack.c.b16 %v1085, %v1084
      %v1105 = vpack.c.b16 %v1087, %v1086
      %v1106 = vpack.c.b16 %v1089, %v1088
      %v1107 = vpack.c.b16 %v1091, %v1090
      %1124 = vmatprep.subr.bf16.mxu0 0
      %1125 = vmatpush1.bf16.msra.mxu0 %v1092
      %1126 = vmatprep.subr.bf16.mxu0 0
      %1127 = vmatpush1.bf16.msra.mxu0 %v1093
      %1128 = vmatprep.subr.bf16.mxu0 0
      %1129 = vmatpush1.bf16.msra.mxu0 %v1094
      %1130 = vmatprep.subr.bf16.mxu0 0
      %1131 = vmatpush1.bf16.msra.mxu0 %v1095
      %1132 = vmatprep.subr.bf16.mxu0 0
      %1133 = vmatpush1.bf16.msra.mxu0 %v1096
      %1134 = vmatprep.subr.bf16.mxu0 0
      %1135 = vmatpush1.bf16.msra.mxu0 %v1097
      %1136 = vmatprep.subr.bf16.mxu0 0
      %1137 = vmatpush1.bf16.msra.mxu0 %v1098
      %1138 = vmatprep.subr.bf16.mxu0 0
      %1139 = vmatpush1.bf16.msra.mxu0 %v1099
      %1140 = vmatprep.subr.bf16.mxu0 0
      %1141 = vmatpush1.bf16.msra.mxu0 %v1100
      %1142 = vmatprep.subr.bf16.mxu0 0
      %1143 = vmatpush1.bf16.msra.mxu0 %v1101
      %1144 = vmatprep.subr.bf16.mxu0 0
      %1145 = vmatpush1.bf16.msra.mxu0 %v1102
      %1146 = vmatprep.subr.bf16.mxu0 0
      %1147 = vmatpush1.bf16.msra.mxu0 %v1103
      %1148 = vmatprep.subr.bf16.mxu0 0
      %1149 = vmatpush1.bf16.msra.mxu0 %v1104
      %1150 = vmatprep.subr.bf16.mxu0 0
      %1151 = vmatpush1.bf16.msra.mxu0 %v1105
      %1152 = vmatprep.subr.bf16.mxu0 0
      %1153 = vmatpush1.bf16.msra.mxu0 %v1106
      %1154 = vmatprep.subr.bf16.mxu0 0
      %1155 = vmatpush1.bf16.msra.mxu0 %v1107
      %1156 = vmatprep.mubr.bf16.mxu0 %v989
      %1157 = vmatmul.mubr.bf16.gmra.mrb[0].mxu0 %v988
      %v1158 = vpop.f32.mrb[0].mxu0
      %v1159 = vadd.f32 0.0, %v1158
      %v1160 = vpop.f32.mrb[0].mxu0
      %v1161 = vpop.f32.mrb[0].mxu0
      %v1162 = vadd.f32 0.0, %v1161
      %v1163 = vpop.f32.mrb[0].mxu0
      %1164 = vmatprep.mubr.bf16.mxu0 %v991
      %1165 = vmatmul.mubr.bf16.gmra.mrb[0].mxu0 %v990
      %v1166 = vpop.f32.mrb[0].mxu0
      %v1167 = vadd.f32 0.0, %v1166
      %v1168 = vpop.f32.mrb[0].mxu0
      %v1169 = vpop.f32.mrb[0].mxu0
      %v1170 = vadd.f32 0.0, %v1169
      %v1171 = vpop.f32.mrb[0].mxu0
      %1172 = vmatprep.mubr.bf16.mxu0 %v993
      %1173 = vmatmul.mubr.bf16.gmra.mrb[0].mxu0 %v992
      %v1174 = vpop.f32.mrb[0].mxu0
      %v1175 = vadd.f32 0.0, %v1174
      %v1176 = vpop.f32.mrb[0].mxu0
      %v1177 = vpop.f32.mrb[0].mxu0
      %v1178 = vadd.f32 0.0, %v1177
      %v1179 = vpop.f32.mrb[0].mxu0
      %1180 = vmatprep.mubr.bf16.mxu0 %v995
      %1181 = vmatmul.mubr.bf16.gmra.mrb[0].mxu0 %v994
      %v1182 = vpop.f32.mrb[0].mxu0
      %v1183 = vadd.f32 0.0, %v1182
      %v1184 = vpop.f32.mrb[0].mxu0
      %v1185 = vpop.f32.mrb[0].mxu0
      %v1186 = vadd.f32 0.0, %v1185
      %v1187 = vpop.f32.mrb[0].mxu0
      %1188 = vdwg.mxu0
      %v1189 = vadd.f32 %v942, %v1159
      %v1190 = vadd.f32 %v945, %v1162
      %v1191 = vadd.f32 %v950, %v1167
      %v1192 = vadd.f32 %v953, %v1170
      %v1193 = vadd.f32 %v958, %v1175
      %v1194 = vadd.f32 %v961, %v1178
      %v1195 = vadd.f32 %v966, %v1183
      %v1196 = vadd.f32 %v969, %v1186
      %s1197 = scalar_lea.vmem [#allocation2], 32
      %v1198 = vld [vmem:[%s1197] sm:$0xff]
      %v1199 = vld [vmem:[%s1197 + $0x10] sm:$0xff]
      %v1200 = vld [vmem:[%s1197 + $0x20] sm:$0xff]
      %v1201 = vld [vmem:[%s1197 + $0x30] sm:$0xff]
      %v1202 = vld [vmem:[%s1197 + $0x40] sm:$0xff]
      %v1203 = vld [vmem:[%s1197 + $0x50] sm:$0xff]
      %v1204 = vld [vmem:[%s1197 + $0x60] sm:$0xff]
      %v1205 = vld [vmem:[%s1197 + $0x70] sm:$0xff]
      %v1206 = vld [vmem:[%s1197 + $0x1] sm:$0xff]
      %v1207 = vld [vmem:[%s1197 + $0x11] sm:$0xff]
      %v1208 = vld [vmem:[%s1197 + $0x21] sm:$0xff]
      %v1209 = vld [vmem:[%s1197 + $0x31] sm:$0xff]
      %v1210 = vld [vmem:[%s1197 + $0x41] sm:$0xff]
      %v1211 = vld [vmem:[%s1197 + $0x51] sm:$0xff]
      %v1212 = vld [vmem:[%s1197 + $0x61] sm:$0xff]
      %v1213 = vld [vmem:[%s1197 + $0x71] sm:$0xff]
      %v1214 = vpack.c.bf16 %v1199, %v1198
      %v1215 = vpack.c.bf16 %v1207, %v1206
      %v1216 = vpack.c.bf16 %v1201, %v1200
      %v1217 = vpack.c.bf16 %v1209, %v1208
      %v1218 = vpack.c.bf16 %v1203, %v1202
      %v1219 = vpack.c.bf16 %v1211, %v1210
      %v1220 = vpack.c.bf16 %v1205, %v1204
      %v1221 = vpack.c.bf16 %v1213, %v1212
      %v1222 = vld [vmem:[%s3 + $0x180] sm:$0xf]
      %v1223 = vld [vmem:[%s3 + $0x184] sm:$0xf]
      %v1224 = vld [vmem:[%s3 + $0x188] sm:$0xf]
      %v1225 = vld [vmem:[%s3 + $0x18c] sm:$0xf]
      %v1226 = vld [vmem:[%s3 + $0x190] sm:$0xf]
      %v1227 = vld [vmem:[%s3 + $0x194] sm:$0xf]
      %v1228 = vld [vmem:[%s3 + $0x198] sm:$0xf]
      %v1229 = vld [vmem:[%s3 + $0x19c] sm:$0xf]
      %v1230 = vld [vmem:[%s3 + $0x1a0] sm:$0xf]
      %v1231 = vld [vmem:[%s3 + $0x1a4] sm:$0xf]
      %v1232 = vld [vmem:[%s3 + $0x1a8] sm:$0xf]
      %v1233 = vld [vmem:[%s3 + $0x1ac] sm:$0xf]
      %v1234 = vld [vmem:[%s3 + $0x1b0] sm:$0xf]
      %v1235 = vld [vmem:[%s3 + $0x1b4] sm:$0xf]
      %v1236 = vld [vmem:[%s3 + $0x1b8] sm:$0xf]
      %v1237 = vld [vmem:[%s3 + $0x1bc] sm:$0xf]
      %v1238 = vld [vmem:[%s3 + $0x1c0] sm:$0xf]
      %v1239 = vld [vmem:[%s3 + $0x1c4] sm:$0xf]
      %v1240 = vld [vmem:[%s3 + $0x1c8] sm:$0xf]
      %v1241 = vld [vmem:[%s3 + $0x1cc] sm:$0xf]
      %v1242 = vld [vmem:[%s3 + $0x1d0] sm:$0xf]
      %v1243 = vld [vmem:[%s3 + $0x1d4] sm:$0xf]
      %v1244 = vld [vmem:[%s3 + $0x1d8] sm:$0xf]
      %v1245 = vld [vmem:[%s3 + $0x1dc] sm:$0xf]
      %v1246 = vld [vmem:[%s3 + $0x1e0] sm:$0xf]
      %v1247 = vld [vmem:[%s3 + $0x1e4] sm:$0xf]
      %v1248 = vld [vmem:[%s3 + $0x1e8] sm:$0xf]
      %v1249 = vld [vmem:[%s3 + $0x1ec] sm:$0xf]
      %v1250 = vld [vmem:[%s3 + $0x1f0] sm:$0xf]
      %v1251 = vld [vmem:[%s3 + $0x1f4] sm:$0xf]
      %v1252 = vld [vmem:[%s3 + $0x1f8] sm:$0xf]
      %v1253 = vld [vmem:[%s3 + $0x1fc] sm:$0xf]
      %v1286 = vunpack.c.l.b16 %v1222
      %v1287 = vunpack.c.l.b16 %v1223
      %v1288 = vunpack.c.l.b16 %v1224
      %v1289 = vunpack.c.l.b16 %v1225
      %v1290 = vunpack.c.l.b16 %v1226
      %v1291 = vunpack.c.l.b16 %v1227
      %v1292 = vunpack.c.l.b16 %v1228
      %v1293 = vunpack.c.l.b16 %v1229
      %v1294 = vunpack.c.l.b16 %v1230
      %v1295 = vunpack.c.l.b16 %v1231
      %v1296 = vunpack.c.l.b16 %v1232
      %v1297 = vunpack.c.l.b16 %v1233
      %v1298 = vunpack.c.l.b16 %v1234
      %v1299 = vunpack.c.l.b16 %v1235
      %v1300 = vunpack.c.l.b16 %v1236
      %v1301 = vunpack.c.l.b16 %v1237
      %v1302 = vunpack.c.l.b16 %v1238
      %v1303 = vunpack.c.l.b16 %v1239
      %v1304 = vunpack.c.l.b16 %v1240
      %v1305 = vunpack.c.l.b16 %v1241
      %v1306 = vunpack.c.l.b16 %v1242
      %v1307 = vunpack.c.l.b16 %v1243
      %v1308 = vunpack.c.l.b16 %v1244
      %v1309 = vunpack.c.l.b16 %v1245
      %v1310 = vunpack.c.l.b16 %v1246
      %v1311 = vunpack.c.l.b16 %v1247
      %v1312 = vunpack.c.l.b16 %v1248
      %v1313 = vunpack.c.l.b16 %v1249
      %v1314 = vunpack.c.l.b16 %v1250
      %v1315 = vunpack.c.l.b16 %v1251
      %v1316 = vunpack.c.l.b16 %v1252
      %v1317 = vunpack.c.l.b16 %v1253
      %v1318 = vpack.c.b16 %v1287, %v1286
      %v1319 = vpack.c.b16 %v1289, %v1288
      %v1320 = vpack.c.b16 %v1291, %v1290
      %v1321 = vpack.c.b16 %v1293, %v1292
      %v1322 = vpack.c.b16 %v1295, %v1294
      %v1323 = vpack.c.b16 %v1297, %v1296
      %v1324 = vpack.c.b16 %v1299, %v1298
      %v1325 = vpack.c.b16 %v1301, %v1300
      %v1326 = vpack.c.b16 %v1303, %v1302
      %v1327 = vpack.c.b16 %v1305, %v1304
      %v1328 = vpack.c.b16 %v1307, %v1306
      %v1329 = vpack.c.b16 %v1309, %v1308
      %v1330 = vpack.c.b16 %v1311, %v1310
      %v1331 = vpack.c.b16 %v1313, %v1312
      %v1332 = vpack.c.b16 %v1315, %v1314
      %v1333 = vpack.c.b16 %v1317, %v1316
      %1350 = vmatprep.subr.bf16.mxu0 0
      %1351 = vmatpush1.bf16.msra.mxu0 %v1318
      %1352 = vmatprep.subr.bf16.mxu0 0
      %1353 = vmatpush1.bf16.msra.mxu0 %v1319
      %1354 = vmatprep.subr.bf16.mxu0 0
      %1355 = vmatpush1.bf16.msra.mxu0 %v1320
      %1356 = vmatprep.subr.bf16.mxu0 0
      %1357 = vmatpush1.bf16.msra.mxu0 %v1321
      %1358 = vmatprep.subr.bf16.mxu0 0
      %1359 = vmatpush1.bf16.msra.mxu0 %v1322
      %1360 = vmatprep.subr.bf16.mxu0 0
      %1361 = vmatpush1.bf16.msra.mxu0 %v1323
      %1362 = vmatprep.subr.bf16.mxu0 0
      %1363 = vmatpush1.bf16.msra.mxu0 %v1324
      %1364 = vmatprep.subr.bf16.mxu0 0
      %1365 = vmatpush1.bf16.msra.mxu0 %v1325
      %1366 = vmatprep.subr.bf16.mxu0 0
      %1367 = vmatpush1.bf16.msra.mxu0 %v1326
      %1368 = vmatprep.subr.bf16.mxu0 0
      %1369 = vmatpush1.bf16.msra.mxu0 %v1327
      %1370 = vmatprep.subr.bf16.mxu0 0
      %1371 = vmatpush1.bf16.msra.mxu0 %v1328
      %1372 = vmatprep.subr.bf16.mxu0 0
      %1373 = vmatpush1.bf16.msra.mxu0 %v1329
      %1374 = vmatprep.subr.bf16.mxu0 0
      %1375 = vmatpush1.bf16.msra.mxu0 %v1330
      %1376 = vmatprep.subr.bf16.mxu0 0
      %1377 = vmatpush1.bf16.msra.mxu0 %v1331
      %1378 = vmatprep.subr.bf16.mxu0 0
      %1379 = vmatpush1.bf16.msra.mxu0 %v1332
      %1380 = vmatprep.subr.bf16.mxu0 0
      %1381 = vmatpush1.bf16.msra.mxu0 %v1333
      %1382 = vmatprep.mubr.bf16.mxu0 %v1215
      %1383 = vmatmul.mubr.bf16.gmra.mrb[0].mxu0 %v1214
      %v1384 = vpop.f32.mrb[0].mxu0
      %v1385 = vadd.f32 0.0, %v1384
      %v1386 = vpop.f32.mrb[0].mxu0
      %v1387 = vpop.f32.mrb[0].mxu0
      %v1388 = vadd.f32 0.0, %v1387
      %v1389 = vpop.f32.mrb[0].mxu0
      %1390 = vmatprep.mubr.bf16.mxu0 %v1217
      %1391 = vmatmul.mubr.bf16.gmra.mrb[0].mxu0 %v1216
      %v1392 = vpop.f32.mrb[0].mxu0
      %v1393 = vadd.f32 0.0, %v1392
      %v1394 = vpop.f32.mrb[0].mxu0
      %v1395 = vpop.f32.mrb[0].mxu0
      %v1396 = vadd.f32 0.0, %v1395
      %v1397 = vpop.f32.mrb[0].mxu0
      %1398 = vmatprep.mubr.bf16.mxu0 %v1219
      %1399 = vmatmul.mubr.bf16.gmra.mrb[0].mxu0 %v1218
      %v1400 = vpop.f32.mrb[0].mxu0
      %v1401 = vadd.f32 0.0, %v1400
      %v1402 = vpop.f32.mrb[0].mxu0
      %v1403 = vpop.f32.mrb[0].mxu0
      %v1404 = vadd.f32 0.0, %v1403
      %v1405 = vpop.f32.mrb[0].mxu0
      %1406 = vmatprep.mubr.bf16.mxu0 %v1221
      %1407 = vmatmul.mubr.bf16.gmra.mrb[0].mxu0 %v1220
      %v1408 = vpop.f32.mrb[0].mxu0
      %v1409 = vadd.f32 0.0, %v1408
      %v1410 = vpop.f32.mrb[0].mxu0
      %v1411 = vpop.f32.mrb[0].mxu0
      %v1412 = vadd.f32 0.0, %v1411
      %v1413 = vpop.f32.mrb[0].mxu0
      %1414 = vdwg.mxu0
      %v1415 = vadd.f32 %v1189, %v1385
      %v1416 = vadd.f32 %v1190, %v1388
      %v1417 = vadd.f32 %v1191, %v1393
      %v1418 = vadd.f32 %v1192, %v1396
      %v1419 = vadd.f32 %v1193, %v1401
      %v1420 = vadd.f32 %v1194, %v1404
      %v1421 = vadd.f32 %v1195, %v1409
      %v1422 = vadd.f32 %v1196, %v1412
      %v1423 = vld [vmem:[%s1197 + $0x2] sm:$0xff]
      %v1424 = vld [vmem:[%s1197 + $0x12] sm:$0xff]
      %v1425 = vld [vmem:[%s1197 + $0x22] sm:$0xff]
      %v1426 = vld [vmem:[%s1197 + $0x32] sm:$0xff]
      %v1427 = vld [vmem:[%s1197 + $0x42] sm:$0xff]
      %v1428 = vld [vmem:[%s1197 + $0x52] sm:$0xff]
      %v1429 = vld [vmem:[%s1197 + $0x62] sm:$0xff]
      %v1430 = vld [vmem:[%s1197 + $0x72] sm:$0xff]
      %v1431 = vpack.c.bf16 %v1424, %v1423
      %v1432 = vpack.c.bf16 %v1426, %v1425
      %v1433 = vpack.c.bf16 %v1428, %v1427
      %v1434 = vpack.c.bf16 %v1430, %v1429
      %v1435 = vld [vmem:[%s3 + $0x200] sm:$0xf]
      %v1436 = vld [vmem:[%s3 + $0x204] sm:$0xf]
      %v1437 = vld [vmem:[%s3 + $0x208] sm:$0xf]
      %v1438 = vld [vmem:[%s3 + $0x20c] sm:$0xf]
      %v1439 = vld [vmem:[%s3 + $0x210] sm:$0xf]
      %v1440 = vld [vmem:[%s3 + $0x214] sm:$0xf]
      %v1441 = vld [vmem:[%s3 + $0x218] sm:$0xf]
      %v1442 = vld [vmem:[%s3 + $0x21c] sm:$0xf]
      %v1443 = vld [vmem:[%s3 + $0x220] sm:$0xf]
      %v1444 = vld [vmem:[%s3 + $0x224] sm:$0xf]
      %v1445 = vld [vmem:[%s3 + $0x228] sm:$0xf]
      %v1446 = vld [vmem:[%s3 + $0x22c] sm:$0xf]
      %v1447 = vld [vmem:[%s3 + $0x230] sm:$0xf]
      %v1448 = vld [vmem:[%s3 + $0x234] sm:$0xf]
      %v1449 = vld [vmem:[%s3 + $0x238] sm:$0xf]
      %v1450 = vld [vmem:[%s3 + $0x23c] sm:$0xf]
      %v1467 = vunpack.c.l.b16 %v1435
      %v1468 = vunpack.c.l.b16 %v1436
      %v1469 = vunpack.c.l.b16 %v1437
      %v1470 = vunpack.c.l.b16 %v1438
      %v1471 = vunpack.c.l.b16 %v1439
      %v1472 = vunpack.c.l.b16 %v1440
      %v1473 = vunpack.c.l.b16 %v1441
      %v1474 = vunpack.c.l.b16 %v1442
      %v1475 = vunpack.c.l.b16 %v1443
      %v1476 = vunpack.c.l.b16 %v1444
      %v1477 = vunpack.c.l.b16 %v1445
      %v1478 = vunpack.c.l.b16 %v1446
      %v1479 = vunpack.c.l.b16 %v1447
      %v1480 = vunpack.c.l.b16 %v1448
      %v1481 = vunpack.c.l.b16 %v1449
      %v1482 = vunpack.c.l.b16 %v1450
      %v1483 = vpack.c.b16 %v1468, %v1467
      %v1484 = vpack.c.b16 %v1470, %v1469
      %v1485 = vpack.c.b16 %v1472, %v1471
      %v1486 = vpack.c.b16 %v1474, %v1473
      %v1487 = vpack.c.b16 %v1476, %v1475
      %v1488 = vpack.c.b16 %v1478, %v1477
      %v1489 = vpack.c.b16 %v1480, %v1479
      %v1490 = vpack.c.b16 %v1482, %v1481
      %1499 = vmatprep.subr.bf16.mxu0 0
      %1500 = vmatpush1.bf16.msra.mxu0 %v1483
      %1501 = vmatprep.subr.bf16.mxu0 0
      %1502 = vmatpush1.bf16.msra.mxu0 %v1484
      %1503 = vmatprep.subr.bf16.mxu0 0
      %1504 = vmatpush1.bf16.msra.mxu0 %v1485
      %1505 = vmatprep.subr.bf16.mxu0 0
      %1506 = vmatpush1.bf16.msra.mxu0 %v1486
      %1507 = vmatprep.subr.bf16.mxu0 0
      %1508 = vmatpush1.bf16.msra.mxu0 %v1487
      %1509 = vmatprep.subr.bf16.mxu0 0
      %1510 = vmatpush1.bf16.msra.mxu0 %v1488
      %1511 = vmatprep.subr.bf16.mxu0 0
      %1512 = vmatpush1.bf16.msra.mxu0 %v1489
      %1513 = vmatprep.subr.bf16.mxu0 0
      %1514 = vmatpush1.bf16.msra.mxu0 %v1490
      %1515 = vmatprep.subr.bf16.mxu0 0
      %1516 = vmatpush1.bf16.msra.mxu0 0
      %1517 = vmatprep.subr.bf16.mxu0 0
      %1518 = vmatpush1.bf16.msra.mxu0 0
      %1519 = vmatprep.subr.bf16.mxu0 0
      %1520 = vmatpush1.bf16.msra.mxu0 0
      %1521 = vmatprep.subr.bf16.mxu0 0
      %1522 = vmatpush1.bf16.msra.mxu0 0
      %1523 = vmatprep.subr.bf16.mxu0 0
      %1524 = vmatpush1.bf16.msra.mxu0 0
      %1525 = vmatprep.subr.bf16.mxu0 0
      %1526 = vmatpush1.bf16.msra.mxu0 0
      %1527 = vmatprep.subr.bf16.mxu0 0
      %1528 = vmatpush1.bf16.msra.mxu0 0
      %1529 = vmatprep.subr.bf16.mxu0 0
      %1530 = vmatpush1.bf16.msra.mxu0 0
      %1531 = vmatprep.mubr.bf16.mxu0 0
      %1532 = vmatmul.mubr.bf16.gmra.mrb[0].mxu0 %v1431
      %v1533 = vpop.f32.mrb[0].mxu0
      %v1534 = vadd.f32 0.0, %v1533
      %v1535 = vpop.f32.mrb[0].mxu0
      %v1536 = vpop.f32.mrb[0].mxu0
      %v1537 = vadd.f32 0.0, %v1536
      %v1538 = vpop.f32.mrb[0].mxu0
      %1539 = vmatprep.mubr.bf16.mxu0 0
      %1540 = vmatmul.mubr.bf16.gmra.mrb[0].mxu0 %v1432
      %v1541 = vpop.f32.mrb[0].mxu0
      %v1542 = vadd.f32 0.0, %v1541
      %v1543 = vpop.f32.mrb[0].mxu0
      %v1544 = vpop.f32.mrb[0].mxu0
      %v1545 = vadd.f32 0.0, %v1544
      %v1546 = vpop.f32.mrb[0].mxu0
      %1547 = vmatprep.mubr.bf16.mxu0 0
      %1548 = vmatmul.mubr.bf16.gmra.mrb[0].mxu0 %v1433
      %v1549 = vpop.f32.mrb[0].mxu0
      %v1550 = vadd.f32 0.0, %v1549
      %v1551 = vpop.f32.mrb[0].mxu0
      %v1552 = vpop.f32.mrb[0].mxu0
      %v1553 = vadd.f32 0.0, %v1552
      %v1554 = vpop.f32.mrb[0].mxu0
      %1555 = vmatprep.mubr.bf16.mxu0 0
      %1556 = vmatmul.mubr.bf16.gmra.mrb[0].mxu0 %v1434
      %v1557 = vpop.f32.mrb[0].mxu0
      %v1558 = vadd.f32 0.0, %v1557
      %v1559 = vpop.f32.mrb[0].mxu0
      %v1560 = vpop.f32.mrb[0].mxu0
      %v1561 = vadd.f32 0.0, %v1560
      %v1562 = vpop.f32.mrb[0].mxu0
      %1563 = vdwg.mxu0
      %v1564 = vadd.f32 %v1415, %v1534
      %v1565 = vadd.f32 %v1416, %v1537
      %v1566 = vadd.f32 %v1417, %v1542
      %v1567 = vadd.f32 %v1418, %v1545
      %v1568 = vadd.f32 %v1419, %v1550
      %v1569 = vadd.f32 %v1420, %v1553
      %v1570 = vadd.f32 %v1421, %v1558
      %v1571 = vadd.f32 %v1422, %v1561
      %v1572 = vld [vmem:[%s4] sm:$0x1]
      %v1574 = vlaneseq
      %v1575 = vshrl.u32 %v1574, 7
      %v1576 = vsub.s32 0, %v1575
      %v1577 = vrot.slane %v1572, %v1576
      %v1579 = vadd.f32 %v1564, %v1577
      %v1580 = vadd.f32 %v1565, %v1577
      %v1581 = vadd.f32 %v1566, %v1577
      %v1582 = vadd.f32 %v1567, %v1577
      %v1583 = vadd.f32 %v1568, %v1577
      %v1584 = vadd.f32 %v1569, %v1577
      %v1585 = vadd.f32 %v1570, %v1577
      %v1586 = vadd.f32 %v1571, %v1577
      %v1587 = vxor.u32 %v1579, 2147483648
      %v1588 = vxor.u32 %v1580, 2147483648
      %v1589 = vxor.u32 %v1581, 2147483648
      %v1590 = vxor.u32 %v1582, 2147483648
      %v1591 = vxor.u32 %v1583, 2147483648
      %v1592 = vxor.u32 %v1584, 2147483648
      %v1593 = vxor.u32 %v1585, 2147483648
      %v1594 = vxor.u32 %v1586, 2147483648
      %v1595 = vmul.f32 %v1587, 1.442695
      %v1596 = vpow.pop %v1595
      %v1597 = vmul.f32 %v1588, 1.442695
      %v1598 = vpow.pop %v1597
      %v1599 = vmul.f32 %v1589, 1.442695
      %v1600 = vpow.pop %v1599
      %v1601 = vmul.f32 %v1590, 1.442695
      %v1602 = vpow.pop %v1601
      %v1603 = vmul.f32 %v1591, 1.442695
      %v1604 = vpow.pop %v1603
      %v1605 = vmul.f32 %v1592, 1.442695
      %v1606 = vpow.pop %v1605
      %v1607 = vmul.f32 %v1593, 1.442695
      %v1608 = vpow.pop %v1607
      %v1609 = vmul.f32 %v1594, 1.442695
      %v1610 = vpow.pop %v1609
      %v1611 = vadd.f32 %v1596, 1.0
      %v1612 = vadd.f32 %v1598, 1.0
      %v1613 = vadd.f32 %v1600, 1.0
      %v1614 = vadd.f32 %v1602, 1.0
      %v1615 = vadd.f32 %v1604, 1.0
      %v1616 = vadd.f32 %v1606, 1.0
      %v1617 = vadd.f32 %v1608, 1.0
      %v1618 = vadd.f32 %v1610, 1.0
      %v1619 = vrcp.pop %v1611
      %v1620 = vmul.f32 1.0, %v1619
      %v1621 = vrcp.pop %v1612
      %v1622 = vmul.f32 1.0, %v1621
      %v1623 = vrcp.pop %v1613
      %v1624 = vmul.f32 1.0, %v1623
      %v1625 = vrcp.pop %v1614
      %v1626 = vmul.f32 1.0, %v1625
      %v1627 = vrcp.pop %v1615
      %v1628 = vmul.f32 1.0, %v1627
      %v1629 = vrcp.pop %v1616
      %v1630 = vmul.f32 1.0, %v1629
      %v1631 = vrcp.pop %v1617
      %v1632 = vmul.f32 1.0, %v1631
      %v1633 = vrcp.pop %v1618
      %v1634 = vmul.f32 1.0, %v1633
      %v1635 = vmul.f32 %v1579, %v1620
      %v1636 = vmul.f32 %v1580, %v1622
      %v1637 = vmul.f32 %v1581, %v1624
      %v1638 = vmul.f32 %v1582, %v1626
      %v1639 = vmul.f32 %v1583, %v1628
      %v1640 = vmul.f32 %v1584, %v1630
      %v1641 = vmul.f32 %v1585, %v1632
      %v1642 = vmul.f32 %v1586, %v1634
      %v1643 = vpack.c.bf16 %v1636, %v1635
      %v1644 = vpack.c.bf16 %v1638, %v1637
      %v1645 = vpack.c.bf16 %v1640, %v1639
      %v1646 = vpack.c.bf16 %v1642, %v1641
      %v1647 = vld [vmem:[%s5] sm:$0xf]
      %v1648 = vld [vmem:[%s5 + $0x4] sm:$0xf]
      %v1649 = vld [vmem:[%s5 + $0x8] sm:$0xf]
      %v1650 = vld [vmem:[%s5 + $0xc] sm:$0xf]
      %v1651 = vld [vmem:[%s5 + $0x10] sm:$0xf]
      %v1652 = vld [vmem:[%s5 + $0x14] sm:$0xf]
      %v1653 = vld [vmem:[%s5 + $0x18] sm:$0xf]
      %v1654 = vld [vmem:[%s5 + $0x1c] sm:$0xf]
      %v1655 = vld [vmem:[%s5 + $0x20] sm:$0xf]
      %v1656 = vld [vmem:[%s5 + $0x24] sm:$0xf]
      %v1657 = vld [vmem:[%s5 + $0x28] sm:$0xf]
      %v1658 = vld [vmem:[%s5 + $0x2c] sm:$0xf]
      %v1659 = vld [vmem:[%s5 + $0x30] sm:$0xf]
      %v1660 = vld [vmem:[%s5 + $0x34] sm:$0xf]
      %v1661 = vld [vmem:[%s5 + $0x38] sm:$0xf]
      %v1662 = vld [vmem:[%s5 + $0x3c] sm:$0xf]
      %v1663 = vld [vmem:[%s5 + $0x40] sm:$0xf]
      %v1664 = vld [vmem:[%s5 + $0x44] sm:$0xf]
      %v1665 = vld [vmem:[%s5 + $0x48] sm:$0xf]
      %v1666 = vld [vmem:[%s5 + $0x4c] sm:$0xf]
      %v1667 = vld [vmem:[%s5 + $0x50] sm:$0xf]
      %v1668 = vld [vmem:[%s5 + $0x54] sm:$0xf]
      %v1669 = vld [vmem:[%s5 + $0x58] sm:$0xf]
      %v1670 = vld [vmem:[%s5 + $0x5c] sm:$0xf]
      %v1671 = vld [vmem:[%s5 + $0x60] sm:$0xf]
      %v1672 = vld [vmem:[%s5 + $0x64] sm:$0xf]
      %v1673 = vld [vmem:[%s5 + $0x68] sm:$0xf]
      %v1674 = vld [vmem:[%s5 + $0x6c] sm:$0xf]
      %v1675 = vld [vmem:[%s5 + $0x70] sm:$0xf]
      %v1676 = vld [vmem:[%s5 + $0x74] sm:$0xf]
      %v1677 = vld [vmem:[%s5 + $0x78] sm:$0xf]
      %v1678 = vld [vmem:[%s5 + $0x7c] sm:$0xf]
      %v1679 = vld [vmem:[%s6] sm:$0x1]
      %v1681 = vlaneseq
      %v1682 = vshrl.u32 %v1681, 7
      %v1683 = vsub.s32 0, %v1682
      %v1684 = vrot.slane %v1679, %v1683
      %v1718 = vunpack.c.l.b16 %v1647
      %v1719 = vunpack.c.l.b16 %v1648
      %v1720 = vunpack.c.l.b16 %v1649
      %v1721 = vunpack.c.l.b16 %v1650
      %v1722 = vunpack.c.l.b16 %v1651
      %v1723 = vunpack.c.l.b16 %v1652
      %v1724 = vunpack.c.l.b16 %v1653
      %v1725 = vunpack.c.l.b16 %v1654
      %v1726 = vunpack.c.l.b16 %v1655
      %v1727 = vunpack.c.l.b16 %v1656
      %v1728 = vunpack.c.l.b16 %v1657
      %v1729 = vunpack.c.l.b16 %v1658
      %v1730 = vunpack.c.l.b16 %v1659
      %v1731 = vunpack.c.l.b16 %v1660
      %v1732 = vunpack.c.l.b16 %v1661
      %v1733 = vunpack.c.l.b16 %v1662
      %v1734 = vunpack.c.l.b16 %v1663
      %v1735 = vunpack.c.l.b16 %v1664
      %v1736 = vunpack.c.l.b16 %v1665
      %v1737 = vunpack.c.l.b16 %v1666
      %v1738 = vunpack.c.l.b16 %v1667
      %v1739 = vunpack.c.l.b16 %v1668
      %v1740 = vunpack.c.l.b16 %v1669
      %v1741 = vunpack.c.l.b16 %v1670
      %v1742 = vunpack.c.l.b16 %v1671
      %v1743 = vunpack.c.l.b16 %v1672
      %v1744 = vunpack.c.l.b16 %v1673
      %v1745 = vunpack.c.l.b16 %v1674
      %v1746 = vunpack.c.l.b16 %v1675
      %v1747 = vunpack.c.l.b16 %v1676
      %v1748 = vunpack.c.l.b16 %v1677
      %v1749 = vunpack.c.l.b16 %v1678
      %v1750 = vpack.c.b16 %v1719, %v1718
      %v1751 = vpack.c.b16 %v1721, %v1720
      %v1752 = vpack.c.b16 %v1723, %v1722
      %v1753 = vpack.c.b16 %v1725, %v1724
      %v1754 = vpack.c.b16 %v1727, %v1726
      %v1755 = vpack.c.b16 %v1729, %v1728
      %v1756 = vpack.c.b16 %v1731, %v1730
      %v1757 = vpack.c.b16 %v1733, %v1732
      %v1758 = vpack.c.b16 %v1735, %v1734
      %v1759 = vpack.c.b16 %v1737, %v1736
      %v1760 = vpack.c.b16 %v1739, %v1738
      %v1761 = vpack.c.b16 %v1741, %v1740
      %v1762 = vpack.c.b16 %v1743, %v1742
      %v1763 = vpack.c.b16 %v1745, %v1744
      %v1764 = vpack.c.b16 %v1747, %v1746
      %v1765 = vpack.c.b16 %v1749, %v1748
      %1782 = vmatprep.subr.bf16.mxu0 0
      %1783 = vmatpush1.bf16.msra.mxu0 %v1750
      %1784 = vmatprep.subr.bf16.mxu0 0
      %1785 = vmatpush1.bf16.msra.mxu0 %v1751
      %1786 = vmatprep.subr.bf16.mxu0 0
      %1787 = vmatpush1.bf16.msra.mxu0 %v1752
      %1788 = vmatprep.subr.bf16.mxu0 0
      %1789 = vmatpush1.bf16.msra.mxu0 %v1753
      %1790 = vmatprep.subr.bf16.mxu0 0
      %1791 = vmatpush1.bf16.msra.mxu0 %v1754
      %1792 = vmatprep.subr.bf16.mxu0 0
      %1793 = vmatpush1.bf16.msra.mxu0 %v1755
      %1794 = vmatprep.subr.bf16.mxu0 0
      %1795 = vmatpush1.bf16.msra.mxu0 %v1756
      %1796 = vmatprep.subr.bf16.mxu0 0
      %1797 = vmatpush1.bf16.msra.mxu0 %v1757
      %1798 = vmatprep.subr.bf16.mxu0 0
      %1799 = vmatpush1.bf16.msra.mxu0 %v1758
      %1800 = vmatprep.subr.bf16.mxu0 0
      %1801 = vmatpush1.bf16.msra.mxu0 %v1759
      %1802 = vmatprep.subr.bf16.mxu0 0
      %1803 = vmatpush1.bf16.msra.mxu0 %v1760
      %1804 = vmatprep.subr.bf16.mxu0 0
      %1805 = vmatpush1.bf16.msra.mxu0 %v1761
      %1806 = vmatprep.subr.bf16.mxu0 0
      %1807 = vmatpush1.bf16.msra.mxu0 %v1762
      %1808 = vmatprep.subr.bf16.mxu0 0
      %1809 = vmatpush1.bf16.msra.mxu0 %v1763
      %1810 = vmatprep.subr.bf16.mxu0 0
      %1811 = vmatpush1.bf16.msra.mxu0 %v1764
      %1812 = vmatprep.subr.bf16.mxu0 0
      %1813 = vmatpush1.bf16.msra.mxu0 %v1765
      %1814 = vmatprep.mubr.bf16.mxu0 %v327
      %1815 = vmatmul.mubr.bf16.gmra.mrb[0].mxu0 %v1643
      %v1816 = vpop.f32.mrb[0].mxu0
      %v1817 = vadd.f32 %v1684, %v1816
      %v1818 = vpop.f32.mrb[0].mxu0
      %v1819 = vpop.f32.mrb[0].mxu0
      %v1820 = vadd.f32 %v1684, %v1819
      %v1821 = vpop.f32.mrb[0].mxu0
      %1822 = vmatprep.mubr.bf16.mxu0 %v328
      %1823 = vmatmul.mubr.bf16.gmra.mrb[0].mxu0 %v1644
      %v1824 = vpop.f32.mrb[0].mxu0
      %v1825 = vadd.f32 %v1684, %v1824
      %v1826 = vpop.f32.mrb[0].mxu0
      %v1827 = vpop.f32.mrb[0].mxu0
      %v1828 = vadd.f32 %v1684, %v1827
      %v1829 = vpop.f32.mrb[0].mxu0
      %1830 = vmatprep.mubr.bf16.mxu0 %v329
      %1831 = vmatmul.mubr.bf16.gmra.mrb[0].mxu0 %v1645
      %v1832 = vpop.f32.mrb[0].mxu0
      %v1833 = vadd.f32 %v1684, %v1832
      %v1834 = vpop.f32.mrb[0].mxu0
      %v1835 = vpop.f32.mrb[0].mxu0
      %v1836 = vadd.f32 %v1684, %v1835
      %v1837 = vpop.f32.mrb[0].mxu0
      %1838 = vmatprep.mubr.bf16.mxu0 %v330
      %1839 = vmatmul.mubr.bf16.gmra.mrb[0].mxu0 %v1646
      %v1840 = vpop.f32.mrb[0].mxu0
      %v1841 = vadd.f32 %v1684, %v1840
      %v1842 = vpop.f32.mrb[0].mxu0
      %v1843 = vpop.f32.mrb[0].mxu0
      %v1844 = vadd.f32 %v1684, %v1843
      %v1845 = vpop.f32.mrb[0].mxu0
      %1846 = vdwg.mxu0
      %v1847 = vxor.u32 %v1817, 2147483648
      %v1848 = vxor.u32 %v1820, 2147483648
      %v1849 = vxor.u32 %v1825, 2147483648
      %v1850 = vxor.u32 %v1828, 2147483648
      %v1851 = vxor.u32 %v1833, 2147483648
      %v1852 = vxor.u32 %v1836, 2147483648
      %v1853 = vxor.u32 %v1841, 2147483648
      %v1854 = vxor.u32 %v1844, 2147483648
      %v1855 = vmul.f32 %v1847, 1.442695
      %v1856 = vpow.pop %v1855
      %v1857 = vmul.f32 %v1848, 1.442695
      %v1858 = vpow.pop %v1857
      %v1859 = vmul.f32 %v1849, 1.442695
      %v1860 = vpow.pop %v1859
      %v1861 = vmul.f32 %v1850, 1.442695
      %v1862 = vpow.pop %v1861
      %v1863 = vmul.f32 %v1851, 1.442695
      %v1864 = vpow.pop %v1863
      %v1865 = vmul.f32 %v1852, 1.442695
      %v1866 = vpow.pop %v1865
      %v1867 = vmul.f32 %v1853, 1.442695
      %v1868 = vpow.pop %v1867
      %v1869 = vmul.f32 %v1854, 1.442695
      %v1870 = vpow.pop %v1869
      %v1871 = vadd.f32 %v1856, 1.0
      %v1872 = vadd.f32 %v1858, 1.0
      %v1873 = vadd.f32 %v1860, 1.0
      %v1874 = vadd.f32 %v1862, 1.0
      %v1875 = vadd.f32 %v1864, 1.0
      %v1876 = vadd.f32 %v1866, 1.0
      %v1877 = vadd.f32 %v1868, 1.0
      %v1878 = vadd.f32 %v1870, 1.0
      %v1879 = vrcp.pop %v1871
      %v1880 = vmul.f32 1.0, %v1879
      %v1881 = vrcp.pop %v1872
      %v1882 = vmul.f32 1.0, %v1881
      %v1883 = vrcp.pop %v1873
      %v1884 = vmul.f32 1.0, %v1883
      %v1885 = vrcp.pop %v1874
      %v1886 = vmul.f32 1.0, %v1885
      %v1887 = vrcp.pop %v1875
      %v1888 = vmul.f32 1.0, %v1887
      %v1889 = vrcp.pop %v1876
      %v1890 = vmul.f32 1.0, %v1889
      %v1891 = vrcp.pop %v1877
      %v1892 = vmul.f32 1.0, %v1891
      %v1893 = vrcp.pop %v1878
      %v1894 = vmul.f32 1.0, %v1893
      %v1895 = vmul.f32 %v1817, %v1880
      %v1896 = vmul.f32 %v1820, %v1882
      %v1897 = vmul.f32 %v1825, %v1884
      %v1898 = vmul.f32 %v1828, %v1886
      %v1899 = vmul.f32 %v1833, %v1888
      %v1900 = vmul.f32 %v1836, %v1890
      %v1901 = vmul.f32 %v1841, %v1892
      %v1902 = vmul.f32 %v1844, %v1894
      %v1903 = vpack.c.bf16 %v1896, %v1895
      %v1904 = vpack.c.bf16 %v1898, %v1897
      %v1905 = vpack.c.bf16 %v1900, %v1899
      %v1906 = vpack.c.bf16 %v1902, %v1901
      %v1911 = vunpack.c.l.b16 %v1903
      %v1912 = vunpack.c.h.b16 %v1903
      %v1913 = vunpack.c.l.b16 %v1904
      %v1914 = vunpack.c.h.b16 %v1904
      %v1915 = vunpack.c.l.b16 %v1905
      %v1916 = vunpack.c.h.b16 %v1905
      %v1917 = vunpack.c.l.b16 %v1906
      %v1918 = vunpack.c.h.b16 %v1906
      %v1919 = vpack.c.b16 %v1911, %v1911
      %v1920 = vpack.c.b16 %v1912, %v1912
      %v1921 = vpack.c.b16 %v1913, %v1913
      %v1922 = vpack.c.b16 %v1914, %v1914
      %v1923 = vpack.c.b16 %v1915, %v1915
      %v1924 = vpack.c.b16 %v1916, %v1916
      %v1925 = vpack.c.b16 %v1917, %v1917
      %v1926 = vpack.c.b16 %v1918, %v1918
      %1935 = vst [vmem:[%s278] sm:$0xf] %v1919
      %1936 = vst [vmem:[%s278 + $0x4] sm:$0xf] %v1920
      %1937 = vst [vmem:[%s278 + $0x8] sm:$0xf] %v1921
      %1938 = vst [vmem:[%s278 + $0xc] sm:$0xf] %v1922
      %1939 = vst [vmem:[%s278 + $0x10] sm:$0xf] %v1923
      %1940 = vst [vmem:[%s278 + $0x14] sm:$0xf] %v1924
      %1941 = vst [vmem:[%s278 + $0x18] sm:$0xf] %v1925
      %1942 = vst [vmem:[%s278 + $0x1c] sm:$0xf] %v1926
      %p1943 = scmp.lt.s32.totalorder %s18, 1
      %s1944 = scalar_select %p1943, %s18, 1
      %s1945 = smul.addr %s1944, 8
      %s1946 = smul.addr %s1945, 4
      %s1947 = scalar_lea.vmem %s7, %s1946
      // Predicated region
      $region49: #{backbone_forward_pallas.3} parent=47 // pred_check
        %p1948 = pneg %p188
      $region50: #{backbone_forward_pallas.3} parent=47 // pred_check_branch
        %1950 = sbr.rel (%p1948) target = $region52
      $region51: #{backbone_forward_pallas.3} parent=47 // pred_region
        _
      $region52: #{backbone_forward_pallas.3} parent=47 // pred_fallthru
        _
    $region48: #{backbone_forward_pallas.3} parent=5 // pred_fallthru
      _
    %p1951 = scmp.le.s32.totalorder 2, %s13
    // Predicated region
    $region53: #{backbone_forward_pallas.3} parent=5 // pred_check
      %p1952 = pneg %p1951
    $region54: #{backbone_forward_pallas.3} parent=5 // pred_check_branch
      %1954 = sbr.rel (%p1952) target = $region56
    $region55: #{backbone_forward_pallas.3} parent=5 // pred_region
      %s1955 = ssub.s32 %s13, 2
      // Predicated region
      $region57: #{backbone_forward_pallas.3} parent=55 // pred_check
        %p1956 = pneg %p194
      $region58: #{backbone_forward_pallas.3} parent=55 // pred_check_branch
        %1958 = sbr.rel (%p1956) target = $region60
      $region59: #{backbone_forward_pallas.3} parent=55 // pred_region
        %p1959 = scmp.lt.s32.totalorder %s19, 1
        %s1960 = scalar_select %p1959, %s19, 1
        %s1961 = smul.addr %s1960, 8
        %s1962 = smul.addr %s1961, 4
        %s1963 = scalar_lea.vmem %s7, %s1962
      $region60: #{backbone_forward_pallas.3} parent=55 // pred_fallthru
        _
    $region56: #{backbone_forward_pallas.3} parent=5 // pred_fallthru
      _
  $region6: #{backbone_forward_pallas.3} parent=0 // loop_footer
    %s17 = sadd.s32 1, %s13
  $region7: #{backbone_forward_pallas.3} parent=0 // loop_footer_branch
    %12 = sbr.rel target = $region3
  $region8: #{backbone_forward_pallas.3} parent=0 // loop_exit
    _

// kernel: backbone_forward_pallas.2
$region0: #{backbone_forward_pallas.2}
  #allocation0 [shape = 'u32[]', space=smem, size = 0x4, offset = 0x4, fixed_abs, tag = 'smem constant byte address 0x4 - core index']
  #allocation1 [shape = 'u32[144,128]{1,0:T(1,128)}', space=vmem, size = 0x12000, scoped, tag = 'internal scratch']
  #allocation2 [shape = 'f32[4,9,9,128]{3,2,1,0:T(8,128)}', space=vmem, size = 0x48000, scoped, tag = 'scratch operand']
  %s0 = inlined_call_operand.vmem [shape: f32[2,4,9,9,8], index: 0, kind: input, shape index: {}]
  %s1 = inlined_call_operand.vmem [shape: bf16[72,128], index: 1, kind: input, shape index: {}]
  %s2 = inlined_call_operand.vmem [shape: f32[1,128], index: 2, kind: input, shape index: {}]
  %s3 = inlined_call_operand.vmem [shape: bf16[1152,128], index: 3, kind: input, shape index: {}]
  %s4 = inlined_call_operand.vmem [shape: f32[1,128], index: 4, kind: input, shape index: {}]
  %s5 = inlined_call_operand.vmem [shape: bf16[2,64,128], index: 5, kind: output, shape index: {}]
  %s6 = sld [smem:[#allocation0]]
  $region53: #{backbone_forward_pallas.2} parent=0
    _
  %s8 = ssub.s32 1, %s6
  %s9 = scalar_select 0, %s8, %s6
  loop: start=0, step=1, limit=4
  $region2: #{backbone_forward_pallas.2} parent=0 // loop_pre_header
    _
  $region3: #{backbone_forward_pallas.2} parent=0 // loop_header
    %s11 = sphi 0, %s15
    %p12 = scmp.ge.s32.totalorder %s11, 4
    %s21 = sphi 0, %s23
    %s24 = sphi 0, %s21
    %s25 = sphi 0, %s24
    %s41 = sphi 0, %s25
    %s45 = sphi 0, %s45
    %s47 = sphi 0, %s45
    %s48 = sphi 0, %s47
    %s62 = sphi 0, %s48
    %s66 = sphi 0, %s66
    %s68 = sphi 0, %s66
    %s69 = sphi 0, %s68
    %s83 = sphi 0, %s69
    %s87 = sphi 0, %s87
    %s89 = sphi 0, %s87
    %s90 = sphi 0, %s89
    %s104 = sphi 0, %s90
    %s108 = sphi 0, %s108
    %s110 = sphi 0, %s108
    %s111 = sphi 0, %s110
    %s125 = sphi 0, %s111
    %s131 = sphi 0, %s133
    %s134 = sphi 0, %s131
    %s135 = sphi 0, %s134
    %s151 = sphi 0, %s135
  $region4: #{backbone_forward_pallas.2} parent=0 // loop_header_branch
    %14 = sbr.rel (%p12) target = $region8
  $region5: #{backbone_forward_pallas.2} parent=0 // loop_body
    %s16 = ssub.s32 %s11, 1
    %s17 = ssub.s32 %s11, 2
    %s18 = sadd.s32 %s11, 1
    %s19 = ssub.s32 %s11, %s18
    %p20 = scmp.eq.s32.totalorder %s19, 0
    %s22 = sadd.s32 %s21, 1
    %s23 = scalar_select %p20, %s21, %s22
    %p26 = pneg %p20
    %p27 = scmp.eq.s32.totalorder %s11, 1
    %p28 = por %p26, %p27
    %p29 = scmp.ne.s32.totalorder %s21, %s24
    %p30 = scmp.eq.s32.totalorder %s11, 0
    %p31 = por %p29, %p30
    %p32 = scmp.ne.s32.totalorder %s21, %s24
    %p33 = scmp.eq.s32.totalorder %s16, 1
    %p34 = por %p32, %p33
    %p35 = scmp.ne.s32.totalorder %s24, %s25
    %p36 = scmp.eq.s32.totalorder %s16, 0
    %p37 = por %p35, %p36
    %p38 = scmp.ne.s32.totalorder %s24, %s25
    %p39 = scmp.eq.s32.totalorder %s17, 1
    %p40 = por %p38, %p39
    %p42 = scmp.ne.s32.totalorder %s25, %s41
    %p43 = scmp.eq.s32.totalorder %s17, 0
    %p44 = por %p42, %p43
    %s46 = sadd.s32 %s45, 1
    %p49 = scmp.eq.s32.totalorder %s11, 1
    %p50 = scmp.ne.s32.totalorder %s45, %s47
    %p51 = scmp.eq.s32.totalorder %s11, 0
    %p52 = por %p50, %p51
    %p53 = scmp.ne.s32.totalorder %s45, %s47
    %p54 = scmp.eq.s32.totalorder %s16, 1
    %p55 = por %p53, %p54
    %p56 = scmp.ne.s32.totalorder %s47, %s48
    %p57 = scmp.eq.s32.totalorder %s16, 0
    %p58 = por %p56, %p57
    %p59 = scmp.ne.s32.totalorder %s47, %s48
    %p60 = scmp.eq.s32.totalorder %s17, 1
    %p61 = por %p59, %p60
    %p63 = scmp.ne.s32.totalorder %s48, %s62
    %p64 = scmp.eq.s32.totalorder %s17, 0
    %p65 = por %p63, %p64
    %s67 = sadd.s32 %s66, 1
    %p70 = scmp.eq.s32.totalorder %s11, 1
    %p71 = scmp.ne.s32.totalorder %s66, %s68
    %p72 = scmp.eq.s32.totalorder %s11, 0
    %p73 = por %p71, %p72
    %p74 = scmp.ne.s32.totalorder %s66, %s68
    %p75 = scmp.eq.s32.totalorder %s16, 1
    %p76 = por %p74, %p75
    %p77 = scmp.ne.s32.totalorder %s68, %s69
    %p78 = scmp.eq.s32.totalorder %s16, 0
    %p79 = por %p77, %p78
    %p80 = scmp.ne.s32.totalorder %s68, %s69
    %p81 = scmp.eq.s32.totalorder %s17, 1
    %p82 = por %p80, %p81
    %p84 = scmp.ne.s32.totalorder %s69, %s83
    %p85 = scmp.eq.s32.totalorder %s17, 0
    %p86 = por %p84, %p85
    %s88 = sadd.s32 %s87, 1
    %p91 = scmp.eq.s32.totalorder %s11, 1
    %p92 = scmp.ne.s32.totalorder %s87, %s89
    %p93 = scmp.eq.s32.totalorder %s11, 0
    %p94 = por %p92, %p93
    %p95 = scmp.ne.s32.totalorder %s87, %s89
    %p96 = scmp.eq.s32.totalorder %s16, 1
    %p97 = por %p95, %p96
    %p98 = scmp.ne.s32.totalorder %s89, %s90
    %p99 = scmp.eq.s32.totalorder %s16, 0
    %p100 = por %p98, %p99
    %p101 = scmp.ne.s32.totalorder %s89, %s90
    %p102 = scmp.eq.s32.totalorder %s17, 1
    %p103 = por %p101, %p102
    %p105 = scmp.ne.s32.totalorder %s90, %s104
    %p106 = scmp.eq.s32.totalorder %s17, 0
    %p107 = por %p105, %p106
    %s109 = sadd.s32 %s108, 1
    %p112 = scmp.eq.s32.totalorder %s11, 1
    %p113 = scmp.ne.s32.totalorder %s108, %s110
    %p114 = scmp.eq.s32.totalorder %s11, 0
    %p115 = por %p113, %p114
    %p116 = scmp.ne.s32.totalorder %s108, %s110
    %p117 = scmp.eq.s32.totalorder %s16, 1
    %p118 = por %p116, %p117
    %p119 = scmp.ne.s32.totalorder %s110, %s111
    %p120 = scmp.eq.s32.totalorder %s16, 0
    %p121 = por %p119, %p120
    %p122 = scmp.ne.s32.totalorder %s110, %s111
    %p123 = scmp.eq.s32.totalorder %s17, 1
    %p124 = por %p122, %p123
    %p126 = scmp.ne.s32.totalorder %s111, %s125
    %p127 = scmp.eq.s32.totalorder %s17, 0
    %p128 = por %p126, %p127
    %s129 = ssub.s32 %s11, %s18
    %p130 = scmp.eq.s32.totalorder %s129, 0
    %s132 = sadd.s32 %s131, 1
    %s133 = scalar_select %p130, %s131, %s132
    %p136 = pneg %p130
    %p137 = scmp.eq.s32.totalorder %s11, 1
    %p138 = por %p136, %p137
    %p139 = scmp.ne.s32.totalorder %s131, %s134
    %p140 = scmp.eq.s32.totalorder %s11, 0
    %p141 = por %p139, %p140
    %p142 = scmp.ne.s32.totalorder %s131, %s134
    %p143 = scmp.eq.s32.totalorder %s16, 1
    %p144 = por %p142, %p143
    %p145 = scmp.ne.s32.totalorder %s134, %s135
    %p146 = scmp.eq.s32.totalorder %s16, 0
    %p147 = por %p145, %p146
    %p148 = scmp.ne.s32.totalorder %s134, %s135
    %p149 = scmp.eq.s32.totalorder %s17, 1
    %p150 = por %p148, %p149
    %p152 = scmp.ne.s32.totalorder %s135, %s151
    %p153 = scmp.eq.s32.totalorder %s17, 0
    %p154 = por %p152, %p153
    %p155 = scmp.le.s32.totalorder 1, %s11
    %p156 = scmp.lt.s32.totalorder %s11, 3
    %p157 = pnand %p155, %p156
    %p158 = pneg %p157
    // Predicated region
    $region9: #{backbone_forward_pallas.2} parent=5 // pred_check
      _
    $region10: #{backbone_forward_pallas.2} parent=5 // pred_check_branch
      %160 = sbr.rel (%p157) target = $region12
    $region11: #{backbone_forward_pallas.2} parent=5 // pred_region
      %s161 = ssub.s32 %s11, 1
      // Predicated region
      $region13: #{backbone_forward_pallas.2} parent=11 // pred_check
        %p162 = pneg %p58
      $region14: #{backbone_forward_pallas.2} parent=11 // pred_check_branch
        %164 = sbr.rel (%p162) target = $region16
      $region15: #{backbone_forward_pallas.2} parent=11 // pred_region
        _
      $region16: #{backbone_forward_pallas.2} parent=11 // pred_fallthru
        _
      // Predicated region
      $region17: #{backbone_forward_pallas.2} parent=11 // pred_check
        %p165 = pneg %p79
      $region18: #{backbone_forward_pallas.2} parent=11 // pred_check_branch
        %167 = sbr.rel (%p165) target = $region20
      $region19: #{backbone_forward_pallas.2} parent=11 // pred_region
        _
      $region20: #{backbone_forward_pallas.2} parent=11 // pred_fallthru
        _
      // Predicated region
      $region21: #{backbone_forward_pallas.2} parent=11 // pred_check
        %p168 = pneg %p100
      $region22: #{backbone_forward_pallas.2} parent=11 // pred_check_branch
        %170 = sbr.rel (%p168) target = $region24
      $region23: #{backbone_forward_pallas.2} parent=11 // pred_region
        _
      $region24: #{backbone_forward_pallas.2} parent=11 // pred_fallthru
        _
      // Predicated region
      $region25: #{backbone_forward_pallas.2} parent=11 // pred_check
        %p171 = pneg %p121
      $region26: #{backbone_forward_pallas.2} parent=11 // pred_check_branch
        %173 = sbr.rel (%p171) target = $region28
      $region27: #{backbone_forward_pallas.2} parent=11 // pred_region
        _
      $region28: #{backbone_forward_pallas.2} parent=11 // pred_fallthru
        _
    $region12: #{backbone_forward_pallas.2} parent=5 // pred_fallthru
      _
    %p174 = scmp.lt.s32.totalorder %s11, 2
    // Predicated region
    $region29: #{backbone_forward_pallas.2} parent=5 // pred_check
      %p175 = pneg %p174
    $region30: #{backbone_forward_pallas.2} parent=5 // pred_check_branch
      %177 = sbr.rel (%p175) target = $region32
    $region31: #{backbone_forward_pallas.2} parent=5 // pred_region
      // Predicated region
      $region33: #{backbone_forward_pallas.2} parent=31 // pred_check
        %p178 = pneg %p31
      $region34: #{backbone_forward_pallas.2} parent=31 // pred_check_branch
        %180 = sbr.rel (%p178) target = $region36
      $region35: #{backbone_forward_pallas.2} parent=31 // pred_region
        %p181 = scmp.lt.s32.totalorder %s11, 1
        %s182 = scalar_select %p181, %s11, 1
        %s183 = smul.addr %s182, 72
        %s184 = smul.addr %s183, 8
        %s185 = scalar_lea.vmem %s0, %s184
      $region36: #{backbone_forward_pallas.2} parent=31 // pred_fallthru
        _
    $region32: #{backbone_forward_pallas.2} parent=5 // pred_fallthru
      _
    %p186 = scmp.le.s32.totalorder 1, %s11
    %p187 = scmp.lt.s32.totalorder %s11, 3
    %p188 = pnand %p186, %p187
    %p189 = pneg %p188
    // Predicated region
    $region37: #{backbone_forward_pallas.2} parent=5 // pred_check
      _
    $region38: #{backbone_forward_pallas.2} parent=5 // pred_check_branch
      %191 = sbr.rel (%p188) target = $region40
    $region39: #{backbone_forward_pallas.2} parent=5 // pred_region
      %s192 = ssub.s32 %s11, 1
      %p193 = scmp.lt.s32.totalorder %s16, 1
      %s194 = scalar_select %p193, %s16, 1
      %s195 = smul.addr %s194, 72
      %s196 = smul.addr %s195, 8
      %s197 = scalar_lea.vmem %s0, %s196
      %p198 = pneg %p37
      %p199 = pneg %p34
      %p200 = pneg %p58
      %p201 = pneg %p55
      %p202 = pneg %p79
      %p203 = pneg %p76
      %p204 = pneg %p100
      %p205 = pneg %p97
      %p206 = pneg %p121
      %p207 = pneg %p118
      %p208 = pneg %p147
      %p209 = pneg %p144
      %p210 = scmp.lt.s32.totalorder %s16, 1
      %s211 = scalar_select %p210, %s16, 1
      %s212 = smul.addr %s211, 8
      %s213 = smul.addr %s212, 4
      %s214 = scalar_lea.vmem %s5, %s213
      %p215 = scmp.lt.s32.totalorder %s16, 1
      %s216 = scalar_select %p215, %s16, 1
      %s217 = smul.addr %s216, 72
      %s218 = smul.addr %s217, 8
      %s219 = scalar_lea.vmem %s0, %s218
      %p220 = scmp.lt.s32.totalorder %s16, 1
      %s221 = scalar_select %p220, %s16, 1
      %s222 = smul.addr %s221, 8
      %s223 = smul.addr %s222, 4
      %s224 = scalar_lea.vmem %s5, %s223
      %226 = vst [vmem:[#allocation2] sm:$0xff] 0.0
      %227 = vst [vmem:[#allocation2 + $0x8] sm:$0x1] 0.0
      %228 = vst [vmem:[#allocation2] sm:$0x1] 0.0
      %229 = vst [vmem:[#allocation2 + $0x10] sm:$0x1] 0.0
      %230 = vst [vmem:[#allocation2 + $0x20] sm:$0x1] 0.0
      %231 = vst [vmem:[#allocation2 + $0x30] sm:$0x1] 0.0
      %232 = vst [vmem:[#allocation2 + $0x40] sm:$0x1] 0.0
      %233 = vst [vmem:[#allocation2 + $0x50] sm:$0x1] 0.0
      %234 = vst [vmem:[#allocation2 + $0x60] sm:$0x1] 0.0
      %235 = vst [vmem:[#allocation2 + $0x70] sm:$0x1] 0.0
      %236 = vst [vmem:[#allocation2 + $0x80] sm:$0x1] 0.0
      %s237 = scalar_lea.vmem [#allocation2], 144
      %238 = vst [vmem:[%s237] sm:$0xff] 0.0
      %239 = vst [vmem:[%s237 + $0x8] sm:$0x1] 0.0
      %240 = vst [vmem:[%s237] sm:$0x1] 0.0
      %241 = vst [vmem:[%s237 + $0x10] sm:$0x1] 0.0
      %242 = vst [vmem:[%s237 + $0x20] sm:$0x1] 0.0
      %243 = vst [vmem:[%s237 + $0x30] sm:$0x1] 0.0
      %244 = vst [vmem:[%s237 + $0x40] sm:$0x1] 0.0
      %245 = vst [vmem:[%s237 + $0x50] sm:$0x1] 0.0
      %246 = vst [vmem:[%s237 + $0x60] sm:$0x1] 0.0
      %247 = vst [vmem:[%s237 + $0x70] sm:$0x1] 0.0
      %248 = vst [vmem:[%s237 + $0x80] sm:$0x1] 0.0
      %s249 = scalar_lea.vmem [#allocation2], 288
      %250 = vst [vmem:[%s249] sm:$0xff] 0.0
      %251 = vst [vmem:[%s249 + $0x8] sm:$0x1] 0.0
      %252 = vst [vmem:[%s249] sm:$0x1] 0.0
      %253 = vst [vmem:[%s249 + $0x10] sm:$0x1] 0.0
      %254 = vst [vmem:[%s249 + $0x20] sm:$0x1] 0.0
      %255 = vst [vmem:[%s249 + $0x30] sm:$0x1] 0.0
      %256 = vst [vmem:[%s249 + $0x40] sm:$0x1] 0.0
      %257 = vst [vmem:[%s249 + $0x50] sm:$0x1] 0.0
      %258 = vst [vmem:[%s249 + $0x60] sm:$0x1] 0.0
      %259 = vst [vmem:[%s249 + $0x70] sm:$0x1] 0.0
      %260 = vst [vmem:[%s249 + $0x80] sm:$0x1] 0.0
      %s261 = scalar_lea.vmem [#allocation2], 432
      %262 = vst [vmem:[%s261] sm:$0xff] 0.0
      %263 = vst [vmem:[%s261 + $0x8] sm:$0x1] 0.0
      %264 = vst [vmem:[%s261] sm:$0x1] 0.0
      %265 = vst [vmem:[%s261 + $0x10] sm:$0x1] 0.0
      %266 = vst [vmem:[%s261 + $0x20] sm:$0x1] 0.0
      %267 = vst [vmem:[%s261 + $0x30] sm:$0x1] 0.0
      %268 = vst [vmem:[%s261 + $0x40] sm:$0x1] 0.0
      %269 = vst [vmem:[%s261 + $0x50] sm:$0x1] 0.0
      %270 = vst [vmem:[%s261 + $0x60] sm:$0x1] 0.0
      %271 = vst [vmem:[%s261 + $0x70] sm:$0x1] 0.0
      %272 = vst [vmem:[%s261 + $0x80] sm:$0x1] 0.0
      %v273 = vld [vmem:[%s219] sm:$0xff]
      %v274 = vld [vmem:[%s219 + $0x10] sm:$0xff]
      %v275 = vld [vmem:[%s219 + $0x20] sm:$0xff]
      %v276 = vld [vmem:[%s219 + $0x30] sm:$0xff]
      %v277 = vld [vmem:[%s219 + $0x40] sm:$0xff]
      %v278 = vld [vmem:[%s219 + $0x50] sm:$0xff]
      %v279 = vld [vmem:[%s219 + $0x60] sm:$0xff]
      %v280 = vld [vmem:[%s219 + $0x70] sm:$0xff]
      %s281 = scalar_lea.vmem %s219, 144
      %v282 = vld [vmem:[%s281] sm:$0xff]
      %v283 = vld [vmem:[%s281 + $0x10] sm:$0xff]
      %v284 = vld [vmem:[%s281 + $0x20] sm:$0xff]
      %v285 = vld [vmem:[%s281 + $0x30] sm:$0xff]
      %v286 = vld [vmem:[%s281 + $0x40] sm:$0xff]
      %v287 = vld [vmem:[%s281 + $0x50] sm:$0xff]
      %v288 = vld [vmem:[%s281 + $0x60] sm:$0xff]
      %v289 = vld [vmem:[%s281 + $0x70] sm:$0xff]
      %v290 = vld [vmem:[%s219 + $0x1] sm:$0xff]
      %v291 = vld [vmem:[%s219 + $0x11] sm:$0xff]
      %v292 = vld [vmem:[%s219 + $0x21] sm:$0xff]
      %v293 = vld [vmem:[%s219 + $0x31] sm:$0xff]
      %v294 = vld [vmem:[%s219 + $0x41] sm:$0xff]
      %v295 = vld [vmem:[%s219 + $0x51] sm:$0xff]
      %v296 = vld [vmem:[%s219 + $0x61] sm:$0xff]
      %v297 = vld [vmem:[%s219 + $0x71] sm:$0xff]
      %s298 = scalar_lea.vmem %s219, 288
      %v299 = vld [vmem:[%s298] sm:$0xff]
      %v300 = vld [vmem:[%s298 + $0x10] sm:$0xff]
      %v301 = vld [vmem:[%s298 + $0x20] sm:$0xff]
      %v302 = vld [vmem:[%s298 + $0x30] sm:$0xff]
      %v303 = vld [vmem:[%s298 + $0x40] sm:$0xff]
      %v304 = vld [vmem:[%s298 + $0x50] sm:$0xff]
      %v305 = vld [vmem:[%s298 + $0x60] sm:$0xff]
      %v306 = vld [vmem:[%s298 + $0x70] sm:$0xff]
      %s307 = scalar_lea.vmem %s219, 432
      %v308 = vld [vmem:[%s307] sm:$0xff]
      %v309 = vld [vmem:[%s307 + $0x10] sm:$0xff]
      %v310 = vld [vmem:[%s307 + $0x20] sm:$0xff]
      %v311 = vld [vmem:[%s307 + $0x30] sm:$0xff]
      %v312 = vld [vmem:[%s307 + $0x40] sm:$0xff]
      %v313 = vld [vmem:[%s307 + $0x50] sm:$0xff]
      %v314 = vld [vmem:[%s307 + $0x60] sm:$0xff]
      %v315 = vld [vmem:[%s307 + $0x70] sm:$0xff]
      %v316 = vld [vmem:[%s298 + $0x1] sm:$0xff]
      %v317 = vld [vmem:[%s298 + $0x11] sm:$0xff]
      %v318 = vld [vmem:[%s298 + $0x21] sm:$0xff]
      %v319 = vld [vmem:[%s298 + $0x31] sm:$0xff]
      %v320 = vld [vmem:[%s298 + $0x41] sm:$0xff]
      %v321 = vld [vmem:[%s298 + $0x51] sm:$0xff]
      %v322 = vld [vmem:[%s298 + $0x61] sm:$0xff]
      %v323 = vld [vmem:[%s298 + $0x71] sm:$0xff]
      %s324 = scalar_lea.vmem %s219, 16
      %v325 = vld [vmem:[%s324] sm:$0xff]
      %v326 = vld [vmem:[%s324 + $0x10] sm:$0xff]
      %v327 = vld [vmem:[%s324 + $0x20] sm:$0xff]
      %v328 = vld [vmem:[%s324 + $0x30] sm:$0xff]
      %v329 = vld [vmem:[%s324 + $0x40] sm:$0xff]
      %v330 = vld [vmem:[%s324 + $0x50] sm:$0xff]
      %v331 = vld [vmem:[%s324 + $0x60] sm:$0xff]
      %v332 = vld [vmem:[%s324 + $0x70] sm:$0xff]
      %s333 = scalar_lea.vmem %s219, 160
      %v334 = vld [vmem:[%s333] sm:$0xff]
      %v335 = vld [vmem:[%s333 + $0x10] sm:$0xff]
      %v336 = vld [vmem:[%s333 + $0x20] sm:$0xff]
      %v337 = vld [vmem:[%s333 + $0x30] sm:$0xff]
      %v338 = vld [vmem:[%s333 + $0x40] sm:$0xff]
      %v339 = vld [vmem:[%s333 + $0x50] sm:$0xff]
      %v340 = vld [vmem:[%s333 + $0x60] sm:$0xff]
      %v341 = vld [vmem:[%s333 + $0x70] sm:$0xff]
      %v342 = vld [vmem:[%s324 + $0x1] sm:$0xff]
      %v343 = vld [vmem:[%s324 + $0x11] sm:$0xff]
      %v344 = vld [vmem:[%s324 + $0x21] sm:$0xff]
      %v345 = vld [vmem:[%s324 + $0x31] sm:$0xff]
      %v346 = vld [vmem:[%s324 + $0x41] sm:$0xff]
      %v347 = vld [vmem:[%s324 + $0x51] sm:$0xff]
      %v348 = vld [vmem:[%s324 + $0x61] sm:$0xff]
      %v349 = vld [vmem:[%s324 + $0x71] sm:$0xff]
      %358 = vrot.lane.b32.xlu0 %v282, 8
      %v359 = vpop.permute.xlu0 %358
      %360 = vrot.lane.b32.xlu0 %v283, 8
      %v361 = vpop.permute.xlu0 %360
      %362 = vrot.lane.b32.xlu0 %v284, 8
      %v363 = vpop.permute.xlu0 %362
      %364 = vrot.lane.b32.xlu0 %v285, 8
      %v365 = vpop.permute.xlu0 %364
      %366 = vrot.lane.b32.xlu0 %v286, 8
      %v367 = vpop.permute.xlu0 %366
      %368 = vrot.lane.b32.xlu0 %v287, 8
      %v369 = vpop.permute.xlu0 %368
      %370 = vrot.lane.b32.xlu0 %v288, 8
      %v371 = vpop.permute.xlu0 %370
      %372 = vrot.lane.b32.xlu0 %v289, 8
      %v373 = vpop.permute.xlu0 %372
      %390 = vrot.lane.b32.xlu0 %v290, 16
      %v391 = vpop.permute.xlu0 %390
      %392 = vrot.lane.b32.xlu0 %v291, 16
      %v393 = vpop.permute.xlu0 %392
      %394 = vrot.lane.b32.xlu0 %v292, 16
      %v395 = vpop.permute.xlu0 %394
      %396 = vrot.lane.b32.xlu0 %v293, 16
      %v397 = vpop.permute.xlu0 %396
      %398 = vrot.lane.b32.xlu0 %v294, 16
      %v399 = vpop.permute.xlu0 %398
      %400 = vrot.lane.b32.xlu0 %v295, 16
      %v401 = vpop.permute.xlu0 %400
      %402 = vrot.lane.b32.xlu0 %v296, 16
      %v403 = vpop.permute.xlu0 %402
      %404 = vrot.lane.b32.xlu0 %v297, 16
      %v405 = vpop.permute.xlu0 %404
      %422 = vrot.lane.b32.xlu0 %v299, 24
      %v423 = vpop.permute.xlu0 %422
      %424 = vrot.lane.b32.xlu0 %v300, 24
      %v425 = vpop.permute.xlu0 %424
      %426 = vrot.lane.b32.xlu0 %v301, 24
      %v427 = vpop.permute.xlu0 %426
      %428 = vrot.lane.b32.xlu0 %v302, 24
      %v429 = vpop.permute.xlu0 %428
      %430 = vrot.lane.b32.xlu0 %v303, 24
      %v431 = vpop.permute.xlu0 %430
      %432 = vrot.lane.b32.xlu0 %v304, 24
      %v433 = vpop.permute.xlu0 %432
      %434 = vrot.lane.b32.xlu0 %v305, 24
      %v435 = vpop.permute.xlu0 %434
      %436 = vrot.lane.b32.xlu0 %v306, 24
      %v437 = vpop.permute.xlu0 %436
      %454 = vrot.lane.b32.xlu0 %v308, 32
      %v455 = vpop.permute.xlu0 %454
      %456 = vrot.lane.b32.xlu0 %v309, 32
      %v457 = vpop.permute.xlu0 %456
      %458 = vrot.lane.b32.xlu0 %v310, 32
      %v459 = vpop.permute.xlu0 %458
      %460 = vrot.lane.b32.xlu0 %v311, 32
      %v461 = vpop.permute.xlu0 %460
      %462 = vrot.lane.b32.xlu0 %v312, 32
      %v463 = vpop.permute.xlu0 %462
      %464 = vrot.lane.b32.xlu0 %v313, 32
      %v465 = vpop.permute.xlu0 %464
      %466 = vrot.lane.b32.xlu0 %v314, 32
      %v467 = vpop.permute.xlu0 %466
      %468 = vrot.lane.b32.xlu0 %v315, 32
      %v469 = vpop.permute.xlu0 %468
      %486 = vrot.lane.b32.xlu0 %v316, 40
      %v487 = vpop.permute.xlu0 %486
      %488 = vrot.lane.b32.xlu0 %v317, 40
      %v489 = vpop.permute.xlu0 %488
      %490 = vrot.lane.b32.xlu0 %v318, 40
      %v491 = vpop.permute.xlu0 %490
      %492 = vrot.lane.b32.xlu0 %v319, 40
      %v493 = vpop.permute.xlu0 %492
      %494 = vrot.lane.b32.xlu0 %v320, 40
      %v495 = vpop.permute.xlu0 %494
      %496 = vrot.lane.b32.xlu0 %v321, 40
      %v497 = vpop.permute.xlu0 %496
      %498 = vrot.lane.b32.xlu0 %v322, 40
      %v499 = vpop.permute.xlu0 %498
      %500 = vrot.lane.b32.xlu0 %v323, 40
      %v501 = vpop.permute.xlu0 %500
      %518 = vrot.lane.b32.xlu0 %v325, 48
      %v519 = vpop.permute.xlu0 %518
      %520 = vrot.lane.b32.xlu0 %v326, 48
      %v521 = vpop.permute.xlu0 %520
      %522 = vrot.lane.b32.xlu0 %v327, 48
      %v523 = vpop.permute.xlu0 %522
      %524 = vrot.lane.b32.xlu0 %v328, 48
      %v525 = vpop.permute.xlu0 %524
      %526 = vrot.lane.b32.xlu0 %v329, 48
      %v527 = vpop.permute.xlu0 %526
      %528 = vrot.lane.b32.xlu0 %v330, 48
      %v529 = vpop.permute.xlu0 %528
      %530 = vrot.lane.b32.xlu0 %v331, 48
      %v531 = vpop.permute.xlu0 %530
      %532 = vrot.lane.b32.xlu0 %v332, 48
      %v533 = vpop.permute.xlu0 %532
      %550 = vrot.lane.b32.xlu0 %v334, 56
      %v551 = vpop.permute.xlu0 %550
      %552 = vrot.lane.b32.xlu0 %v335, 56
      %v553 = vpop.permute.xlu0 %552
      %554 = vrot.lane.b32.xlu0 %v336, 56
      %v555 = vpop.permute.xlu0 %554
      %556 = vrot.lane.b32.xlu0 %v337, 56
      %v557 = vpop.permute.xlu0 %556
      %558 = vrot.lane.b32.xlu0 %v338, 56
      %v559 = vpop.permute.xlu0 %558
      %560 = vrot.lane.b32.xlu0 %v339, 56
      %v561 = vpop.permute.xlu0 %560
      %562 = vrot.lane.b32.xlu0 %v340, 56
      %v563 = vpop.permute.xlu0 %562
      %564 = vrot.lane.b32.xlu0 %v341, 56
      %v565 = vpop.permute.xlu0 %564
      %582 = vrot.lane.b32.xlu0 %v342, 64
      %v583 = vpop.permute.xlu0 %582
      %584 = vrot.lane.b32.xlu0 %v343, 64
      %v585 = vpop.permute.xlu0 %584
      %586 = vrot.lane.b32.xlu0 %v344, 64
      %v587 = vpop.permute.xlu0 %586
      %588 = vrot.lane.b32.xlu0 %v345, 64
      %v589 = vpop.permute.xlu0 %588
      %590 = vrot.lane.b32.xlu0 %v346, 64
      %v591 = vpop.permute.xlu0 %590
      %592 = vrot.lane.b32.xlu0 %v347, 64
      %v593 = vpop.permute.xlu0 %592
      %594 = vrot.lane.b32.xlu0 %v348, 64
      %v595 = vpop.permute.xlu0 %594
      %596 = vrot.lane.b32.xlu0 %v349, 64
      %v597 = vpop.permute.xlu0 %596
      %vm606 = vcmask 64512
      %v607 = vsel %vm606, %v273, %v359
      %v608 = vsel %vm606, %v274, %v361
      %v609 = vsel %vm606, %v275, %v363
      %v610 = vsel %vm606, %v276, %v365
      %v611 = vsel %vm606, %v277, %v367
      %v612 = vsel %vm606, %v278, %v369
      %v613 = vsel %vm606, %v279, %v371
      %v614 = vsel %vm606, %v280, %v373
      %vm615 = vcmask 130048
      %v616 = vsel %vm615, %v607, %v391
      %v617 = vsel %vm615, %v608, %v393
      %v618 = vsel %vm615, %v609, %v395
      %v619 = vsel %vm615, %v610, %v397
      %v620 = vsel %vm615, %v611, %v399
      %v621 = vsel %vm615, %v612, %v401
      %v622 = vsel %vm615, %v613, %v403
      %v623 = vsel %vm615, %v614, %v405
      %vm624 = vcmask 195584
      %v625 = vsel %vm624, %v616, %v423
      %v626 = vsel %vm624, %v617, %v425
      %v627 = vsel %vm624, %v618, %v427
      %v628 = vsel %vm624, %v619, %v429
      %v629 = vsel %vm624, %v620, %v431
      %v630 = vsel %vm624, %v621, %v433
      %v631 = vsel %vm624, %v622, %v435
      %v632 = vsel %vm624, %v623, %v437
      %vm633 = vcmask 261120
      %v634 = vsel %vm633, %v625, %v455
      %v635 = vsel %vm633, %v626, %v457
      %v636 = vsel %vm633, %v627, %v459
      %v637 = vsel %vm633, %v628, %v461
      %v638 = vsel %vm633, %v629, %v463
      %v639 = vsel %vm633, %v630, %v465
      %v640 = vsel %vm633, %v631, %v467
      %v641 = vsel %vm633, %v632, %v469
      %vm642 = vcmask 326656
      %v643 = vsel %vm642, %v634, %v487
      %v644 = vsel %vm642, %v635, %v489
      %v645 = vsel %vm642, %v636, %v491
      %v646 = vsel %vm642, %v637, %v493
      %v647 = vsel %vm642, %v638, %v495
      %v648 = vsel %vm642, %v639, %v497
      %v649 = vsel %vm642, %v640, %v499
      %v650 = vsel %vm642, %v641, %v501
      %vm651 = vcmask 392192
      %v652 = vsel %vm651, %v643, %v519
      %v653 = vsel %vm651, %v644, %v521
      %v654 = vsel %vm651, %v645, %v523
      %v655 = vsel %vm651, %v646, %v525
      %v656 = vsel %vm651, %v647, %v527
      %v657 = vsel %vm651, %v648, %v529
      %v658 = vsel %vm651, %v649, %v531
      %v659 = vsel %vm651, %v650, %v533
      %vm660 = vcmask 457728
      %v661 = vsel %vm660, %v652, %v551
      %v662 = vsel %vm660, %v653, %v553
      %v663 = vsel %vm660, %v654, %v555
      %v664 = vsel %vm660, %v655, %v557
      %v665 = vsel %vm660, %v656, %v559
      %v666 = vsel %vm660, %v657, %v561
      %v667 = vsel %vm660, %v658, %v563
      %v668 = vsel %vm660, %v659, %v565
      %vm669 = vcmask 523264
      %v670 = vsel %vm669, %v661, %v583
      %v671 = vsel %vm669, %v662, %v585
      %v672 = vsel %vm669, %v663, %v587
      %v673 = vsel %vm669, %v664, %v589
      %v674 = vsel %vm669, %v665, %v591
      %v675 = vsel %vm669, %v666, %v593
      %v676 = vsel %vm669, %v667, %v595
      %v677 = vsel %vm669, %v668, %v597
      %v678 = vpack.c.bf16 %v671, %v670
      %v679 = vpack.c.bf16 %v673, %v672
      %v680 = vpack.c.bf16 %v675, %v674
      %v681 = vpack.c.bf16 %v677, %v676
      %v682 = vld [vmem:[%s1] sm:$0xf]
      %v683 = vld [vmem:[%s1 + $0x4] sm:$0xf]
      %v684 = vld [vmem:[%s1 + $0x8] sm:$0xf]
      %v685 = vld [vmem:[%s1 + $0xc] sm:$0xf]
      %v686 = vld [vmem:[%s1 + $0x10] sm:$0xf]
      %v687 = vld [vmem:[%s1 + $0x14] sm:$0xf]
      %v688 = vld [vmem:[%s1 + $0x18] sm:$0xf]
      %v689 = vld [vmem:[%s1 + $0x1c] sm:$0xf]
      %v690 = vld [vmem:[%s1 + $0x20] sm:$0xf]
      %v691 = vld [vmem:[%s2] sm:$0x1]
      %v693 = vlaneseq
      %v694 = vshrl.u32 %v693, 7
      %v695 = vsub.s32 0, %v694
      %v696 = vrot.slane %v691, %v695
      %v707 = vunpack.c.l.b16 %v682
      %v708 = vunpack.c.l.b16 %v683
      %v709 = vunpack.c.l.b16 %v684
      %v710 = vunpack.c.l.b16 %v685
      %v711 = vunpack.c.l.b16 %v686
      %v712 = vunpack.c.l.b16 %v687
      %v713 = vunpack.c.l.b16 %v688
      %v714 = vunpack.c.l.b16 %v689
      %v715 = vunpack.c.l.b16 %v690
      %v716 = vpack.c.b16 %v708, %v707
      %v717 = vpack.c.b16 %v710, %v709
      %v718 = vpack.c.b16 %v712, %v711
      %v719 = vpack.c.b16 %v714, %v713
      %v720 = vpack.c.b16 %v715, %v715
      %vm725 = vcmask 588800
      %v727 = vsel %vm725, %v678, 0
      %v730 = vsel %vm725, %v679, 0
      %v733 = vsel %vm725, %v680, 0
      %v736 = vsel %vm725, %v681, 0
      %vm738 = vcmask 1043456
      %v740 = vsel %vm738, %v720, 0
      %742 = vmatprep.subr.bf16.mxu0 0
      %743 = vmatpush1.bf16.msra.mxu0 %v716
      %744 = vmatprep.subr.bf16.mxu0 0
      %745 = vmatpush1.bf16.msra.mxu0 %v717
      %746 = vmatprep.subr.bf16.mxu0 0
      %747 = vmatpush1.bf16.msra.mxu0 %v718
      %748 = vmatprep.subr.bf16.mxu0 0
      %749 = vmatpush1.bf16.msra.mxu0 %v719
      %750 = vmatprep.subr.bf16.mxu0 0
      %751 = vmatpush1.bf16.msra.mxu0 %v740
      %752 = vmatprep.subr.bf16.mxu0 0
      %753 = vmatpush1.bf16.msra.mxu0 0
      %754 = vmatprep.subr.bf16.mxu0 0
      %755 = vmatpush1.bf16.msra.mxu0 0
      %756 = vmatprep.subr.bf16.mxu0 0
      %757 = vmatpush1.bf16.msra.mxu0 0
      %758 = vmatprep.subr.bf16.mxu0 0
      %759 = vmatpush1.bf16.msra.mxu0 0
      %760 = vmatprep.subr.bf16.mxu0 0
      %761 = vmatpush1.bf16.msra.mxu0 0
      %762 = vmatprep.subr.bf16.mxu0 0
      %763 = vmatpush1.bf16.msra.mxu0 0
      %764 = vmatprep.subr.bf16.mxu0 0
      %765 = vmatpush1.bf16.msra.mxu0 0
      %766 = vmatprep.subr.bf16.mxu0 0
      %767 = vmatpush1.bf16.msra.mxu0 0
      %768 = vmatprep.subr.bf16.mxu0 0
      %769 = vmatpush1.bf16.msra.mxu0 0
      %770 = vmatprep.subr.bf16.mxu0 0
      %771 = vmatpush1.bf16.msra.mxu0 0
      %772 = vmatprep.subr.bf16.mxu0 0
      %773 = vmatpush1.bf16.msra.mxu0 0
      %774 = vmatprep.mubr.bf16.mxu0 0
      %775 = vmatmul.mubr.bf16.gmra.mrb[0].mxu0 %v727
      %v776 = vpop.f32.mrb[0].mxu0
      %v777 = vadd.f32 %v696, %v776
      %v778 = vpop.f32.mrb[0].mxu0
      %v779 = vpop.f32.mrb[0].mxu0
      %v780 = vadd.f32 %v696, %v779
      %v781 = vpop.f32.mrb[0].mxu0
      %782 = vmatprep.mubr.bf16.mxu0 0
      %783 = vmatmul.mubr.bf16.gmra.mrb[0].mxu0 %v730
      %v784 = vpop.f32.mrb[0].mxu0
      %v785 = vadd.f32 %v696, %v784
      %v786 = vpop.f32.mrb[0].mxu0
      %v787 = vpop.f32.mrb[0].mxu0
      %v788 = vadd.f32 %v696, %v787
      %v789 = vpop.f32.mrb[0].mxu0
      %790 = vmatprep.mubr.bf16.mxu0 0
      %791 = vmatmul.mubr.bf16.gmra.mrb[0].mxu0 %v733
      %v792 = vpop.f32.mrb[0].mxu0
      %v793 = vadd.f32 %v696, %v792
      %v794 = vpop.f32.mrb[0].mxu0
      %v795 = vpop.f32.mrb[0].mxu0
      %v796 = vadd.f32 %v696, %v795
      %v797 = vpop.f32.mrb[0].mxu0
      %798 = vmatprep.mubr.bf16.mxu0 0
      %799 = vmatmul.mubr.bf16.gmra.mrb[0].mxu0 %v736
      %v800 = vpop.f32.mrb[0].mxu0
      %v801 = vadd.f32 %v696, %v800
      %v802 = vpop.f32.mrb[0].mxu0
      %v803 = vpop.f32.mrb[0].mxu0
      %v804 = vadd.f32 %v696, %v803
      %v805 = vpop.f32.mrb[0].mxu0
      %806 = vdwg.mxu0
      %v807 = vxor.u32 %v777, 2147483648
      %v808 = vxor.u32 %v780, 2147483648
      %v809 = vxor.u32 %v785, 2147483648
      %v810 = vxor.u32 %v788, 2147483648
      %v811 = vxor.u32 %v793, 2147483648
      %v812 = vxor.u32 %v796, 2147483648
      %v813 = vxor.u32 %v801, 2147483648
      %v814 = vxor.u32 %v804, 2147483648
      %v815 = vmul.f32 %v807, 1.442695
      %v816 = vpow.pop %v815
      %v817 = vmul.f32 %v808, 1.442695
      %v818 = vpow.pop %v817
      %v819 = vmul.f32 %v809, 1.442695
      %v820 = vpow.pop %v819
      %v821 = vmul.f32 %v810, 1.442695
      %v822 = vpow.pop %v821
      %v823 = vmul.f32 %v811, 1.442695
      %v824 = vpow.pop %v823
      %v825 = vmul.f32 %v812, 1.442695
      %v826 = vpow.pop %v825
      %v827 = vmul.f32 %v813, 1.442695
      %v828 = vpow.pop %v827
      %v829 = vmul.f32 %v814, 1.442695
      %v830 = vpow.pop %v829
      %v831 = vadd.f32 %v816, 1.0
      %v832 = vadd.f32 %v818, 1.0
      %v833 = vadd.f32 %v820, 1.0
      %v834 = vadd.f32 %v822, 1.0
      %v835 = vadd.f32 %v824, 1.0
      %v836 = vadd.f32 %v826, 1.0
      %v837 = vadd.f32 %v828, 1.0
      %v838 = vadd.f32 %v830, 1.0
      %v839 = vrcp.pop %v831
      %v840 = vmul.f32 1.0, %v839
      %v841 = vrcp.pop %v832
      %v842 = vmul.f32 1.0, %v841
      %v843 = vrcp.pop %v833
      %v844 = vmul.f32 1.0, %v843
      %v845 = vrcp.pop %v834
      %v846 = vmul.f32 1.0, %v845
      %v847 = vrcp.pop %v835
      %v848 = vmul.f32 1.0, %v847
      %v849 = vrcp.pop %v836
      %v850 = vmul.f32 1.0, %v849
      %v851 = vrcp.pop %v837
      %v852 = vmul.f32 1.0, %v851
      %v853 = vrcp.pop %v838
      %v854 = vmul.f32 1.0, %v853
      %v855 = vmul.f32 %v777, %v840
      %v856 = vmul.f32 %v780, %v842
      %v857 = vmul.f32 %v785, %v844
      %v858 = vmul.f32 %v788, %v846
      %v859 = vmul.f32 %v793, %v848
      %v860 = vmul.f32 %v796, %v850
      %v861 = vmul.f32 %v801, %v852
      %v862 = vmul.f32 %v804, %v854
      %s863 = scalar_lea.vmem [#allocation2], 16
      %864 = vst [vmem:[%s863 + $0x1] sm:$0xff] %v855
      %865 = vst [vmem:[%s863 + $0x11] sm:$0xff] %v856
      %866 = vst [vmem:[%s863 + $0x21] sm:$0xff] %v857
      %867 = vst [vmem:[%s863 + $0x31] sm:$0xff] %v858
      %868 = vst [vmem:[%s863 + $0x41] sm:$0xff] %v859
      %869 = vst [vmem:[%s863 + $0x51] sm:$0xff] %v860
      %870 = vst [vmem:[%s863 + $0x61] sm:$0xff] %v861
      %871 = vst [vmem:[%s863 + $0x71] sm:$0xff] %v862
      %v872 = vld [vmem:[%s281] sm:$0xff]
      %v873 = vld [vmem:[%s281 + $0x10] sm:$0xff]
      %v874 = vld [vmem:[%s281 + $0x20] sm:$0xff]
      %v875 = vld [vmem:[%s281 + $0x30] sm:$0xff]
      %v876 = vld [vmem:[%s281 + $0x40] sm:$0xff]
      %v877 = vld [vmem:[%s281 + $0x50] sm:$0xff]
      %v878 = vld [vmem:[%s281 + $0x60] sm:$0xff]
      %v879 = vld [vmem:[%s281 + $0x70] sm:$0xff]
      %v880 = vld [vmem:[%s219 + $0x1] sm:$0xff]
      %v881 = vld [vmem:[%s219 + $0x11] sm:$0xff]
      %v882 = vld [vmem:[%s219 + $0x21] sm:$0xff]
      %v883 = vld [vmem:[%s219 + $0x31] sm:$0xff]
      %v884 = vld [vmem:[%s219 + $0x41] sm:$0xff]
      %v885 = vld [vmem:[%s219 + $0x51] sm:$0xff]
      %v886 = vld [vmem:[%s219 + $0x61] sm:$0xff]
      %v887 = vld [vmem:[%s219 + $0x71] sm:$0xff]
      %v888 = vld [vmem:[%s281 + $0x1] sm:$0xff]
      %v889 = vld [vmem:[%s281 + $0x11] sm:$0xff]
      %v890 = vld [vmem:[%s281 + $0x21] sm:$0xff]
      %v891 = vld [vmem:[%s281 + $0x31] sm:$0xff]
      %v892 = vld [vmem:[%s281 + $0x41] sm:$0xff]
      %v893 = vld [vmem:[%s281 + $0x51] sm:$0xff]
      %v894 = vld [vmem:[%s281 + $0x61] sm:$0xff]
      %v895 = vld [vmem:[%s281 + $0x71] sm:$0xff]
      %v896 = vld [vmem:[%s307] sm:$0xff]
      %v897 = vld [vmem:[%s307 + $0x10] sm:$0xff]
      %v898 = vld [vmem:[%s307 + $0x20] sm:$0xff]
      %v899 = vld [vmem:[%s307 + $0x30] sm:$0xff]
      %v900 = vld [vmem:[%s307 + $0x40] sm:$0xff]
      %v901 = vld [vmem:[%s307 + $0x50] sm:$0xff]
      %v902 = vld [vmem:[%s307 + $0x60] sm:$0xff]
      %v903 = vld [vmem:[%s307 + $0x70] sm:$0xff]
      %v904 = vld [vmem:[%s298 + $0x1] sm:$0xff]
      %v905 = vld [vmem:[%s298 + $0x11] sm:$0xff]
      %v906 = vld [vmem:[%s298 + $0x21] sm:$0xff]
      %v907 = vld [vmem:[%s298 + $0x31] sm:$0xff]
      %v908 = vld [vmem:[%s298 + $0x41] sm:$0xff]
      %v909 = vld [vmem:[%s298 + $0x51] sm:$0xff]
      %v910 = vld [vmem:[%s298 + $0x61] sm:$0xff]
      %v911 = vld [vmem:[%s298 + $0x71] sm:$0xff]
      %v912 = vld [vmem:[%s307 + $0x1] sm:$0xff]
      %v913 = vld [vmem:[%s307 + $0x11] sm:$0xff]
      %v914 = vld [vmem:[%s307 + $0x21] sm:$0xff]
      %v915 = vld [vmem:[%s307 + $0x31] sm:$0xff]
      %v916 = vld [vmem:[%s307 + $0x41] sm:$0xff]
      %v917 = vld [vmem:[%s307 + $0x51] sm:$0xff]
      %v918 = vld [vmem:[%s307 + $0x61] sm:$0xff]
      %v919 = vld [vmem:[%s307 + $0x71] sm:$0xff]
      %v920 = vld [vmem:[%s333] sm:$0xff]
      %v921 = vld [vmem:[%s333 + $0x10] sm:$0xff]
      %v922 = vld [vmem:[%s333 + $0x20] sm:$0xff]
      %v923 = vld [vmem:[%s333 + $0x30] sm:$0xff]
      %v924 = vld [vmem:[%s333 + $0x40] sm:$0xff]
      %v925 = vld [vmem:[%s333 + $0x50] sm:$0xff]
      %v926 = vld [vmem:[%s333 + $0x60] sm:$0xff]
      %v927 = vld [vmem:[%s333 + $0x70] sm:$0xff]
      %v928 = vld [vmem:[%s324 + $0x1] sm:$0xff]
      %v929 = vld [vmem:[%s324 + $0x11] sm:$0xff]
      %v930 = vld [vmem:[%s324 + $0x21] sm:$0xff]
      %v931 = vld [vmem:[%s324 + $0x31] sm:$0xff]
      %v932 = vld [vmem:[%s324 + $0x41] sm:$0xff]
      %v933 = vld [vmem:[%s324 + $0x51] sm:$0xff]
      %v934 = vld [vmem:[%s324 + $0x61] sm:$0xff]
      %v935 = vld [vmem:[%s324 + $0x71] sm:$0xff]
      %v936 = vld [vmem:[%s333 + $0x1] sm:$0xff]
      %v937 = vld [vmem:[%s333 + $0x11] sm:$0xff]
      %v938 = vld [vmem:[%s333 + $0x21] sm:$0xff]
      %v939 = vld [vmem:[%s333 + $0x31] sm:$0xff]
      %v940 = vld [vmem:[%s333 + $0x41] sm:$0xff]
      %v941 = vld [vmem:[%s333 + $0x51] sm:$0xff]
      %v942 = vld [vmem:[%s333 + $0x61] sm:$0xff]
      %v943 = vld [vmem:[%s333 + $0x71] sm:$0xff]
      %952 = vrot.lane.b32.xlu0 %v880, 8
      %v953 = vpop.permute.xlu0 %952
      %954 = vrot.lane.b32.xlu0 %v881, 8
      %v955 = vpop.permute.xlu0 %954
      %956 = vrot.lane.b32.xlu0 %v882, 8
      %v957 = vpop.permute.xlu0 %956
      %958 = vrot.lane.b32.xlu0 %v883, 8
      %v959 = vpop.permute.xlu0 %958
      %960 = vrot.lane.b32.xlu0 %v884, 8
      %v961 = vpop.permute.xlu0 %960
      %962 = vrot.lane.b32.xlu0 %v885, 8
      %v963 = vpop.permute.xlu0 %962
      %964 = vrot.lane.b32.xlu0 %v886, 8
      %v965 = vpop.permute.xlu0 %964
      %966 = vrot.lane.b32.xlu0 %v887, 8
      %v967 = vpop.permute.xlu0 %966
      %984 = vrot.lane.b32.xlu0 %v888, 16
      %v985 = vpop.permute.xlu0 %984
      %986 = vrot.lane.b32.xlu0 %v889, 16
      %v987 = vpop.permute.xlu0 %986
      %988 = vrot.lane.b32.xlu0 %v890, 16
      %v989 = vpop.permute.xlu0 %988
      %990 = vrot.lane.b32.xlu0 %v891, 16
      %v991 = vpop.permute.xlu0 %990
      %992 = vrot.lane.b32.xlu0 %v892, 16
      %v993 = vpop.permute.xlu0 %992
      %994 = vrot.lane.b32.xlu0 %v893, 16
      %v995 = vpop.permute.xlu0 %994
      %996 = vrot.lane.b32.xlu0 %v894, 16
      %v997 = vpop.permute.xlu0 %996
      %998 = vrot.lane.b32.xlu0 %v895, 16
      %v999 = vpop.permute.xlu0 %998
      %1016 = vrot.lane.b32.xlu0 %v896, 24
      %v1017 = vpop.permute.xlu0 %1016
      %1018 = vrot.lane.b32.xlu0 %v897, 24
      %v1019 = vpop.permute.xlu0 %1018
      %1020 = vrot.lane.b32.xlu0 %v898, 24
      %v1021 = vpop.permute.xlu0 %1020
      %1022 = vrot.lane.b32.xlu0 %v899, 24
      %v1023 = vpop.permute.xlu0 %1022
      %1024 = vrot.lane.b32.xlu0 %v900, 24
      %v1025 = vpop.permute.xlu0 %1024
      %1026 = vrot.lane.b32.xlu0 %v901, 24
      %v1027 = vpop.permute.xlu0 %1026
      %1028 = vrot.lane.b32.xlu0 %v902, 24
      %v1029 = vpop.permute.xlu0 %1028
      %1030 = vrot.lane.b32.xlu0 %v903, 24
      %v1031 = vpop.permute.xlu0 %1030
      %1048 = vrot.lane.b32.xlu0 %v904, 32
      %v1049 = vpop.permute.xlu0 %1048
      %1050 = vrot.lane.b32.xlu0 %v905, 32
      %v1051 = vpop.permute.xlu0 %1050
      %1052 = vrot.lane.b32.xlu0 %v906, 32
      %v1053 = vpop.permute.xlu0 %1052
      %1054 = vrot.lane.b32.xlu0 %v907, 32
      %v1055 = vpop.permute.xlu0 %1054
      %1056 = vrot.lane.b32.xlu0 %v908, 32
      %v1057 = vpop.permute.xlu0 %1056
      %1058 = vrot.lane.b32.xlu0 %v909, 32
      %v1059 = vpop.permute.xlu0 %1058
      %1060 = vrot.lane.b32.xlu0 %v910, 32
      %v1061 = vpop.permute.xlu0 %1060
      %1062 = vrot.lane.b32.xlu0 %v911, 32
      %v1063 = vpop.permute.xlu0 %1062
      %1080 = vrot.lane.b32.xlu0 %v912, 40
      %v1081 = vpop.permute.xlu0 %1080
      %1082 = vrot.lane.b32.xlu0 %v913, 40
      %v1083 = vpop.permute.xlu0 %1082
      %1084 = vrot.lane.b32.xlu0 %v914, 40
      %v1085 = vpop.permute.xlu0 %1084
      %1086 = vrot.lane.b32.xlu0 %v915, 40
      %v1087 = vpop.permute.xlu0 %1086
      %1088 = vrot.lane.b32.xlu0 %v916, 40
      %v1089 = vpop.permute.xlu0 %1088
      %1090 = vrot.lane.b32.xlu0 %v917, 40
      %v1091 = vpop.permute.xlu0 %1090
      %1092 = vrot.lane.b32.xlu0 %v918, 40
      %v1093 = vpop.permute.xlu0 %1092
      %1094 = vrot.lane.b32.xlu0 %v919, 40
      %v1095 = vpop.permute.xlu0 %1094
      %1112 = vrot.lane.b32.xlu0 %v920, 48
      %v1113 = vpop.permute.xlu0 %1112
      %1114 = vrot.lane.b32.xlu0 %v921, 48
      %v1115 = vpop.permute.xlu0 %1114
      %1116 = vrot.lane.b32.xlu0 %v922, 48
      %v1117 = vpop.permute.xlu0 %1116
      %1118 = vrot.lane.b32.xlu0 %v923, 48
      %v1119 = vpop.permute.xlu0 %1118
      %1120 = vrot.lane.b32.xlu0 %v924, 48
      %v1121 = vpop.permute.xlu0 %1120
      %1122 = vrot.lane.b32.xlu0 %v925, 48
      %v1123 = vpop.permute.xlu0 %1122
      %1124 = vrot.lane.b32.xlu0 %v926, 48
      %v1125 = vpop.permute.xlu0 %1124
      %1126 = vrot.lane.b32.xlu0 %v927, 48
      %v1127 = vpop.permute.xlu0 %1126
      %1144 = vrot.lane.b32.xlu0 %v928, 56
      %v1145 = vpop.permute.xlu0 %1144
      %1146 = vrot.lane.b32.xlu0 %v929, 56
      %v1147 = vpop.permute.xlu0 %1146
      %1148 = vrot.lane.b32.xlu0 %v930, 56
      %v1149 = vpop.permute.xlu0 %1148
      %1150 = vrot.lane.b32.xlu0 %v931, 56
      %v1151 = vpop.permute.xlu0 %1150
      %1152 = vrot.lane.b32.xlu0 %v932, 56
      %v1153 = vpop.permute.xlu0 %1152
      %1154 = vrot.lane.b32.xlu0 %v933, 56
      %v1155 = vpop.permute.xlu0 %1154
      %1156 = vrot.lane.b32.xlu0 %v934, 56
      %v1157 = vpop.permute.xlu0 %1156
      %1158 = vrot.lane.b32.xlu0 %v935, 56
      %v1159 = vpop.permute.xlu0 %1158
      %1176 = vrot.lane.b32.xlu0 %v936, 64
      %v1177 = vpop.permute.xlu0 %1176
      %1178 = vrot.lane.b32.xlu0 %v937, 64
      %v1179 = vpop.permute.xlu0 %1178
      %1180 = vrot.lane.b32.xlu0 %v938, 64
      %v1181 = vpop.permute.xlu0 %1180
      %1182 = vrot.lane.b32.xlu0 %v939, 64
      %v1183 = vpop.permute.xlu0 %1182
      %1184 = vrot.lane.b32.xlu0 %v940, 64
      %v1185 = vpop.permute.xlu0 %1184
      %1186 = vrot.lane.b32.xlu0 %v941, 64
      %v1187 = vpop.permute.xlu0 %1186
      %1188 = vrot.lane.b32.xlu0 %v942, 64
      %v1189 = vpop.permute.xlu0 %1188
      %1190 = vrot.lane.b32.xlu0 %v943, 64
      %v1191 = vpop.permute.xlu0 %1190
      %v1200 = vsel %vm606, %v872, %v953
      %v1201 = vsel %vm606, %v873, %v955
      %v1202 = vsel %vm606, %v874, %v957
      %v1203 = vsel %vm606, %v875, %v959
      %v1204 = vsel %vm606, %v876, %v961
      %v1205 = vsel %vm606, %v877, %v963
      %v1206 = vsel %vm606, %v878, %v965
      %v1207 = vsel %vm606, %v879, %v967
      %v1208 = vsel %vm615, %v1200, %v985
      %v1209 = vsel %vm615, %v1201, %v987
      %v1210 = vsel %vm615, %v1202, %v989
      %v1211 = vsel %vm615, %v1203, %v991
      %v1212 = vsel %vm615, %v1204, %v993
      %v1213 = vsel %vm615, %v1205, %v995
      %v1214 = vsel %vm615, %v1206, %v997
      %v1215 = vsel %vm615, %v1207, %v999
      %v1216 = vsel %vm624, %v1208, %v1017
      %v1217 = vsel %vm624, %v1209, %v1019
      %v1218 = vsel %vm624, %v1210, %v1021
      %v1219 = vsel %vm624, %v1211, %v1023
      %v1220 = vsel %vm624, %v1212, %v1025
      %v1221 = vsel %vm624, %v1213, %v1027
      %v1222 = vsel %vm624, %v1214, %v1029
      %v1223 = vsel %vm624, %v1215, %v1031
      %v1224 = vsel %vm633, %v1216, %v1049
      %v1225 = vsel %vm633, %v1217, %v1051
      %v1226 = vsel %vm633, %v1218, %v1053
      %v1227 = vsel %vm633, %v1219, %v1055
      %v1228 = vsel %vm633, %v1220, %v1057
      %v1229 = vsel %vm633, %v1221, %v1059
      %v1230 = vsel %vm633, %v1222, %v1061
      %v1231 = vsel %vm633, %v1223, %v1063
      %v1232 = vsel %vm642, %v1224, %v1081
      %v1233 = vsel %vm642, %v1225, %v1083
      %v1234 = vsel %vm642, %v1226, %v1085
      %v1235 = vsel %vm642, %v1227, %v1087
      %v1236 = vsel %vm642, %v1228, %v1089
      %v1237 = vsel %vm642, %v1229, %v1091
      %v1238 = vsel %vm642, %v1230, %v1093
      %v1239 = vsel %vm642, %v1231, %v1095
      %v1240 = vsel %vm651, %v1232, %v1113
      %v1241 = vsel %vm651, %v1233, %v1115
      %v1242 = vsel %vm651, %v1234, %v1117
      %v1243 = vsel %vm651, %v1235, %v1119
      %v1244 = vsel %vm651, %v1236, %v1121
      %v1245 = vsel %vm651, %v1237, %v1123
      %v1246 = vsel %vm651, %v1238, %v1125
      %v1247 = vsel %vm651, %v1239, %v1127
      %v1248 = vsel %vm660, %v1240, %v1145
      %v1249 = vsel %vm660, %v1241, %v1147
      %v1250 = vsel %vm660, %v1242, %v1149
      %v1251 = vsel %vm660, %v1243, %v1151
      %v1252 = vsel %vm660, %v1244, %v1153
      %v1253 = vsel %vm660, %v1245, %v1155
      %v1254 = vsel %vm660, %v1246, %v1157
      %v1255 = vsel %vm660, %v1247, %v1159
      %v1256 = vsel %vm669, %v1248, %v1177
      %v1257 = vsel %vm669, %v1249, %v1179
      %v1258 = vsel %vm669, %v1250, %v1181
      %v1259 = vsel %vm669, %v1251, %v1183
      %v1260 = vsel %vm669, %v1252, %v1185
      %v1261 = vsel %vm669, %v1253, %v1187
      %v1262 = vsel %vm669, %v1254, %v1189
      %v1263 = vsel %vm669, %v1255, %v1191
      %v1264 = vpack.c.bf16 %v1257, %v1256
      %v1265 = vpack.c.bf16 %v1259, %v1258
      %v1266 = vpack.c.bf16 %v1261, %v1260
      %v1267 = vpack.c.bf16 %v1263, %v1262
      %v1268 = vld [vmem:[%s1] sm:$0xf]
      %v1269 = vld [vmem:[%s1 + $0x4] sm:$0xf]
      %v1270 = vld [vmem:[%s1 + $0x8] sm:$0xf]
      %v1271 = vld [vmem:[%s1 + $0xc] sm:$0xf]
      %v1272 = vld [vmem:[%s1 + $0x10] sm:$0xf]
      %v1273 = vld [vmem:[%s1 + $0x14] sm:$0xf]
      %v1274 = vld [vmem:[%s1 + $0x18] sm:$0xf]
      %v1275 = vld [vmem:[%s1 + $0x1c] sm:$0xf]
      %v1276 = vld [vmem:[%s1 + $0x20] sm:$0xf]
      %v1277 = vld [vmem:[%s2] sm:$0x1]
      %v1279 = vlaneseq
      %v1280 = vshrl.u32 %v1279, 7
      %v1281 = vsub.s32 0, %v1280
      %v1282 = vrot.slane %v1277, %v1281
      %v1293 = vunpack.c.l.b16 %v1268
      %v1294 = vunpack.c.l.b16 %v1269
      %v1295 = vunpack.c.l.b16 %v1270
      %v1296 = vunpack.c.l.b16 %v1271
      %v1297 = vunpack.c.l.b16 %v1272
      %v1298 = vunpack.c.l.b16 %v1273
      %v1299 = vunpack.c.l.b16 %v1274
      %v1300 = vunpack.c.l.b16 %v1275
      %v1301 = vunpack.c.l.b16 %v1276
      %v1302 = vpack.c.b16 %v1294, %v1293
      %v1303 = vpack.c.b16 %v1296, %v1295
      %v1304 = vpack.c.b16 %v1298, %v1297
      %v1305 = vpack.c.b16 %v1300, %v1299
      %v1306 = vpack.c.b16 %v1301, %v1301
      %v1312 = vsel %vm725, %v1264, 0
      %v1315 = vsel %vm725, %v1265, 0
      %v1318 = vsel %vm725, %v1266, 0
      %v1321 = vsel %vm725, %v1267, 0
      %v1324 = vsel %vm738, %v1306, 0
      %1326 = vmatprep.subr.bf16.mxu0 0
      %1327 = vmatpush1.bf16.msra.mxu0 %v1302
      %1328 = vmatprep.subr.bf16.mxu0 0
      %1329 = vmatpush1.bf16.msra.mxu0 %v1303
      %1330 = vmatprep.subr.bf16.mxu0 0
      %1331 = vmatpush1.bf16.msra.mxu0 %v1304
      %1332 = vmatprep.subr.bf16.mxu0 0
      %1333 = vmatpush1.bf16.msra.mxu0 %v1305
      %1334 = vmatprep.subr.bf16.mxu0 0
      %1335 = vmatpush1.bf16.msra.mxu0 %v1324
      %1336 = vmatprep.subr.bf16.mxu0 0
      %1337 = vmatpush1.bf16.msra.mxu0 0
      %1338 = vmatprep.subr.bf16.mxu0 0
      %1339 = vmatpush1.bf16.msra.mxu0 0
      %1340 = vmatprep.subr.bf16.mxu0 0
      %1341 = vmatpush1.bf16.msra.mxu0 0
      %1342 = vmatprep.subr.bf16.mxu0 0
      %1343 = vmatpush1.bf16.msra.mxu0 0
      %1344 = vmatprep.subr.bf16.mxu0 0
      %1345 = vmatpush1.bf16.msra.mxu0 0
      %1346 = vmatprep.subr.bf16.mxu0 0
      %1347 = vmatpush1.bf16.msra.mxu0 0
      %1348 = vmatprep.subr.bf16.mxu0 0
      %1349 = vmatpush1.bf16.msra.mxu0 0
      %1350 = vmatprep.subr.bf16.mxu0 0
      %1351 = vmatpush1.bf16.msra.mxu0 0
      %1352 = vmatprep.subr.bf16.mxu0 0
      %1353 = vmatpush1.bf16.msra.mxu0 0
      %1354 = vmatprep.subr.bf16.mxu0 0
      %1355 = vmatpush1.bf16.msra.mxu0 0
      %1356 = vmatprep.subr.bf16.mxu0 0
      %1357 = vmatpush1.bf16.msra.mxu0 0
      %1358 = vmatprep.mubr.bf16.mxu0 0
      %1359 = vmatmul.mubr.bf16.gmra.mrb[0].mxu0 %v1312
      %v1360 = vpop.f32.mrb[0].mxu0
      %v1361 = vadd.f32 %v1282, %v1360
      %v1362 = vpop.f32.mrb[0].mxu0
      %v1363 = vpop.f32.mrb[0].mxu0
      %v1364 = vadd.f32 %v1282, %v1363
      %v1365 = vpop.f32.mrb[0].mxu0
      %1366 = vmatprep.mubr.bf16.mxu0 0
      %1367 = vmatmul.mubr.bf16.gmra.mrb[0].mxu0 %v1315
      %v1368 = vpop.f32.mrb[0].mxu0
      %v1369 = vadd.f32 %v1282, %v1368
      %v1370 = vpop.f32.mrb[0].mxu0
      %v1371 = vpop.f32.mrb[0].mxu0
      %v1372 = vadd.f32 %v1282, %v1371
      %v1373 = vpop.f32.mrb[0].mxu0
      %1374 = vmatprep.mubr.bf16.mxu0 0
      %1375 = vmatmul.mubr.bf16.gmra.mrb[0].mxu0 %v1318
      %v1376 = vpop.f32.mrb[0].mxu0
      %v1377 = vadd.f32 %v1282, %v1376
      %v1378 = vpop.f32.mrb[0].mxu0
      %v1379 = vpop.f32.mrb[0].mxu0
      %v1380 = vadd.f32 %v1282, %v1379
      %v1381 = vpop.f32.mrb[0].mxu0
      %1382 = vmatprep.mubr.bf16.mxu0 0
      %1383 = vmatmul.mubr.bf16.gmra.mrb[0].mxu0 %v1321
      %v1384 = vpop.f32.mrb[0].mxu0
      %v1385 = vadd.f32 %v1282, %v1384
      %v1386 = vpop.f32.mrb[0].mxu0
      %v1387 = vpop.f32.mrb[0].mxu0
      %v1388 = vadd.f32 %v1282, %v1387
      %v1389 = vpop.f32.mrb[0].mxu0
      %1390 = vdwg.mxu0
      %v1391 = vxor.u32 %v1361, 2147483648
      %v1392 = vxor.u32 %v1364, 2147483648
      %v1393 = vxor.u32 %v1369, 2147483648
      %v1394 = vxor.u32 %v1372, 2147483648
      %v1395 = vxor.u32 %v1377, 2147483648
      %v1396 = vxor.u32 %v1380, 2147483648
      %v1397 = vxor.u32 %v1385, 2147483648
      %v1398 = vxor.u32 %v1388, 2147483648
      %v1399 = vmul.f32 %v1391, 1.442695
      %v1400 = vpow.pop %v1399
      %v1401 = vmul.f32 %v1392, 1.442695
      %v1402 = vpow.pop %v1401
      %v1403 = vmul.f32 %v1393, 1.442695
      %v1404 = vpow.pop %v1403
      %v1405 = vmul.f32 %v1394, 1.442695
      %v1406 = vpow.pop %v1405
      %v1407 = vmul.f32 %v1395, 1.442695
      %v1408 = vpow.pop %v1407
      %v1409 = vmul.f32 %v1396, 1.442695
      %v1410 = vpow.pop %v1409
      %v1411 = vmul.f32 %v1397, 1.442695
      %v1412 = vpow.pop %v1411
      %v1413 = vmul.f32 %v1398, 1.442695
      %v1414 = vpow.pop %v1413
      %v1415 = vadd.f32 %v1400, 1.0
      %v1416 = vadd.f32 %v1402, 1.0
      %v1417 = vadd.f32 %v1404, 1.0
      %v1418 = vadd.f32 %v1406, 1.0
      %v1419 = vadd.f32 %v1408, 1.0
      %v1420 = vadd.f32 %v1410, 1.0
      %v1421 = vadd.f32 %v1412, 1.0
      %v1422 = vadd.f32 %v1414, 1.0
      %v1423 = vrcp.pop %v1415
      %v1424 = vmul.f32 1.0, %v1423
      %v1425 = vrcp.pop %v1416
      %v1426 = vmul.f32 1.0, %v1425
      %v1427 = vrcp.pop %v1417
      %v1428 = vmul.f32 1.0, %v1427
      %v1429 = vrcp.pop %v1418
      %v1430 = vmul.f32 1.0, %v1429
      %v1431 = vrcp.pop %v1419
      %v1432 = vmul.f32 1.0, %v1431
      %v1433 = vrcp.pop %v1420
      %v1434 = vmul.f32 1.0, %v1433
      %v1435 = vrcp.pop %v1421
      %v1436 = vmul.f32 1.0, %v1435
      %v1437 = vrcp.pop %v1422
      %v1438 = vmul.f32 1.0, %v1437
      %v1439 = vmul.f32 %v1361, %v1424
      %v1440 = vmul.f32 %v1364, %v1426
      %v1441 = vmul.f32 %v1369, %v1428
      %v1442 = vmul.f32 %v1372, %v1430
      %v1443 = vmul.f32 %v1377, %v1432
      %v1444 = vmul.f32 %v1380, %v1434
      %v1445 = vmul.f32 %v1385, %v1436
      %v1446 = vmul.f32 %v1388, %v1438
      %s1447 = scalar_lea.vmem [#allocation2], 160
      %1448 = vst [vmem:[%s1447 + $0x1] sm:$0xff] %v1439
      %1449 = vst [vmem:[%s1447 + $0x11] sm:$0xff] %v1440
      %1450 = vst [vmem:[%s1447 + $0x21] sm:$0xff] %v1441
      %1451 = vst [vmem:[%s1447 + $0x31] sm:$0xff] %v1442
      %1452 = vst [vmem:[%s1447 + $0x41] sm:$0xff] %v1443
      %1453 = vst [vmem:[%s1447 + $0x51] sm:$0xff] %v1444
      %1454 = vst [vmem:[%s1447 + $0x61] sm:$0xff] %v1445
      %1455 = vst [vmem:[%s1447 + $0x71] sm:$0xff] %v1446
      %v1456 = vld [vmem:[%s298] sm:$0xff]
      %v1457 = vld [vmem:[%s298 + $0x10] sm:$0xff]
      %v1458 = vld [vmem:[%s298 + $0x20] sm:$0xff]
      %v1459 = vld [vmem:[%s298 + $0x30] sm:$0xff]
      %v1460 = vld [vmem:[%s298 + $0x40] sm:$0xff]
      %v1461 = vld [vmem:[%s298 + $0x50] sm:$0xff]
      %v1462 = vld [vmem:[%s298 + $0x60] sm:$0xff]
      %v1463 = vld [vmem:[%s298 + $0x70] sm:$0xff]
      %v1464 = vld [vmem:[%s307] sm:$0xff]
      %v1465 = vld [vmem:[%s307 + $0x10] sm:$0xff]
      %v1466 = vld [vmem:[%s307 + $0x20] sm:$0xff]
      %v1467 = vld [vmem:[%s307 + $0x30] sm:$0xff]
      %v1468 = vld [vmem:[%s307 + $0x40] sm:$0xff]
      %v1469 = vld [vmem:[%s307 + $0x50] sm:$0xff]
      %v1470 = vld [vmem:[%s307 + $0x60] sm:$0xff]
      %v1471 = vld [vmem:[%s307 + $0x70] sm:$0xff]
      %v1472 = vld [vmem:[%s298 + $0x1] sm:$0xff]
      %v1473 = vld [vmem:[%s298 + $0x11] sm:$0xff]
      %v1474 = vld [vmem:[%s298 + $0x21] sm:$0xff]
      %v1475 = vld [vmem:[%s298 + $0x31] sm:$0xff]
      %v1476 = vld [vmem:[%s298 + $0x41] sm:$0xff]
      %v1477 = vld [vmem:[%s298 + $0x51] sm:$0xff]
      %v1478 = vld [vmem:[%s298 + $0x61] sm:$0xff]
      %v1479 = vld [vmem:[%s298 + $0x71] sm:$0xff]
      %v1480 = vld [vmem:[%s324] sm:$0xff]
      %v1481 = vld [vmem:[%s324 + $0x10] sm:$0xff]
      %v1482 = vld [vmem:[%s324 + $0x20] sm:$0xff]
      %v1483 = vld [vmem:[%s324 + $0x30] sm:$0xff]
      %v1484 = vld [vmem:[%s324 + $0x40] sm:$0xff]
      %v1485 = vld [vmem:[%s324 + $0x50] sm:$0xff]
      %v1486 = vld [vmem:[%s324 + $0x60] sm:$0xff]
      %v1487 = vld [vmem:[%s324 + $0x70] sm:$0xff]
      %v1488 = vld [vmem:[%s333] sm:$0xff]
      %v1489 = vld [vmem:[%s333 + $0x10] sm:$0xff]
      %v1490 = vld [vmem:[%s333 + $0x20] sm:$0xff]
      %v1491 = vld [vmem:[%s333 + $0x30] sm:$0xff]
      %v1492 = vld [vmem:[%s333 + $0x40] sm:$0xff]
      %v1493 = vld [vmem:[%s333 + $0x50] sm:$0xff]
      %v1494 = vld [vmem:[%s333 + $0x60] sm:$0xff]
      %v1495 = vld [vmem:[%s333 + $0x70] sm:$0xff]
      %v1496 = vld [vmem:[%s324 + $0x1] sm:$0xff]
      %v1497 = vld [vmem:[%s324 + $0x11] sm:$0xff]
      %v1498 = vld [vmem:[%s324 + $0x21] sm:$0xff]
      %v1499 = vld [vmem:[%s324 + $0x31] sm:$0xff]
      %v1500 = vld [vmem:[%s324 + $0x41] sm:$0xff]
      %v1501 = vld [vmem:[%s324 + $0x51] sm:$0xff]
      %v1502 = vld [vmem:[%s324 + $0x61] sm:$0xff]
      %v1503 = vld [vmem:[%s324 + $0x71] sm:$0xff]
      %s1504 = scalar_lea.vmem %s219, 304
      %v1505 = vld [vmem:[%s1504] sm:$0xff]
      %v1506 = vld [vmem:[%s1504 + $0x10] sm:$0xff]
      %v1507 = vld [vmem:[%s1504 + $0x20] sm:$0xff]
      %v1508 = vld [vmem:[%s1504 + $0x30] sm:$0xff]
      %v1509 = vld [vmem:[%s1504 + $0x40] sm:$0xff]
      %v1510 = vld [vmem:[%s1504 + $0x50] sm:$0xff]
      %v1511 = vld [vmem:[%s1504 + $0x60] sm:$0xff]
      %v1512 = vld [vmem:[%s1504 + $0x70] sm:$0xff]
      %s1513 = scalar_lea.vmem %s219, 448
      %v1514 = vld [vmem:[%s1513] sm:$0xff]
      %v1515 = vld [vmem:[%s1513 + $0x10] sm:$0xff]
      %v1516 = vld [vmem:[%s1513 + $0x20] sm:$0xff]
      %v1517 = vld [vmem:[%s1513 + $0x30] sm:$0xff]
      %v1518 = vld [vmem:[%s1513 + $0x40] sm:$0xff]
      %v1519 = vld [vmem:[%s1513 + $0x50] sm:$0xff]
      %v1520 = vld [vmem:[%s1513 + $0x60] sm:$0xff]
      %v1521 = vld [vmem:[%s1513 + $0x70] sm:$0xff]
      %v1522 = vld [vmem:[%s1504 + $0x1] sm:$0xff]
      %v1523 = vld [vmem:[%s1504 + $0x11] sm:$0xff]
      %v1524 = vld [vmem:[%s1504 + $0x21] sm:$0xff]
      %v1525 = vld [vmem:[%s1504 + $0x31] sm:$0xff]
      %v1526 = vld [vmem:[%s1504 + $0x41] sm:$0xff]
      %v1527 = vld [vmem:[%s1504 + $0x51] sm:$0xff]
      %v1528 = vld [vmem:[%s1504 + $0x61] sm:$0xff]
      %v1529 = vld [vmem:[%s1504 + $0x71] sm:$0xff]
      %1538 = vrot.lane.b32.xlu0 %v1464, 8
      %v1539 = vpop.permute.xlu0 %1538
      %1540 = vrot.lane.b32.xlu0 %v1465, 8
      %v1541 = vpop.permute.xlu0 %1540
      %1542 = vrot.lane.b32.xlu0 %v1466, 8
      %v1543 = vpop.permute.xlu0 %1542
      %1544 = vrot.lane.b32.xlu0 %v1467, 8
      %v1545 = vpop.permute.xlu0 %1544
      %1546 = vrot.lane.b32.xlu0 %v1468, 8
      %v1547 = vpop.permute.xlu0 %1546
      %1548 = vrot.lane.b32.xlu0 %v1469, 8
      %v1549 = vpop.permute.xlu0 %1548
      %1550 = vrot.lane.b32.xlu0 %v1470, 8
      %v1551 = vpop.permute.xlu0 %1550
      %1552 = vrot.lane.b32.xlu0 %v1471, 8
      %v1553 = vpop.permute.xlu0 %1552
      %1570 = vrot.lane.b32.xlu0 %v1472, 16
      %v1571 = vpop.permute.xlu0 %1570
      %1572 = vrot.lane.b32.xlu0 %v1473, 16
      %v1573 = vpop.permute.xlu0 %1572
      %1574 = vrot.lane.b32.xlu0 %v1474, 16
      %v1575 = vpop.permute.xlu0 %1574
      %1576 = vrot.lane.b32.xlu0 %v1475, 16
      %v1577 = vpop.permute.xlu0 %1576
      %1578 = vrot.lane.b32.xlu0 %v1476, 16
      %v1579 = vpop.permute.xlu0 %1578
      %1580 = vrot.lane.b32.xlu0 %v1477, 16
      %v1581 = vpop.permute.xlu0 %1580
      %1582 = vrot.lane.b32.xlu0 %v1478, 16
      %v1583 = vpop.permute.xlu0 %1582
      %1584 = vrot.lane.b32.xlu0 %v1479, 16
      %v1585 = vpop.permute.xlu0 %1584
      %1602 = vrot.lane.b32.xlu0 %v1480, 24
      %v1603 = vpop.permute.xlu0 %1602
      %1604 = vrot.lane.b32.xlu0 %v1481, 24
      %v1605 = vpop.permute.xlu0 %1604
      %1606 = vrot.lane.b32.xlu0 %v1482, 24
      %v1607 = vpop.permute.xlu0 %1606
      %1608 = vrot.lane.b32.xlu0 %v1483, 24
      %v1609 = vpop.permute.xlu0 %1608
      %1610 = vrot.lane.b32.xlu0 %v1484, 24
      %v1611 = vpop.permute.xlu0 %1610
      %1612 = vrot.lane.b32.xlu0 %v1485, 24
      %v1613 = vpop.permute.xlu0 %1612
      %1614 = vrot.lane.b32.xlu0 %v1486, 24
      %v1615 = vpop.permute.xlu0 %1614
      %1616 = vrot.lane.b32.xlu0 %v1487, 24
      %v1617 = vpop.permute.xlu0 %1616
      %1634 = vrot.lane.b32.xlu0 %v1488, 32
      %v1635 = vpop.permute.xlu0 %1634
      %1636 = vrot.lane.b32.xlu0 %v1489, 32
      %v1637 = vpop.permute.xlu0 %1636
      %1638 = vrot.lane.b32.xlu0 %v1490, 32
      %v1639 = vpop.permute.xlu0 %1638
      %1640 = vrot.lane.b32.xlu0 %v1491, 32
      %v1641 = vpop.permute.xlu0 %1640
      %1642 = vrot.lane.b32.xlu0 %v1492, 32
      %v1643 = vpop.permute.xlu0 %1642
      %1644 = vrot.lane.b32.xlu0 %v1493, 32
      %v1645 = vpop.permute.xlu0 %1644
      %1646 = vrot.lane.b32.xlu0 %v1494, 32
      %v1647 = vpop.permute.xlu0 %1646
      %1648 = vrot.lane.b32.xlu0 %v1495, 32
      %v1649 = vpop.permute.xlu0 %1648
      %1666 = vrot.lane.b32.xlu0 %v1496, 40
      %v1667 = vpop.permute.xlu0 %1666
      %1668 = vrot.lane.b32.xlu0 %v1497, 40
      %v1669 = vpop.permute.xlu0 %1668
      %1670 = vrot.lane.b32.xlu0 %v1498, 40
      %v1671 = vpop.permute.xlu0 %1670
      %1672 = vrot.lane.b32.xlu0 %v1499, 40
      %v1673 = vpop.permute.xlu0 %1672
      %1674 = vrot.lane.b32.xlu0 %v1500, 40
      %v1675 = vpop.permute.xlu0 %1674
      %1676 = vrot.lane.b32.xlu0 %v1501, 40
      %v1677 = vpop.permute.xlu0 %1676
      %1678 = vrot.lane.b32.xlu0 %v1502, 40
      %v1679 = vpop.permute.xlu0 %1678
      %1680 = vrot.lane.b32.xlu0 %v1503, 40
      %v1681 = vpop.permute.xlu0 %1680
      %1698 = vrot.lane.b32.xlu0 %v1505, 48
      %v1699 = vpop.permute.xlu0 %1698
      %1700 = vrot.lane.b32.xlu0 %v1506, 48
      %v1701 = vpop.permute.xlu0 %1700
      %1702 = vrot.lane.b32.xlu0 %v1507, 48
      %v1703 = vpop.permute.xlu0 %1702
      %1704 = vrot.lane.b32.xlu0 %v1508, 48
      %v1705 = vpop.permute.xlu0 %1704
      %1706 = vrot.lane.b32.xlu0 %v1509, 48
      %v1707 = vpop.permute.xlu0 %1706
      %1708 = vrot.lane.b32.xlu0 %v1510, 48
      %v1709 = vpop.permute.xlu0 %1708
      %1710 = vrot.lane.b32.xlu0 %v1511, 48
      %v1711 = vpop.permute.xlu0 %1710
      %1712 = vrot.lane.b32.xlu0 %v1512, 48
      %v1713 = vpop.permute.xlu0 %1712
      %1730 = vrot.lane.b32.xlu0 %v1514, 56
      %v1731 = vpop.permute.xlu0 %1730
      %1732 = vrot.lane.b32.xlu0 %v1515, 56
      %v1733 = vpop.permute.xlu0 %1732
      %1734 = vrot.lane.b32.xlu0 %v1516, 56
      %v1735 = vpop.permute.xlu0 %1734
      %1736 = vrot.lane.b32.xlu0 %v1517, 56
      %v1737 = vpop.permute.xlu0 %1736
      %1738 = vrot.lane.b32.xlu0 %v1518, 56
      %v1739 = vpop.permute.xlu0 %1738
      %1740 = vrot.lane.b32.xlu0 %v1519, 56
      %v1741 = vpop.permute.xlu0 %1740
      %1742 = vrot.lane.b32.xlu0 %v1520, 56
      %v1743 = vpop.permute.xlu0 %1742
      %1744 = vrot.lane.b32.xlu0 %v1521, 56
      %v1745 = vpop.permute.xlu0 %1744
      %1762 = vrot.lane.b32.xlu0 %v1522, 64
      %v1763 = vpop.permute.xlu0 %1762
      %1764 = vrot.lane.b32.xlu0 %v1523, 64
      %v1765 = vpop.permute.xlu0 %1764
      %1766 = vrot.lane.b32.xlu0 %v1524, 64
      %v1767 = vpop.permute.xlu0 %1766
      %1768 = vrot.lane.b32.xlu0 %v1525, 64
      %v1769 = vpop.permute.xlu0 %1768
      %1770 = vrot.lane.b32.xlu0 %v1526, 64
      %v1771 = vpop.permute.xlu0 %1770
      %1772 = vrot.lane.b32.xlu0 %v1527, 64
      %v1773 = vpop.permute.xlu0 %1772
      %1774 = vrot.lane.b32.xlu0 %v1528, 64
      %v1775 = vpop.permute.xlu0 %1774
      %1776 = vrot.lane.b32.xlu0 %v1529, 64
      %v1777 = vpop.permute.xlu0 %1776
      %v1786 = vsel %vm606, %v1456, %v1539
      %v1787 = vsel %vm606, %v1457, %v1541
      %v1788 = vsel %vm606, %v1458, %v1543
      %v1789 = vsel %vm606, %v1459, %v1545
      %v1790 = vsel %vm606, %v1460, %v1547
      %v1791 = vsel %vm606, %v1461, %v1549
      %v1792 = vsel %vm606, %v1462, %v1551
      %v1793 = vsel %vm606, %v1463, %v1553
      %v1794 = vsel %vm615, %v1786, %v1571
      %v1795 = vsel %vm615, %v1787, %v1573
      %v1796 = vsel %vm615, %v1788, %v1575
      %v1797 = vsel %vm615, %v1789, %v1577
      %v1798 = vsel %vm615, %v1790, %v1579
      %v1799 = vsel %vm615, %v1791, %v1581
      %v1800 = vsel %vm615, %v1792, %v1583
      %v1801 = vsel %vm615, %v1793, %v1585
      %v1802 = vsel %vm624, %v1794, %v1603
      %v1803 = vsel %vm624, %v1795, %v1605
      %v1804 = vsel %vm624, %v1796, %v1607
      %v1805 = vsel %vm624, %v1797, %v1609
      %v1806 = vsel %vm624, %v1798, %v1611
      %v1807 = vsel %vm624, %v1799, %v1613
      %v1808 = vsel %vm624, %v1800, %v1615
      %v1809 = vsel %vm624, %v1801, %v1617
      %v1810 = vsel %vm633, %v1802, %v1635
      %v1811 = vsel %vm633, %v1803, %v1637
      %v1812 = vsel %vm633, %v1804, %v1639
      %v1813 = vsel %vm633, %v1805, %v1641
      %v1814 = vsel %vm633, %v1806, %v1643
      %v1815 = vsel %vm633, %v1807, %v1645
      %v1816 = vsel %vm633, %v1808, %v1647
      %v1817 = vsel %vm633, %v1809, %v1649
      %v1818 = vsel %vm642, %v1810, %v1667
      %v1819 = vsel %vm642, %v1811, %v1669
      %v1820 = vsel %vm642, %v1812, %v1671
      %v1821 = vsel %vm642, %v1813, %v1673
      %v1822 = vsel %vm642, %v1814, %v1675
      %v1823 = vsel %vm642, %v1815, %v1677
      %v1824 = vsel %vm642, %v1816, %v1679
      %v1825 = vsel %vm642, %v1817, %v1681
      %v1826 = vsel %vm651, %v1818, %v1699
      %v1827 = vsel %vm651, %v1819, %v1701
      %v1828 = vsel %vm651, %v1820, %v1703
      %v1829 = vsel %vm651, %v1821, %v1705
      %v1830 = vsel %vm651, %v1822, %v1707
      %v1831 = vsel %vm651, %v1823, %v1709
      %v1832 = vsel %vm651, %v1824, %v1711
      %v1833 = vsel %vm651, %v1825, %v1713
      %v1834 = vsel %vm660, %v1826, %v1731
      %v1835 = vsel %vm660, %v1827, %v1733
      %v1836 = vsel %vm660, %v1828, %v1735
      %v1837 = vsel %vm660, %v1829, %v1737
      %v1838 = vsel %vm660, %v1830, %v1739
      %v1839 = vsel %vm660, %v1831, %v1741
      %v1840 = vsel %vm660, %v1832, %v1743
      %v1841 = vsel %vm660, %v1833, %v1745
      %v1842 = vsel %vm669, %v1834, %v1763
      %v1843 = vsel %vm669, %v1835, %v1765
      %v1844 = vsel %vm669, %v1836, %v1767
      %v1845 = vsel %vm669, %v1837, %v1769
      %v1846 = vsel %vm669, %v1838, %v1771
      %v1847 = vsel %vm669, %v1839, %v1773
      %v1848 = vsel %vm669, %v1840, %v1775
      %v1849 = vsel %vm669, %v1841, %v1777
      %v1850 = vpack.c.bf16 %v1843, %v1842
      %v1851 = vpack.c.bf16 %v1845, %v1844
      %v1852 = vpack.c.bf16 %v1847, %v1846
      %v1853 = vpack.c.bf16 %v1849, %v1848
      %v1854 = vld [vmem:[%s1] sm:$0xf]
      %v1855 = vld [vmem:[%s1 + $0x4] sm:$0xf]
      %v1856 = vld [vmem:[%s1 + $0x8] sm:$0xf]
      %v1857 = vld [vmem:[%s1 + $0xc] sm:$0xf]
      %v1858 = vld [vmem:[%s1 + $0x10] sm:$0xf]
      %v1859 = vld [vmem:[%s1 + $0x14] sm:$0xf]
      %v1860 = vld [vmem:[%s1 + $0x18] sm:$0xf]
      %v1861 = vld [vmem:[%s1 + $0x1c] sm:$0xf]
      %v1862 = vld [vmem:[%s1 + $0x20] sm:$0xf]
      %v1863 = vld [vmem:[%s2] sm:$0x1]
      %v1865 = vlaneseq
      %v1866 = vshrl.u32 %v1865, 7
      %v1867 = vsub.s32 0, %v1866
      %v1868 = vrot.slane %v1863, %v1867
      %v1879 = vunpack.c.l.b16 %v1854
      %v1880 = vunpack.c.l.b16 %v1855
      %v1881 = vunpack.c.l.b16 %v1856
      %v1882 = vunpack.c.l.b16 %v1857
      %v1883 = vunpack.c.l.b16 %v1858
      %v1884 = vunpack.c.l.b16 %v1859
      %v1885 = vunpack.c.l.b16 %v1860
      %v1886 = vunpack.c.l.b16 %v1861
      %v1887 = vunpack.c.l.b16 %v1862
      %v1888 = vpack.c.b16 %v1880, %v1879
      %v1889 = vpack.c.b16 %v1882, %v1881
      %v1890 = vpack.c.b16 %v1884, %v1883
      %v1891 = vpack.c.b16 %v1886, %v1885
      %v1892 = vpack.c.b16 %v1887, %v1887
      %v1898 = vsel %vm725, %v1850, 0
      %v1901 = vsel %vm725, %v1851, 0
      %v1904 = vsel %vm725, %v1852, 0
      %v1907 = vsel %vm725, %v1853, 0
      %v1910 = vsel %vm738, %v1892, 0
      %1912 = vmatprep.subr.bf16.mxu0 0
      %1913 = vmatpush1.bf16.msra.mxu0 %v1888
      %1914 = vmatprep.subr.bf16.mxu0 0
      %1915 = vmatpush1.bf16.msra.mxu0 %v1889
      %1916 = vmatprep.subr.bf16.mxu0 0
      %1917 = vmatpush1.bf16.msra.mxu0 %v1890
      %1918 = vmatprep.subr.bf16.mxu0 0
      %1919 = vmatpush1.bf16.msra.mxu0 %v1891
      %1920 = vmatprep.subr.bf16.mxu0 0
      %1921 = vmatpush1.bf16.msra.mxu0 %v1910
      %1922 = vmatprep.subr.bf16.mxu0 0
      %1923 = vmatpush1.bf16.msra.mxu0 0
      %1924 = vmatprep.subr.bf16.mxu0 0
      %1925 = vmatpush1.bf16.msra.mxu0 0
      %1926 = vmatprep.subr.bf16.mxu0 0
      %1927 = vmatpush1.bf16.msra.mxu0 0
      %1928 = vmatprep.subr.bf16.mxu0 0
      %1929 = vmatpush1.bf16.msra.mxu0 0
      %1930 = vmatprep.subr.bf16.mxu0 0
      %1931 = vmatpush1.bf16.msra.mxu0 0
      %1932 = vmatprep.subr.bf16.mxu0 0
      %1933 = vmatpush1.bf16.msra.mxu0 0
      %1934 = vmatprep.subr.bf16.mxu0 0
      %1935 = vmatpush1.bf16.msra.mxu0 0
      %1936 = vmatprep.subr.bf16.mxu0 0
      %1937 = vmatpush1.bf16.msra.mxu0 0
      %1938 = vmatprep.subr.bf16.mxu0 0
      %1939 = vmatpush1.bf16.msra.mxu0 0
      %1940 = vmatprep.subr.bf16.mxu0 0
      %1941 = vmatpush1.bf16.msra.mxu0 0
      %1942 = vmatprep.subr.bf16.mxu0 0
      %1943 = vmatpush1.bf16.msra.mxu0 0
      %1944 = vmatprep.mubr.bf16.mxu0 0
      %1945 = vmatmul.mubr.bf16.gmra.mrb[0].mxu0 %v1898
      %v1946 = vpop.f32.mrb[0].mxu0
      %v1947 = vadd.f32 %v1868, %v1946
      %v1948 = vpop.f32.mrb[0].mxu0
      %v1949 = vpop.f32.mrb[0].mxu0
      %v1950 = vadd.f32 %v1868, %v1949
      %v1951 = vpop.f32.mrb[0].mxu0
      %1952 = vmatprep.mubr.bf16.mxu0 0
      %1953 = vmatmul.mubr.bf16.gmra.mrb[0].mxu0 %v1901
      %v1954 = vpop.f32.mrb[0].mxu0
      %v1955 = vadd.f32 %v1868, %v1954
      %v1956 = vpop.f32.mrb[0].mxu0
      %v1957 = vpop.f32.mrb[0].mxu0
      %v1958 = vadd.f32 %v1868, %v1957
      %v1959 = vpop.f32.mrb[0].mxu0
      %1960 = vmatprep.mubr.bf16.mxu0 0
      %1961 = vmatmul.mubr.bf16.gmra.mrb[0].mxu0 %v1904
      %v1962 = vpop.f32.mrb[0].mxu0
      %v1963 = vadd.f32 %v1868, %v1962
      %v1964 = vpop.f32.mrb[0].mxu0
      %v1965 = vpop.f32.mrb[0].mxu0
      %v1966 = vadd.f32 %v1868, %v1965
      %v1967 = vpop.f32.mrb[0].mxu0
      %1968 = vmatprep.mubr.bf16.mxu0 0
      %1969 = vmatmul.mubr.bf16.gmra.mrb[0].mxu0 %v1907
      %v1970 = vpop.f32.mrb[0].mxu0
      %v1971 = vadd.f32 %v1868, %v1970
      %v1972 = vpop.f32.mrb[0].mxu0
      %v1973 = vpop.f32.mrb[0].mxu0
      %v1974 = vadd.f32 %v1868, %v1973
      %v1975 = vpop.f32.mrb[0].mxu0
      %1976 = vdwg.mxu0
      %v1977 = vxor.u32 %v1947, 2147483648
      %v1978 = vxor.u32 %v1950, 2147483648
      %v1979 = vxor.u32 %v1955, 2147483648
      %v1980 = vxor.u32 %v1958, 2147483648
      %v1981 = vxor.u32 %v1963, 2147483648
      %v1982 = vxor.u32 %v1966, 2147483648
      %v1983 = vxor.u32 %v1971, 2147483648
      %v1984 = vxor.u32 %v1974, 2147483648
      %v1985 = vmul.f32 %v1977, 1.442695
      %v1986 = vpow.pop %v1985
      %v1987 = vmul.f32 %v1978, 1.442695
      %v1988 = vpow.pop %v1987
      %v1989 = vmul.f32 %v1979, 1.442695
      %v1990 = vpow.pop %v1989
      %v1991 = vmul.f32 %v1980, 1.442695
      %v1992 = vpow.pop %v1991
      %v1993 = vmul.f32 %v1981, 1.442695
      %v1994 = vpow.pop %v1993
      %v1995 = vmul.f32 %v1982, 1.442695
      %v1996 = vpow.pop %v1995
      %v1997 = vmul.f32 %v1983, 1.442695
      %v1998 = vpow.pop %v1997
      %v1999 = vmul.f32 %v1984, 1.442695
      %v2000 = vpow.pop %v1999
      %v2001 = vadd.f32 %v1986, 1.0
      %v2002 = vadd.f32 %v1988, 1.0
      %v2003 = vadd.f32 %v1990, 1.0
      %v2004 = vadd.f32 %v1992, 1.0
      %v2005 = vadd.f32 %v1994, 1.0
      %v2006 = vadd.f32 %v1996, 1.0
      %v2007 = vadd.f32 %v1998, 1.0
      %v2008 = vadd.f32 %v2000, 1.0
      %v2009 = vrcp.pop %v2001
      %v2010 = vmul.f32 1.0, %v2009
      %v2011 = vrcp.pop %v2002
      %v2012 = vmul.f32 1.0, %v2011
      %v2013 = vrcp.pop %v2003
      %v2014 = vmul.f32 1.0, %v2013
      %v2015 = vrcp.pop %v2004
      %v2016 = vmul.f32 1.0, %v2015
      %v2017 = vrcp.pop %v2005
      %v2018 = vmul.f32 1.0, %v2017
      %v2019 = vrcp.pop %v2006
      %v2020 = vmul.f32 1.0, %v2019
      %v2021 = vrcp.pop %v2007
      %v2022 = vmul.f32 1.0, %v2021
      %v2023 = vrcp.pop %v2008
      %v2024 = vmul.f32 1.0, %v2023
      %v2025 = vmul.f32 %v1947, %v2010
      %v2026 = vmul.f32 %v1950, %v2012
      %v2027 = vmul.f32 %v1955, %v2014
      %v2028 = vmul.f32 %v1958, %v2016
      %v2029 = vmul.f32 %v1963, %v2018
      %v2030 = vmul.f32 %v1966, %v2020
      %v2031 = vmul.f32 %v1971, %v2022
      %v2032 = vmul.f32 %v1974, %v2024
      %s2033 = scalar_lea.vmem [#allocation2], 304
      %2034 = vst [vmem:[%s2033 + $0x1] sm:$0xff] %v2025
      %2035 = vst [vmem:[%s2033 + $0x11] sm:$0xff] %v2026
      %2036 = vst [vmem:[%s2033 + $0x21] sm:$0xff] %v2027
      %2037 = vst [vmem:[%s2033 + $0x31] sm:$0xff] %v2028
      %2038 = vst [vmem:[%s2033 + $0x41] sm:$0xff] %v2029
      %2039 = vst [vmem:[%s2033 + $0x51] sm:$0xff] %v2030
      %2040 = vst [vmem:[%s2033 + $0x61] sm:$0xff] %v2031
      %2041 = vst [vmem:[%s2033 + $0x71] sm:$0xff] %v2032
      %v2042 = vld [vmem:[%s307] sm:$0xff]
      %v2043 = vld [vmem:[%s307 + $0x10] sm:$0xff]
      %v2044 = vld [vmem:[%s307 + $0x20] sm:$0xff]
      %v2045 = vld [vmem:[%s307 + $0x30] sm:$0xff]
      %v2046 = vld [vmem:[%s307 + $0x40] sm:$0xff]
      %v2047 = vld [vmem:[%s307 + $0x50] sm:$0xff]
      %v2048 = vld [vmem:[%s307 + $0x60] sm:$0xff]
      %v2049 = vld [vmem:[%s307 + $0x70] sm:$0xff]
      %v2050 = vld [vmem:[%s298 + $0x1] sm:$0xff]
      %v2051 = vld [vmem:[%s298 + $0x11] sm:$0xff]
      %v2052 = vld [vmem:[%s298 + $0x21] sm:$0xff]
      %v2053 = vld [vmem:[%s298 + $0x31] sm:$0xff]
      %v2054 = vld [vmem:[%s298 + $0x41] sm:$0xff]
      %v2055 = vld [vmem:[%s298 + $0x51] sm:$0xff]
      %v2056 = vld [vmem:[%s298 + $0x61] sm:$0xff]
      %v2057 = vld [vmem:[%s298 + $0x71] sm:$0xff]
      %v2058 = vld [vmem:[%s307 + $0x1] sm:$0xff]
      %v2059 = vld [vmem:[%s307 + $0x11] sm:$0xff]
      %v2060 = vld [vmem:[%s307 + $0x21] sm:$0xff]
      %v2061 = vld [vmem:[%s307 + $0x31] sm:$0xff]
      %v2062 = vld [vmem:[%s307 + $0x41] sm:$0xff]
      %v2063 = vld [vmem:[%s307 + $0x51] sm:$0xff]
      %v2064 = vld [vmem:[%s307 + $0x61] sm:$0xff]
      %v2065 = vld [vmem:[%s307 + $0x71] sm:$0xff]
      %v2066 = vld [vmem:[%s333] sm:$0xff]
      %v2067 = vld [vmem:[%s333 + $0x10] sm:$0xff]
      %v2068 = vld [vmem:[%s333 + $0x20] sm:$0xff]
      %v2069 = vld [vmem:[%s333 + $0x30] sm:$0xff]
      %v2070 = vld [vmem:[%s333 + $0x40] sm:$0xff]
      %v2071 = vld [vmem:[%s333 + $0x50] sm:$0xff]
      %v2072 = vld [vmem:[%s333 + $0x60] sm:$0xff]
      %v2073 = vld [vmem:[%s333 + $0x70] sm:$0xff]
      %v2074 = vld [vmem:[%s324 + $0x1] sm:$0xff]
      %v2075 = vld [vmem:[%s324 + $0x11] sm:$0xff]
      %v2076 = vld [vmem:[%s324 + $0x21] sm:$0xff]
      %v2077 = vld [vmem:[%s324 + $0x31] sm:$0xff]
      %v2078 = vld [vmem:[%s324 + $0x41] sm:$0xff]
      %v2079 = vld [vmem:[%s324 + $0x51] sm:$0xff]
      %v2080 = vld [vmem:[%s324 + $0x61] sm:$0xff]
      %v2081 = vld [vmem:[%s324 + $0x71] sm:$0xff]
      %v2082 = vld [vmem:[%s333 + $0x1] sm:$0xff]
      %v2083 = vld [vmem:[%s333 + $0x11] sm:$0xff]
      %v2084 = vld [vmem:[%s333 + $0x21] sm:$0xff]
      %v2085 = vld [vmem:[%s333 + $0x31] sm:$0xff]
      %v2086 = vld [vmem:[%s333 + $0x41] sm:$0xff]
      %v2087 = vld [vmem:[%s333 + $0x51] sm:$0xff]
      %v2088 = vld [vmem:[%s333 + $0x61] sm:$0xff]
      %v2089 = vld [vmem:[%s333 + $0x71] sm:$0xff]
      %v2090 = vld [vmem:[%s1513] sm:$0xff]
      %v2091 = vld [vmem:[%s1513 + $0x10] sm:$0xff]
      %v2092 = vld [vmem:[%s1513 + $0x20] sm:$0xff]
      %v2093 = vld [vmem:[%s1513 + $0x30] sm:$0xff]
      %v2094 = vld [vmem:[%s1513 + $0x40] sm:$0xff]
      %v2095 = vld [vmem:[%s1513 + $0x50] sm:$0xff]
      %v2096 = vld [vmem:[%s1513 + $0x60] sm:$0xff]
      %v2097 = vld [vmem:[%s1513 + $0x70] sm:$0xff]
      %v2098 = vld [vmem:[%s1504 + $0x1] sm:$0xff]
      %v2099 = vld [vmem:[%s1504 + $0x11] sm:$0xff]
      %v2100 = vld [vmem:[%s1504 + $0x21] sm:$0xff]
      %v2101 = vld [vmem:[%s1504 + $0x31] sm:$0xff]
      %v2102 = vld [vmem:[%s1504 + $0x41] sm:$0xff]
      %v2103 = vld [vmem:[%s1504 + $0x51] sm:$0xff]
      %v2104 = vld [vmem:[%s1504 + $0x61] sm:$0xff]
      %v2105 = vld [vmem:[%s1504 + $0x71] sm:$0xff]
      %v2106 = vld [vmem:[%s1513 + $0x1] sm:$0xff]
      %v2107 = vld [vmem:[%s1513 + $0x11] sm:$0xff]
      %v2108 = vld [vmem:[%s1513 + $0x21] sm:$0xff]
      %v2109 = vld [vmem:[%s1513 + $0x31] sm:$0xff]
      %v2110 = vld [vmem:[%s1513 + $0x41] sm:$0xff]
      %v2111 = vld [vmem:[%s1513 + $0x51] sm:$0xff]
      %v2112 = vld [vmem:[%s1513 + $0x61] sm:$0xff]
      %v2113 = vld [vmem:[%s1513 + $0x71] sm:$0xff]
      %2122 = vrot.lane.b32.xlu0 %v2050, 8
      %v2123 = vpop.permute.xlu0 %2122
      %2124 = vrot.lane.b32.xlu0 %v2051, 8
      %v2125 = vpop.permute.xlu0 %2124
      %2126 = vrot.lane.b32.xlu0 %v2052, 8
      %v2127 = vpop.permute.xlu0 %2126
      %2128 = vrot.lane.b32.xlu0 %v2053, 8
      %v2129 = vpop.permute.xlu0 %2128
      %2130 = vrot.lane.b32.xlu0 %v2054, 8
      %v2131 = vpop.permute.xlu0 %2130
      %2132 = vrot.lane.b32.xlu0 %v2055, 8
      %v2133 = vpop.permute.xlu0 %2132
      %2134 = vrot.lane.b32.xlu0 %v2056, 8
      %v2135 = vpop.permute.xlu0 %2134
      %2136 = vrot.lane.b32.xlu0 %v2057, 8
      %v2137 = vpop.permute.xlu0 %2136
      %2154 = vrot.lane.b32.xlu0 %v2058, 16
      %v2155 = vpop.permute.xlu0 %2154
      %2156 = vrot.lane.b32.xlu0 %v2059, 16
      %v2157 = vpop.permute.xlu0 %2156
      %2158 = vrot.lane.b32.xlu0 %v2060, 16
      %v2159 = vpop.permute.xlu0 %2158
      %2160 = vrot.lane.b32.xlu0 %v2061, 16
      %v2161 = vpop.permute.xlu0 %2160
      %2162 = vrot.lane.b32.xlu0 %v2062, 16
      %v2163 = vpop.permute.xlu0 %2162
      %2164 = vrot.lane.b32.xlu0 %v2063, 16
      %v2165 = vpop.permute.xlu0 %2164
      %2166 = vrot.lane.b32.xlu0 %v2064, 16
      %v2167 = vpop.permute.xlu0 %2166
      %2168 = vrot.lane.b32.xlu0 %v2065, 16
      %v2169 = vpop.permute.xlu0 %2168
      %2186 = vrot.lane.b32.xlu0 %v2066, 24
      %v2187 = vpop.permute.xlu0 %2186
      %2188 = vrot.lane.b32.xlu0 %v2067, 24
      %v2189 = vpop.permute.xlu0 %2188
      %2190 = vrot.lane.b32.xlu0 %v2068, 24
      %v2191 = vpop.permute.xlu0 %2190
      %2192 = vrot.lane.b32.xlu0 %v2069, 24
      %v2193 = vpop.permute.xlu0 %2192
      %2194 = vrot.lane.b32.xlu0 %v2070, 24
      %v2195 = vpop.permute.xlu0 %2194
      %2196 = vrot.lane.b32.xlu0 %v2071, 24
      %v2197 = vpop.permute.xlu0 %2196
      %2198 = vrot.lane.b32.xlu0 %v2072, 24
      %v2199 = vpop.permute.xlu0 %2198
      %2200 = vrot.lane.b32.xlu0 %v2073, 24
      %v2201 = vpop.permute.xlu0 %2200
      %2218 = vrot.lane.b32.xlu0 %v2074, 32
      %v2219 = vpop.permute.xlu0 %2218
      %2220 = vrot.lane.b32.xlu0 %v2075, 32
      %v2221 = vpop.permute.xlu0 %2220
      %2222 = vrot.lane.b32.xlu0 %v2076, 32
      %v2223 = vpop.permute.xlu0 %2222
      %2224 = vrot.lane.b32.xlu0 %v2077, 32
      %v2225 = vpop.permute.xlu0 %2224
      %2226 = vrot.lane.b32.xlu0 %v2078, 32
      %v2227 = vpop.permute.xlu0 %2226
      %2228 = vrot.lane.b32.xlu0 %v2079, 32
      %v2229 = vpop.permute.xlu0 %2228
      %2230 = vrot.lane.b32.xlu0 %v2080, 32
      %v2231 = vpop.permute.xlu0 %2230
      %2232 = vrot.lane.b32.xlu0 %v2081, 32
      %v2233 = vpop.permute.xlu0 %2232
      %2250 = vrot.lane.b32.xlu0 %v2082, 40
      %v2251 = vpop.permute.xlu0 %2250
      %2252 = vrot.lane.b32.xlu0 %v2083, 40
      %v2253 = vpop.permute.xlu0 %2252
      %2254 = vrot.lane.b32.xlu0 %v2084, 40
      %v2255 = vpop.permute.xlu0 %2254
      %2256 = vrot.lane.b32.xlu0 %v2085, 40
      %v2257 = vpop.permute.xlu0 %2256
      %2258 = vrot.lane.b32.xlu0 %v2086, 40
      %v2259 = vpop.permute.xlu0 %2258
      %2260 = vrot.lane.b32.xlu0 %v2087, 40
      %v2261 = vpop.permute.xlu0 %2260
      %2262 = vrot.lane.b32.xlu0 %v2088, 40
      %v2263 = vpop.permute.xlu0 %2262
      %2264 = vrot.lane.b32.xlu0 %v2089, 40
      %v2265 = vpop.permute.xlu0 %2264
      %2282 = vrot.lane.b32.xlu0 %v2090, 48
      %v2283 = vpop.permute.xlu0 %2282
      %2284 = vrot.lane.b32.xlu0 %v2091, 48
      %v2285 = vpop.permute.xlu0 %2284
      %2286 = vrot.lane.b32.xlu0 %v2092, 48
      %v2287 = vpop.permute.xlu0 %2286
      %2288 = vrot.lane.b32.xlu0 %v2093, 48
      %v2289 = vpop.permute.xlu0 %2288
      %2290 = vrot.lane.b32.xlu0 %v2094, 48
      %v2291 = vpop.permute.xlu0 %2290
      %2292 = vrot.lane.b32.xlu0 %v2095, 48
      %v2293 = vpop.permute.xlu0 %2292
      %2294 = vrot.lane.b32.xlu0 %v2096, 48
      %v2295 = vpop.permute.xlu0 %2294
      %2296 = vrot.lane.b32.xlu0 %v2097, 48
      %v2297 = vpop.permute.xlu0 %2296
      %2314 = vrot.lane.b32.xlu0 %v2098, 56
      %v2315 = vpop.permute.xlu0 %2314
      %2316 = vrot.lane.b32.xlu0 %v2099, 56
      %v2317 = vpop.permute.xlu0 %2316
      %2318 = vrot.lane.b32.xlu0 %v2100, 56
      %v2319 = vpop.permute.xlu0 %2318
      %2320 = vrot.lane.b32.xlu0 %v2101, 56
      %v2321 = vpop.permute.xlu0 %2320
      %2322 = vrot.lane.b32.xlu0 %v2102, 56
      %v2323 = vpop.permute.xlu0 %2322
      %2324 = vrot.lane.b32.xlu0 %v2103, 56
      %v2325 = vpop.permute.xlu0 %2324
      %2326 = vrot.lane.b32.xlu0 %v2104, 56
      %v2327 = vpop.permute.xlu0 %2326
      %2328 = vrot.lane.b32.xlu0 %v2105, 56
      %v2329 = vpop.permute.xlu0 %2328
      %2346 = vrot.lane.b32.xlu0 %v2106, 64
      %v2347 = vpop.permute.xlu0 %2346
      %2348 = vrot.lane.b32.xlu0 %v2107, 64
      %v2349 = vpop.permute.xlu0 %2348
      %2350 = vrot.lane.b32.xlu0 %v2108, 64
      %v2351 = vpop.permute.xlu0 %2350
      %2352 = vrot.lane.b32.xlu0 %v2109, 64
      %v2353 = vpop.permute.xlu0 %2352
      %2354 = vrot.lane.b32.xlu0 %v2110, 64
      %v2355 = vpop.permute.xlu0 %2354
      %2356 = vrot.lane.b32.xlu0 %v2111, 64
      %v2357 = vpop.permute.xlu0 %2356
      %2358 = vrot.lane.b32.xlu0 %v2112, 64
      %v2359 = vpop.permute.xlu0 %2358
      %2360 = vrot.lane.b32.xlu0 %v2113, 64
      %v2361 = vpop.permute.xlu0 %2360
      %v2370 = vsel %vm606, %v2042, %v2123
      %v2371 = vsel %vm606, %v2043, %v2125
      %v2372 = vsel %vm606, %v2044, %v2127
      %v2373 = vsel %vm606, %v2045, %v2129
      %v2374 = vsel %vm606, %v2046, %v2131
      %v2375 = vsel %vm606, %v2047, %v2133
      %v2376 = vsel %vm606, %v2048, %v2135
      %v2377 = vsel %vm606, %v2049, %v2137
      %v2378 = vsel %vm615, %v2370, %v2155
      %v2379 = vsel %vm615, %v2371, %v2157
      %v2380 = vsel %vm615, %v2372, %v2159
      %v2381 = vsel %vm615, %v2373, %v2161
      %v2382 = vsel %vm615, %v2374, %v2163
      %v2383 = vsel %vm615, %v2375, %v2165
      %v2384 = vsel %vm615, %v2376, %v2167
      %v2385 = vsel %vm615, %v2377, %v2169
      %v2386 = vsel %vm624, %v2378, %v2187
      %v2387 = vsel %vm624, %v2379, %v2189
      %v2388 = vsel %vm624, %v2380, %v2191
      %v2389 = vsel %vm624, %v2381, %v2193
      %v2390 = vsel %vm624, %v2382, %v2195
      %v2391 = vsel %vm624, %v2383, %v2197
      %v2392 = vsel %vm624, %v2384, %v2199
      %v2393 = vsel %vm624, %v2385, %v2201
      %v2394 = vsel %vm633, %v2386, %v2219
      %v2395 = vsel %vm633, %v2387, %v2221
      %v2396 = vsel %vm633, %v2388, %v2223
      %v2397 = vsel %vm633, %v2389, %v2225
      %v2398 = vsel %vm633, %v2390, %v2227
      %v2399 = vsel %vm633, %v2391, %v2229
      %v2400 = vsel %vm633, %v2392, %v2231
      %v2401 = vsel %vm633, %v2393, %v2233
      %v2402 = vsel %vm642, %v2394, %v2251
      %v2403 = vsel %vm642, %v2395, %v2253
      %v2404 = vsel %vm642, %v2396, %v2255
      %v2405 = vsel %vm642, %v2397, %v2257
      %v2406 = vsel %vm642, %v2398, %v2259
      %v2407 = vsel %vm642, %v2399, %v2261
      %v2408 = vsel %vm642, %v2400, %v2263
      %v2409 = vsel %vm642, %v2401, %v2265
      %v2410 = vsel %vm651, %v2402, %v2283
      %v2411 = vsel %vm651, %v2403, %v2285
      %v2412 = vsel %vm651, %v2404, %v2287
      %v2413 = vsel %vm651, %v2405, %v2289
      %v2414 = vsel %vm651, %v2406, %v2291
      %v2415 = vsel %vm651, %v2407, %v2293
      %v2416 = vsel %vm651, %v2408, %v2295
      %v2417 = vsel %vm651, %v2409, %v2297
      %v2418 = vsel %vm660, %v2410, %v2315
      %v2419 = vsel %vm660, %v2411, %v2317
      %v2420 = vsel %vm660, %v2412, %v2319
      %v2421 = vsel %vm660, %v2413, %v2321
      %v2422 = vsel %vm660, %v2414, %v2323
      %v2423 = vsel %vm660, %v2415, %v2325
      %v2424 = vsel %vm660, %v2416, %v2327
      %v2425 = vsel %vm660, %v2417, %v2329
      %v2426 = vsel %vm669, %v2418, %v2347
      %v2427 = vsel %vm669, %v2419, %v2349
      %v2428 = vsel %vm669, %v2420, %v2351
      %v2429 = vsel %vm669, %v2421, %v2353
      %v2430 = vsel %vm669, %v2422, %v2355
      %v2431 = vsel %vm669, %v2423, %v2357
      %v2432 = vsel %vm669, %v2424, %v2359
      %v2433 = vsel %vm669, %v2425, %v2361
      %v2434 = vpack.c.bf16 %v2427, %v2426
      %v2435 = vpack.c.bf16 %v2429, %v2428
      %v2436 = vpack.c.bf16 %v2431, %v2430
      %v2437 = vpack.c.bf16 %v2433, %v2432
      %v2438 = vld [vmem:[%s1] sm:$0xf]
      %v2439 = vld [vmem:[%s1 + $0x4] sm:$0xf]
      %v2440 = vld [vmem:[%s1 + $0x8] sm:$0xf]
      %v2441 = vld [vmem:[%s1 + $0xc] sm:$0xf]
      %v2442 = vld [vmem:[%s1 + $0x10] sm:$0xf]
      %v2443 = vld [vmem:[%s1 + $0x14] sm:$0xf]
      %v2444 = vld [vmem:[%s1 + $0x18] sm:$0xf]
      %v2445 = vld [vmem:[%s1 + $0x1c] sm:$0xf]
      %v2446 = vld [vmem:[%s1 + $0x20] sm:$0xf]
      %v2447 = vld [vmem:[%s2] sm:$0x1]
      %v2449 = vlaneseq
      %v2450 = vshrl.u32 %v2449, 7
      %v2451 = vsub.s32 0, %v2450
      %v2452 = vrot.slane %v2447, %v2451
      %v2463 = vunpack.c.l.b16 %v2438
      %v2464 = vunpack.c.l.b16 %v2439
      %v2465 = vunpack.c.l.b16 %v2440
      %v2466 = vunpack.c.l.b16 %v2441
      %v2467 = vunpack.c.l.b16 %v2442
      %v2468 = vunpack.c.l.b16 %v2443
      %v2469 = vunpack.c.l.b16 %v2444
      %v2470 = vunpack.c.l.b16 %v2445
      %v2471 = vunpack.c.l.b16 %v2446
      %v2472 = vpack.c.b16 %v2464, %v2463
      %v2473 = vpack.c.b16 %v2466, %v2465
      %v2474 = vpack.c.b16 %v2468, %v2467
      %v2475 = vpack.c.b16 %v2470, %v2469
      %v2476 = vpack.c.b16 %v2471, %v2471
      %v2482 = vsel %vm725, %v2434, 0
      %v2485 = vsel %vm725, %v2435, 0
      %v2488 = vsel %vm725, %v2436, 0
      %v2491 = vsel %vm725, %v2437, 0
      %v2494 = vsel %vm738, %v2476, 0
      %2496 = vmatprep.subr.bf16.mxu0 0
      %2497 = vmatpush1.bf16.msra.mxu0 %v2472
      %2498 = vmatprep.subr.bf16.mxu0 0
      %2499 = vmatpush1.bf16.msra.mxu0 %v2473
      %2500 = vmatprep.subr.bf16.mxu0 0
      %2501 = vmatpush1.bf16.msra.mxu0 %v2474
      %2502 = vmatprep.subr.bf16.mxu0 0
      %2503 = vmatpush1.bf16.msra.mxu0 %v2475
      %2504 = vmatprep.subr.bf16.mxu0 0
      %2505 = vmatpush1.bf16.msra.mxu0 %v2494
      %2506 = vmatprep.subr.bf16.mxu0 0
      %2507 = vmatpush1.bf16.msra.mxu0 0
      %2508 = vmatprep.subr.bf16.mxu0 0
      %2509 = vmatpush1.bf16.msra.mxu0 0
      %2510 = vmatprep.subr.bf16.mxu0 0
      %2511 = vmatpush1.bf16.msra.mxu0 0
      %2512 = vmatprep.subr.bf16.mxu0 0
      %2513 = vmatpush1.bf16.msra.mxu0 0
      %2514 = vmatprep.subr.bf16.mxu0 0
      %2515 = vmatpush1.bf16.msra.mxu0 0
      %2516 = vmatprep.subr.bf16.mxu0 0
      %2517 = vmatpush1.bf16.msra.mxu0 0
      %2518 = vmatprep.subr.bf16.mxu0 0
      %2519 = vmatpush1.bf16.msra.mxu0 0
      %2520 = vmatprep.subr.bf16.mxu0 0
      %2521 = vmatpush1.bf16.msra.mxu0 0
      %2522 = vmatprep.subr.bf16.mxu0 0
      %2523 = vmatpush1.bf16.msra.mxu0 0
      %2524 = vmatprep.subr.bf16.mxu0 0
      %2525 = vmatpush1.bf16.msra.mxu0 0
      %2526 = vmatprep.subr.bf16.mxu0 0
      %2527 = vmatpush1.bf16.msra.mxu0 0
      %2528 = vmatprep.mubr.bf16.mxu0 0
      %2529 = vmatmul.mubr.bf16.gmra.mrb[0].mxu0 %v2482
      %v2530 = vpop.f32.mrb[0].mxu0
      %v2531 = vadd.f32 %v2452, %v2530
      %v2532 = vpop.f32.mrb[0].mxu0
      %v2533 = vpop.f32.mrb[0].mxu0
      %v2534 = vadd.f32 %v2452, %v2533
      %v2535 = vpop.f32.mrb[0].mxu0
      %2536 = vmatprep.mubr.bf16.mxu0 0
      %2537 = vmatmul.mubr.bf16.gmra.mrb[0].mxu0 %v2485
      %v2538 = vpop.f32.mrb[0].mxu0
      %v2539 = vadd.f32 %v2452, %v2538
      %v2540 = vpop.f32.mrb[0].mxu0
      %v2541 = vpop.f32.mrb[0].mxu0
      %v2542 = vadd.f32 %v2452, %v2541
      %v2543 = vpop.f32.mrb[0].mxu0
      %2544 = vmatprep.mubr.bf16.mxu0 0
      %2545 = vmatmul.mubr.bf16.gmra.mrb[0].mxu0 %v2488
      %v2546 = vpop.f32.mrb[0].mxu0
      %v2547 = vadd.f32 %v2452, %v2546
      %v2548 = vpop.f32.mrb[0].mxu0
      %v2549 = vpop.f32.mrb[0].mxu0
      %v2550 = vadd.f32 %v2452, %v2549
      %v2551 = vpop.f32.mrb[0].mxu0
      %2552 = vmatprep.mubr.bf16.mxu0 0
      %2553 = vmatmul.mubr.bf16.gmra.mrb[0].mxu0 %v2491
      %v2554 = vpop.f32.mrb[0].mxu0
      %v2555 = vadd.f32 %v2452, %v2554
      %v2556 = vpop.f32.mrb[0].mxu0
      %v2557 = vpop.f32.mrb[0].mxu0
      %v2558 = vadd.f32 %v2452, %v2557
      %v2559 = vpop.f32.mrb[0].mxu0
      %2560 = vdwg.mxu0
      %v2561 = vxor.u32 %v2531, 2147483648
      %v2562 = vxor.u32 %v2534, 2147483648
      %v2563 = vxor.u32 %v2539, 2147483648
      %v2564 = vxor.u32 %v2542, 2147483648
      %v2565 = vxor.u32 %v2547, 2147483648
      %v2566 = vxor.u32 %v2550, 2147483648
      %v2567 = vxor.u32 %v2555, 2147483648
      %v2568 = vxor.u32 %v2558, 2147483648
      %v2569 = vmul.f32 %v2561, 1.442695
      %v2570 = vpow.pop %v2569
      %v2571 = vmul.f32 %v2562, 1.442695
      %v2572 = vpow.pop %v2571
      %v2573 = vmul.f32 %v2563, 1.442695
      %v2574 = vpow.pop %v2573
      %v2575 = vmul.f32 %v2564, 1.442695
      %v2576 = vpow.pop %v2575
      %v2577 = vmul.f32 %v2565, 1.442695
      %v2578 = vpow.pop %v2577
      %v2579 = vmul.f32 %v2566, 1.442695
      %v2580 = vpow.pop %v2579
      %v2581 = vmul.f32 %v2567, 1.442695
      %v2582 = vpow.pop %v2581
      %v2583 = vmul.f32 %v2568, 1.442695
      %v2584 = vpow.pop %v2583
      %v2585 = vadd.f32 %v2570, 1.0
      %v2586 = vadd.f32 %v2572, 1.0
      %v2587 = vadd.f32 %v2574, 1.0
      %v2588 = vadd.f32 %v2576, 1.0
      %v2589 = vadd.f32 %v2578, 1.0
      %v2590 = vadd.f32 %v2580, 1.0
      %v2591 = vadd.f32 %v2582, 1.0
      %v2592 = vadd.f32 %v2584, 1.0
      %v2593 = vrcp.pop %v2585
      %v2594 = vmul.f32 1.0, %v2593
      %v2595 = vrcp.pop %v2586
      %v2596 = vmul.f32 1.0, %v2595
      %v2597 = vrcp.pop %v2587
      %v2598 = vmul.f32 1.0, %v2597
      %v2599 = vrcp.pop %v2588
      %v2600 = vmul.f32 1.0, %v2599
      %v2601 = vrcp.pop %v2589
      %v2602 = vmul.f32 1.0, %v2601
      %v2603 = vrcp.pop %v2590
      %v2604 = vmul.f32 1.0, %v2603
      %v2605 = vrcp.pop %v2591
      %v2606 = vmul.f32 1.0, %v2605
      %v2607 = vrcp.pop %v2592
      %v2608 = vmul.f32 1.0, %v2607
      %v2609 = vmul.f32 %v2531, %v2594
      %v2610 = vmul.f32 %v2534, %v2596
      %v2611 = vmul.f32 %v2539, %v2598
      %v2612 = vmul.f32 %v2542, %v2600
      %v2613 = vmul.f32 %v2547, %v2602
      %v2614 = vmul.f32 %v2550, %v2604
      %v2615 = vmul.f32 %v2555, %v2606
      %v2616 = vmul.f32 %v2558, %v2608
      %s2617 = scalar_lea.vmem [#allocation2], 448
      %2618 = vst [vmem:[%s2617 + $0x1] sm:$0xff] %v2609
      %2619 = vst [vmem:[%s2617 + $0x11] sm:$0xff] %v2610
      %2620 = vst [vmem:[%s2617 + $0x21] sm:$0xff] %v2611
      %2621 = vst [vmem:[%s2617 + $0x31] sm:$0xff] %v2612
      %2622 = vst [vmem:[%s2617 + $0x41] sm:$0xff] %v2613
      %2623 = vst [vmem:[%s2617 + $0x51] sm:$0xff] %v2614
      %2624 = vst [vmem:[%s2617 + $0x61] sm:$0xff] %v2615
      %2625 = vst [vmem:[%s2617 + $0x71] sm:$0xff] %v2616
      %v2626 = vld [vmem:[%s261] sm:$0xff]
      %v2627 = vld [vmem:[%s261 + $0x10] sm:$0xff]
      %v2628 = vld [vmem:[%s261 + $0x20] sm:$0xff]
      %v2629 = vld [vmem:[%s261 + $0x30] sm:$0xff]
      %v2630 = vld [vmem:[%s261 + $0x40] sm:$0xff]
      %v2631 = vld [vmem:[%s261 + $0x50] sm:$0xff]
      %v2632 = vld [vmem:[%s261 + $0x60] sm:$0xff]
      %v2633 = vld [vmem:[%s261 + $0x70] sm:$0xff]
      %v2634 = vld [vmem:[%s249 + $0x1] sm:$0xff]
      %v2635 = vld [vmem:[%s249 + $0x11] sm:$0xff]
      %v2636 = vld [vmem:[%s249 + $0x21] sm:$0xff]
      %v2637 = vld [vmem:[%s249 + $0x31] sm:$0xff]
      %v2638 = vld [vmem:[%s249 + $0x41] sm:$0xff]
      %v2639 = vld [vmem:[%s249 + $0x51] sm:$0xff]
      %v2640 = vld [vmem:[%s249 + $0x61] sm:$0xff]
      %v2641 = vld [vmem:[%s249 + $0x71] sm:$0xff]
      %v2642 = vpack.c.bf16 %v2627, %v2626
      %v2643 = vpack.c.bf16 %v2635, %v2634
      %v2644 = vpack.c.bf16 %v2629, %v2628
      %v2645 = vpack.c.bf16 %v2637, %v2636
      %v2646 = vpack.c.bf16 %v2631, %v2630
      %v2647 = vpack.c.bf16 %v2639, %v2638
      %v2648 = vpack.c.bf16 %v2633, %v2632
      %v2649 = vpack.c.bf16 %v2641, %v2640
      %v2650 = vld [vmem:[%s3] sm:$0xf]
      %v2651 = vld [vmem:[%s3 + $0x4] sm:$0xf]
      %v2652 = vld [vmem:[%s3 + $0x8] sm:$0xf]
      %v2653 = vld [vmem:[%s3 + $0xc] sm:$0xf]
      %v2654 = vld [vmem:[%s3 + $0x10] sm:$0xf]
      %v2655 = vld [vmem:[%s3 + $0x14] sm:$0xf]
      %v2656 = vld [vmem:[%s3 + $0x18] sm:$0xf]
      %v2657 = vld [vmem:[%s3 + $0x1c] sm:$0xf]
      %v2658 = vld [vmem:[%s3 + $0x20] sm:$0xf]
      %v2659 = vld [vmem:[%s3 + $0x24] sm:$0xf]
      %v2660 = vld [vmem:[%s3 + $0x28] sm:$0xf]
      %v2661 = vld [vmem:[%s3 + $0x2c] sm:$0xf]
      %v2662 = vld [vmem:[%s3 + $0x30] sm:$0xf]
      %v2663 = vld [vmem:[%s3 + $0x34] sm:$0xf]
      %v2664 = vld [vmem:[%s3 + $0x38] sm:$0xf]
      %v2665 = vld [vmem:[%s3 + $0x3c] sm:$0xf]
      %v2666 = vld [vmem:[%s3 + $0x40] sm:$0xf]
      %v2667 = vld [vmem:[%s3 + $0x44] sm:$0xf]
      %v2668 = vld [vmem:[%s3 + $0x48] sm:$0xf]
      %v2669 = vld [vmem:[%s3 + $0x4c] sm:$0xf]
      %v2670 = vld [vmem:[%s3 + $0x50] sm:$0xf]
      %v2671 = vld [vmem:[%s3 + $0x54] sm:$0xf]
      %v2672 = vld [vmem:[%s3 + $0x58] sm:$0xf]
      %v2673 = vld [vmem:[%s3 + $0x5c] sm:$0xf]
      %v2674 = vld [vmem:[%s3 + $0x60] sm:$0xf]
      %v2675 = vld [vmem:[%s3 + $0x64] sm:$0xf]
      %v2676 = vld [vmem:[%s3 + $0x68] sm:$0xf]
      %v2677 = vld [vmem:[%s3 + $0x6c] sm:$0xf]
      %v2678 = vld [vmem:[%s3 + $0x70] sm:$0xf]
      %v2679 = vld [vmem:[%s3 + $0x74] sm:$0xf]
      %v2680 = vld [vmem:[%s3 + $0x78] sm:$0xf]
      %v2681 = vld [vmem:[%s3 + $0x7c] sm:$0xf]
      %v2682 = vld [vmem:[%s261 + $0x1] sm:$0xff]
      %v2683 = vld [vmem:[%s261 + $0x11] sm:$0xff]
      %v2684 = vld [vmem:[%s261 + $0x21] sm:$0xff]
      %v2685 = vld [vmem:[%s261 + $0x31] sm:$0xff]
      %v2686 = vld [vmem:[%s261 + $0x41] sm:$0xff]
      %v2687 = vld [vmem:[%s261 + $0x51] sm:$0xff]
      %v2688 = vld [vmem:[%s261 + $0x61] sm:$0xff]
      %v2689 = vld [vmem:[%s261 + $0x71] sm:$0xff]
      %v2690 = vld [vmem:[%s1447] sm:$0xff]
      %v2691 = vld [vmem:[%s1447 + $0x10] sm:$0xff]
      %v2692 = vld [vmem:[%s1447 + $0x20] sm:$0xff]
      %v2693 = vld [vmem:[%s1447 + $0x30] sm:$0xff]
      %v2694 = vld [vmem:[%s1447 + $0x40] sm:$0xff]
      %v2695 = vld [vmem:[%s1447 + $0x50] sm:$0xff]
      %v2696 = vld [vmem:[%s1447 + $0x60] sm:$0xff]
      %v2697 = vld [vmem:[%s1447 + $0x70] sm:$0xff]
      %v2698 = vpack.c.bf16 %v2683, %v2682
      %v2699 = vpack.c.bf16 %v2691, %v2690
      %v2700 = vpack.c.bf16 %v2685, %v2684
      %v2701 = vpack.c.bf16 %v2693, %v2692
      %v2702 = vpack.c.bf16 %v2687, %v2686
      %v2703 = vpack.c.bf16 %v2695, %v2694
      %v2704 = vpack.c.bf16 %v2689, %v2688
      %v2705 = vpack.c.bf16 %v2697, %v2696
      %v2706 = vld [vmem:[%s3 + $0x80] sm:$0xf]
      %v2707 = vld [vmem:[%s3 + $0x84] sm:$0xf]
      %v2708 = vld [vmem:[%s3 + $0x88] sm:$0xf]
      %v2709 = vld [vmem:[%s3 + $0x8c] sm:$0xf]
      %v2710 = vld [vmem:[%s3 + $0x90] sm:$0xf]
      %v2711 = vld [vmem:[%s3 + $0x94] sm:$0xf]
      %v2712 = vld [vmem:[%s3 + $0x98] sm:$0xf]
      %v2713 = vld [vmem:[%s3 + $0x9c] sm:$0xf]
      %v2714 = vld [vmem:[%s3 + $0xa0] sm:$0xf]
      %v2715 = vld [vmem:[%s3 + $0xa4] sm:$0xf]
      %v2716 = vld [vmem:[%s3 + $0xa8] sm:$0xf]
      %v2717 = vld [vmem:[%s3 + $0xac] sm:$0xf]
      %v2718 = vld [vmem:[%s3 + $0xb0] sm:$0xf]
      %v2719 = vld [vmem:[%s3 + $0xb4] sm:$0xf]
      %v2720 = vld [vmem:[%s3 + $0xb8] sm:$0xf]
      %v2721 = vld [vmem:[%s3 + $0xbc] sm:$0xf]
      %v2722 = vld [vmem:[%s3 + $0xc0] sm:$0xf]
      %v2723 = vld [vmem:[%s3 + $0xc4] sm:$0xf]
      %v2724 = vld [vmem:[%s3 + $0xc8] sm:$0xf]
      %v2725 = vld [vmem:[%s3 + $0xcc] sm:$0xf]
      %v2726 = vld [vmem:[%s3 + $0xd0] sm:$0xf]
      %v2727 = vld [vmem:[%s3 + $0xd4] sm:$0xf]
      %v2728 = vld [vmem:[%s3 + $0xd8] sm:$0xf]
      %v2729 = vld [vmem:[%s3 + $0xdc] sm:$0xf]
      %v2730 = vld [vmem:[%s3 + $0xe0] sm:$0xf]
      %v2731 = vld [vmem:[%s3 + $0xe4] sm:$0xf]
      %v2732 = vld [vmem:[%s3 + $0xe8] sm:$0xf]
      %v2733 = vld [vmem:[%s3 + $0xec] sm:$0xf]
      %v2734 = vld [vmem:[%s3 + $0xf0] sm:$0xf]
      %v2735 = vld [vmem:[%s3 + $0xf4] sm:$0xf]
      %v2736 = vld [vmem:[%s3 + $0xf8] sm:$0xf]
      %v2737 = vld [vmem:[%s3 + $0xfc] sm:$0xf]
      %v2770 = vunpack.c.l.b16 %v2706
      %v2771 = vunpack.c.l.b16 %v2707
      %v2772 = vunpack.c.l.b16 %v2708
      %v2773 = vunpack.c.l.b16 %v2709
      %v2774 = vunpack.c.l.b16 %v2710
      %v2775 = vunpack.c.l.b16 %v2711
      %v2776 = vunpack.c.l.b16 %v2712
      %v2777 = vunpack.c.l.b16 %v2713
      %v2778 = vunpack.c.l.b16 %v2714
      %v2779 = vunpack.c.l.b16 %v2715
      %v2780 = vunpack.c.l.b16 %v2716
      %v2781 = vunpack.c.l.b16 %v2717
      %v2782 = vunpack.c.l.b16 %v2718
      %v2783 = vunpack.c.l.b16 %v2719
      %v2784 = vunpack.c.l.b16 %v2720
      %v2785 = vunpack.c.l.b16 %v2721
      %v2786 = vunpack.c.l.b16 %v2722
      %v2787 = vunpack.c.l.b16 %v2723
      %v2788 = vunpack.c.l.b16 %v2724
      %v2789 = vunpack.c.l.b16 %v2725
      %v2790 = vunpack.c.l.b16 %v2726
      %v2791 = vunpack.c.l.b16 %v2727
      %v2792 = vunpack.c.l.b16 %v2728
      %v2793 = vunpack.c.l.b16 %v2729
      %v2794 = vunpack.c.l.b16 %v2730
      %v2795 = vunpack.c.l.b16 %v2731
      %v2796 = vunpack.c.l.b16 %v2732
      %v2797 = vunpack.c.l.b16 %v2733
      %v2798 = vunpack.c.l.b16 %v2734
      %v2799 = vunpack.c.l.b16 %v2735
      %v2800 = vunpack.c.l.b16 %v2736
      %v2801 = vunpack.c.l.b16 %v2737
      %v2802 = vpack.c.b16 %v2771, %v2770
      %v2803 = vpack.c.b16 %v2773, %v2772
      %v2804 = vpack.c.b16 %v2775, %v2774
      %v2805 = vpack.c.b16 %v2777, %v2776
      %v2806 = vpack.c.b16 %v2779, %v2778
      %v2807 = vpack.c.b16 %v2781, %v2780
      %v2808 = vpack.c.b16 %v2783, %v2782
      %v2809 = vpack.c.b16 %v2785, %v2784
      %v2810 = vpack.c.b16 %v2787, %v2786
      %v2811 = vpack.c.b16 %v2789, %v2788
      %v2812 = vpack.c.b16 %v2791, %v2790
      %v2813 = vpack.c.b16 %v2793, %v2792
      %v2814 = vpack.c.b16 %v2795, %v2794
      %v2815 = vpack.c.b16 %v2797, %v2796
      %v2816 = vpack.c.b16 %v2799, %v2798
      %v2817 = vpack.c.b16 %v2801, %v2800
      %2834 = vmatprep.subr.bf16.mxu0 0
      %2835 = vmatpush1.bf16.msra.mxu0 %v2802
      %2836 = vmatprep.subr.bf16.mxu0 0
      %2837 = vmatpush1.bf16.msra.mxu0 %v2803
      %2838 = vmatprep.subr.bf16.mxu0 0
      %2839 = vmatpush1.bf16.msra.mxu0 %v2804
      %2840 = vmatprep.subr.bf16.mxu0 0
      %2841 = vmatpush1.bf16.msra.mxu0 %v2805
      %2842 = vmatprep.subr.bf16.mxu0 0
      %2843 = vmatpush1.bf16.msra.mxu0 %v2806
      %2844 = vmatprep.subr.bf16.mxu0 0
      %2845 = vmatpush1.bf16.msra.mxu0 %v2807
      %2846 = vmatprep.subr.bf16.mxu0 0
      %2847 = vmatpush1.bf16.msra.mxu0 %v2808
      %2848 = vmatprep.subr.bf16.mxu0 0
      %2849 = vmatpush1.bf16.msra.mxu0 %v2809
      %2850 = vmatprep.subr.bf16.mxu0 0
      %2851 = vmatpush1.bf16.msra.mxu0 %v2810
      %2852 = vmatprep.subr.bf16.mxu0 0
      %2853 = vmatpush1.bf16.msra.mxu0 %v2811
      %2854 = vmatprep.subr.bf16.mxu0 0
      %2855 = vmatpush1.bf16.msra.mxu0 %v2812
      %2856 = vmatprep.subr.bf16.mxu0 0
      %2857 = vmatpush1.bf16.msra.mxu0 %v2813
      %2858 = vmatprep.subr.bf16.mxu0 0
      %2859 = vmatpush1.bf16.msra.mxu0 %v2814
      %2860 = vmatprep.subr.bf16.mxu0 0
      %2861 = vmatpush1.bf16.msra.mxu0 %v2815
      %2862 = vmatprep.subr.bf16.mxu0 0
      %2863 = vmatpush1.bf16.msra.mxu0 %v2816
      %2864 = vmatprep.subr.bf16.mxu0 0
      %2865 = vmatpush1.bf16.msra.mxu0 %v2817
      %2866 = vmatprep.mubr.bf16.mxu0 %v2699
      %2867 = vmatmul.mubr.bf16.gmra.mrb[0].mxu0 %v2698
      %v2868 = vpop.f32.mrb[0].mxu0
      %v2869 = vadd.f32 0.0, %v2868
      %v2870 = vpop.f32.mrb[0].mxu0
      %v2871 = vpop.f32.mrb[0].mxu0
      %v2872 = vadd.f32 0.0, %v2871
      %v2873 = vpop.f32.mrb[0].mxu0
      %2874 = vmatprep.mubr.bf16.mxu0 %v2701
      %2875 = vmatmul.mubr.bf16.gmra.mrb[0].mxu0 %v2700
      %v2876 = vpop.f32.mrb[0].mxu0
      %v2877 = vadd.f32 0.0, %v2876
      %v2878 = vpop.f32.mrb[0].mxu0
      %v2879 = vpop.f32.mrb[0].mxu0
      %v2880 = vadd.f32 0.0, %v2879
      %v2881 = vpop.f32.mrb[0].mxu0
      %2882 = vmatprep.mubr.bf16.mxu0 %v2703
      %2883 = vmatmul.mubr.bf16.gmra.mrb[0].mxu0 %v2702
      %v2884 = vpop.f32.mrb[0].mxu0
      %v2885 = vadd.f32 0.0, %v2884
      %v2886 = vpop.f32.mrb[0].mxu0
      %v2887 = vpop.f32.mrb[0].mxu0
      %v2888 = vadd.f32 0.0, %v2887
      %v2889 = vpop.f32.mrb[0].mxu0
      %2890 = vmatprep.mubr.bf16.mxu0 %v2705
      %2891 = vmatmul.mubr.bf16.gmra.mrb[0].mxu0 %v2704
      %v2892 = vpop.f32.mrb[0].mxu0
      %v2893 = vadd.f32 0.0, %v2892
      %v2894 = vpop.f32.mrb[0].mxu0
      %v2895 = vpop.f32.mrb[0].mxu0
      %v2896 = vadd.f32 0.0, %v2895
      %v2897 = vpop.f32.mrb[0].mxu0
      %2898 = vdwg.mxu0
      %v2931 = vunpack.c.l.b16 %v2650
      %v2932 = vunpack.c.l.b16 %v2651
      %v2933 = vunpack.c.l.b16 %v2652
      %v2934 = vunpack.c.l.b16 %v2653
      %v2935 = vunpack.c.l.b16 %v2654
      %v2936 = vunpack.c.l.b16 %v2655
      %v2937 = vunpack.c.l.b16 %v2656
      %v2938 = vunpack.c.l.b16 %v2657
      %v2939 = vunpack.c.l.b16 %v2658
      %v2940 = vunpack.c.l.b16 %v2659
      %v2941 = vunpack.c.l.b16 %v2660
      %v2942 = vunpack.c.l.b16 %v2661
      %v2943 = vunpack.c.l.b16 %v2662
      %v2944 = vunpack.c.l.b16 %v2663
      %v2945 = vunpack.c.l.b16 %v2664
      %v2946 = vunpack.c.l.b16 %v2665
      %v2947 = vunpack.c.l.b16 %v2666
      %v2948 = vunpack.c.l.b16 %v2667
      %v2949 = vunpack.c.l.b16 %v2668
      %v2950 = vunpack.c.l.b16 %v2669
      %v2951 = vunpack.c.l.b16 %v2670
      %v2952 = vunpack.c.l.b16 %v2671
      %v2953 = vunpack.c.l.b16 %v2672
      %v2954 = vunpack.c.l.b16 %v2673
      %v2955 = vunpack.c.l.b16 %v2674
      %v2956 = vunpack.c.l.b16 %v2675
      %v2957 = vunpack.c.l.b16 %v2676
      %v2958 = vunpack.c.l.b16 %v2677
      %v2959 = vunpack.c.l.b16 %v2678
      %v2960 = vunpack.c.l.b16 %v2679
      %v2961 = vunpack.c.l.b16 %v2680
      %v2962 = vunpack.c.l.b16 %v2681
      %v2963 = vpack.c.b16 %v2932, %v2931
      %v2964 = vpack.c.b16 %v2934, %v2933
      %v2965 = vpack.c.b16 %v2936, %v2935
      %v2966 = vpack.c.b16 %v2938, %v2937
      %v2967 = vpack.c.b16 %v2940, %v2939
      %v2968 = vpack.c.b16 %v2942, %v2941
      %v2969 = vpack.c.b16 %v2944, %v2943
      %v2970 = vpack.c.b16 %v2946, %v2945
      %v2971 = vpack.c.b16 %v2948, %v2947
      %v2972 = vpack.c.b16 %v2950, %v2949
      %v2973 = vpack.c.b16 %v2952, %v2951
      %v2974 = vpack.c.b16 %v2954, %v2953
      %v2975 = vpack.c.b16 %v2956, %v2955
      %v2976 = vpack.c.b16 %v2958, %v2957
      %v2977 = vpack.c.b16 %v2960, %v2959
      %v2978 = vpack.c.b16 %v2962, %v2961
      %2995 = vmatprep.subr.bf16.mxu0 0
      %2996 = vmatpush1.bf16.msra.mxu0 %v2963
      %2997 = vmatprep.subr.bf16.mxu0 0
      %2998 = vmatpush1.bf16.msra.mxu0 %v2964
      %2999 = vmatprep.subr.bf16.mxu0 0
      %3000 = vmatpush1.bf16.msra.mxu0 %v2965
      %3001 = vmatprep.subr.bf16.mxu0 0
      %3002 = vmatpush1.bf16.msra.mxu0 %v2966
      %3003 = vmatprep.subr.bf16.mxu0 0
      %3004 = vmatpush1.bf16.msra.mxu0 %v2967
      %3005 = vmatprep.subr.bf16.mxu0 0
      %3006 = vmatpush1.bf16.msra.mxu0 %v2968
      %3007 = vmatprep.subr.bf16.mxu0 0
      %3008 = vmatpush1.bf16.msra.mxu0 %v2969
      %3009 = vmatprep.subr.bf16.mxu0 0
      %3010 = vmatpush1.bf16.msra.mxu0 %v2970
      %3011 = vmatprep.subr.bf16.mxu0 0
      %3012 = vmatpush1.bf16.msra.mxu0 %v2971
      %3013 = vmatprep.subr.bf16.mxu0 0
      %3014 = vmatpush1.bf16.msra.mxu0 %v2972
      %3015 = vmatprep.subr.bf16.mxu0 0
      %3016 = vmatpush1.bf16.msra.mxu0 %v2973
      %3017 = vmatprep.subr.bf16.mxu0 0
      %3018 = vmatpush1.bf16.msra.mxu0 %v2974
      %3019 = vmatprep.subr.bf16.mxu0 0
      %3020 = vmatpush1.bf16.msra.mxu0 %v2975
      %3021 = vmatprep.subr.bf16.mxu0 0
      %3022 = vmatpush1.bf16.msra.mxu0 %v2976
      %3023 = vmatprep.subr.bf16.mxu0 0
      %3024 = vmatpush1.bf16.msra.mxu0 %v2977
      %3025 = vmatprep.subr.bf16.mxu0 0
      %3026 = vmatpush1.bf16.msra.mxu0 %v2978
      %3027 = vmatprep.mubr.bf16.mxu0 %v2643
      %3028 = vmatmul.mubr.bf16.gmra.mrb[0].mxu0 %v2642
      %v3029 = vpop.f32.mrb[0].mxu0
      %v3030 = vadd.f32 %v2869, %v3029
      %v3031 = vpop.f32.mrb[0].mxu0
      %v3032 = vpop.f32.mrb[0].mxu0
      %v3033 = vadd.f32 %v2872, %v3032
      %v3034 = vpop.f32.mrb[0].mxu0
      %3035 = vmatprep.mubr.bf16.mxu0 %v2645
      %3036 = vmatmul.mubr.bf16.gmra.mrb[0].mxu0 %v2644
      %v3037 = vpop.f32.mrb[0].mxu0
      %v3038 = vadd.f32 %v2877, %v3037
      %v3039 = vpop.f32.mrb[0].mxu0
      %v3040 = vpop.f32.mrb[0].mxu0
      %v3041 = vadd.f32 %v2880, %v3040
      %v3042 = vpop.f32.mrb[0].mxu0
      %3043 = vmatprep.mubr.bf16.mxu0 %v2647
      %3044 = vmatmul.mubr.bf16.gmra.mrb[0].mxu0 %v2646
      %v3045 = vpop.f32.mrb[0].mxu0
      %v3046 = vadd.f32 %v2885, %v3045
      %v3047 = vpop.f32.mrb[0].mxu0
      %v3048 = vpop.f32.mrb[0].mxu0
      %v3049 = vadd.f32 %v2888, %v3048
      %v3050 = vpop.f32.mrb[0].mxu0
      %3051 = vmatprep.mubr.bf16.mxu0 %v2649
      %3052 = vmatmul.mubr.bf16.gmra.mrb[0].mxu0 %v2648
      %v3053 = vpop.f32.mrb[0].mxu0
      %v3054 = vadd.f32 %v2893, %v3053
      %v3055 = vpop.f32.mrb[0].mxu0
      %v3056 = vpop.f32.mrb[0].mxu0
      %v3057 = vadd.f32 %v2896, %v3056
      %v3058 = vpop.f32.mrb[0].mxu0
      %3059 = vdwg.mxu0
      %v3060 = vld [vmem:[%s863 + $0x1] sm:$0xff]
      %v3061 = vld [vmem:[%s863 + $0x11] sm:$0xff]
      %v3062 = vld [vmem:[%s863 + $0x21] sm:$0xff]
      %v3063 = vld [vmem:[%s863 + $0x31] sm:$0xff]
      %v3064 = vld [vmem:[%s863 + $0x41] sm:$0xff]
      %v3065 = vld [vmem:[%s863 + $0x51] sm:$0xff]
      %v3066 = vld [vmem:[%s863 + $0x61] sm:$0xff]
      %v3067 = vld [vmem:[%s863 + $0x71] sm:$0xff]
      %v3068 = vld [vmem:[%s1447 + $0x1] sm:$0xff]
      %v3069 = vld [vmem:[%s1447 + $0x11] sm:$0xff]
      %v3070 = vld [vmem:[%s1447 + $0x21] sm:$0xff]
      %v3071 = vld [vmem:[%s1447 + $0x31] sm:$0xff]
      %v3072 = vld [vmem:[%s1447 + $0x41] sm:$0xff]
      %v3073 = vld [vmem:[%s1447 + $0x51] sm:$0xff]
      %v3074 = vld [vmem:[%s1447 + $0x61] sm:$0xff]
      %v3075 = vld [vmem:[%s1447 + $0x71] sm:$0xff]
      %v3076 = vpack.c.bf16 %v3061, %v3060
      %v3077 = vpack.c.bf16 %v3069, %v3068
      %v3078 = vpack.c.bf16 %v3063, %v3062
      %v3079 = vpack.c.bf16 %v3071, %v3070
      %v3080 = vpack.c.bf16 %v3065, %v3064
      %v3081 = vpack.c.bf16 %v3073, %v3072
      %v3082 = vpack.c.bf16 %v3067, %v3066
      %v3083 = vpack.c.bf16 %v3075, %v3074
      %v3084 = vld [vmem:[%s3 + $0x100] sm:$0xf]
      %v3085 = vld [vmem:[%s3 + $0x104] sm:$0xf]
      %v3086 = vld [vmem:[%s3 + $0x108] sm:$0xf]
      %v3087 = vld [vmem:[%s3 + $0x10c] sm:$0xf]
      %v3088 = vld [vmem:[%s3 + $0x110] sm:$0xf]
      %v3089 = vld [vmem:[%s3 + $0x114] sm:$0xf]
      %v3090 = vld [vmem:[%s3 + $0x118] sm:$0xf]
      %v3091 = vld [vmem:[%s3 + $0x11c] sm:$0xf]
      %v3092 = vld [vmem:[%s3 + $0x120] sm:$0xf]
      %v3093 = vld [vmem:[%s3 + $0x124] sm:$0xf]
      %v3094 = vld [vmem:[%s3 + $0x128] sm:$0xf]
      %v3095 = vld [vmem:[%s3 + $0x12c] sm:$0xf]
      %v3096 = vld [vmem:[%s3 + $0x130] sm:$0xf]
      %v3097 = vld [vmem:[%s3 + $0x134] sm:$0xf]
      %v3098 = vld [vmem:[%s3 + $0x138] sm:$0xf]
      %v3099 = vld [vmem:[%s3 + $0x13c] sm:$0xf]
      %v3100 = vld [vmem:[%s3 + $0x140] sm:$0xf]
      %v3101 = vld [vmem:[%s3 + $0x144] sm:$0xf]
      %v3102 = vld [vmem:[%s3 + $0x148] sm:$0xf]
      %v3103 = vld [vmem:[%s3 + $0x14c] sm:$0xf]
      %v3104 = vld [vmem:[%s3 + $0x150] sm:$0xf]
      %v3105 = vld [vmem:[%s3 + $0x154] sm:$0xf]
      %v3106 = vld [vmem:[%s3 + $0x158] sm:$0xf]
      %v3107 = vld [vmem:[%s3 + $0x15c] sm:$0xf]
      %v3108 = vld [vmem:[%s3 + $0x160] sm:$0xf]
      %v3109 = vld [vmem:[%s3 + $0x164] sm:$0xf]
      %v3110 = vld [vmem:[%s3 + $0x168] sm:$0xf]
      %v3111 = vld [vmem:[%s3 + $0x16c] sm:$0xf]
      %v3112 = vld [vmem:[%s3 + $0x170] sm:$0xf]
      %v3113 = vld [vmem:[%s3 + $0x174] sm:$0xf]
      %v3114 = vld [vmem:[%s3 + $0x178] sm:$0xf]
      %v3115 = vld [vmem:[%s3 + $0x17c] sm:$0xf]
      %v3148 = vunpack.c.l.b16 %v3084
      %v3149 = vunpack.c.l.b16 %v3085
      %v3150 = vunpack.c.l.b16 %v3086
      %v3151 = vunpack.c.l.b16 %v3087
      %v3152 = vunpack.c.l.b16 %v3088
      %v3153 = vunpack.c.l.b16 %v3089
      %v3154 = vunpack.c.l.b16 %v3090
      %v3155 = vunpack.c.l.b16 %v3091
      %v3156 = vunpack.c.l.b16 %v3092
      %v3157 = vunpack.c.l.b16 %v3093
      %v3158 = vunpack.c.l.b16 %v3094
      %v3159 = vunpack.c.l.b16 %v3095
      %v3160 = vunpack.c.l.b16 %v3096
      %v3161 = vunpack.c.l.b16 %v3097
      %v3162 = vunpack.c.l.b16 %v3098
      %v3163 = vunpack.c.l.b16 %v3099
      %v3164 = vunpack.c.l.b16 %v3100
      %v3165 = vunpack.c.l.b16 %v3101
      %v3166 = vunpack.c.l.b16 %v3102
      %v3167 = vunpack.c.l.b16 %v3103
      %v3168 = vunpack.c.l.b16 %v3104
      %v3169 = vunpack.c.l.b16 %v3105
      %v3170 = vunpack.c.l.b16 %v3106
      %v3171 = vunpack.c.l.b16 %v3107
      %v3172 = vunpack.c.l.b16 %v3108
      %v3173 = vunpack.c.l.b16 %v3109
      %v3174 = vunpack.c.l.b16 %v3110
      %v3175 = vunpack.c.l.b16 %v3111
      %v3176 = vunpack.c.l.b16 %v3112
      %v3177 = vunpack.c.l.b16 %v3113
      %v3178 = vunpack.c.l.b16 %v3114
      %v3179 = vunpack.c.l.b16 %v3115
      %v3180 = vpack.c.b16 %v3149, %v3148
      %v3181 = vpack.c.b16 %v3151, %v3150
      %v3182 = vpack.c.b16 %v3153, %v3152
      %v3183 = vpack.c.b16 %v3155, %v3154
      %v3184 = vpack.c.b16 %v3157, %v3156
      %v3185 = vpack.c.b16 %v3159, %v3158
      %v3186 = vpack.c.b16 %v3161, %v3160
      %v3187 = vpack.c.b16 %v3163, %v3162
      %v3188 = vpack.c.b16 %v3165, %v3164
      %v3189 = vpack.c.b16 %v3167, %v3166
      %v3190 = vpack.c.b16 %v3169, %v3168
      %v3191 = vpack.c.b16 %v3171, %v3170
      %v3192 = vpack.c.b16 %v3173, %v3172
      %v3193 = vpack.c.b16 %v3175, %v3174
      %v3194 = vpack.c.b16 %v3177, %v3176
      %v3195 = vpack.c.b16 %v3179, %v3178
      %3212 = vmatprep.subr.bf16.mxu0 0
      %3213 = vmatpush1.bf16.msra.mxu0 %v3180
      %3214 = vmatprep.subr.bf16.mxu0 0
      %3215 = vmatpush1.bf16.msra.mxu0 %v3181
      %3216 = vmatprep.subr.bf16.mxu0 0
      %3217 = vmatpush1.bf16.msra.mxu0 %v3182
      %3218 = vmatprep.subr.bf16.mxu0 0
      %3219 = vmatpush1.bf16.msra.mxu0 %v3183
      %3220 = vmatprep.subr.bf16.mxu0 0
      %3221 = vmatpush1.bf16.msra.mxu0 %v3184
      %3222 = vmatprep.subr.bf16.mxu0 0
      %3223 = vmatpush1.bf16.msra.mxu0 %v3185
      %3224 = vmatprep.subr.bf16.mxu0 0
      %3225 = vmatpush1.bf16.msra.mxu0 %v3186
      %3226 = vmatprep.subr.bf16.mxu0 0
      %3227 = vmatpush1.bf16.msra.mxu0 %v3187
      %3228 = vmatprep.subr.bf16.mxu0 0
      %3229 = vmatpush1.bf16.msra.mxu0 %v3188
      %3230 = vmatprep.subr.bf16.mxu0 0
      %3231 = vmatpush1.bf16.msra.mxu0 %v3189
      %3232 = vmatprep.subr.bf16.mxu0 0
      %3233 = vmatpush1.bf16.msra.mxu0 %v3190
      %3234 = vmatprep.subr.bf16.mxu0 0
      %3235 = vmatpush1.bf16.msra.mxu0 %v3191
      %3236 = vmatprep.subr.bf16.mxu0 0
      %3237 = vmatpush1.bf16.msra.mxu0 %v3192
      %3238 = vmatprep.subr.bf16.mxu0 0
      %3239 = vmatpush1.bf16.msra.mxu0 %v3193
      %3240 = vmatprep.subr.bf16.mxu0 0
      %3241 = vmatpush1.bf16.msra.mxu0 %v3194
      %3242 = vmatprep.subr.bf16.mxu0 0
      %3243 = vmatpush1.bf16.msra.mxu0 %v3195
      %3244 = vmatprep.mubr.bf16.mxu0 %v3077
      %3245 = vmatmul.mubr.bf16.gmra.mrb[0].mxu0 %v3076
      %v3246 = vpop.f32.mrb[0].mxu0
      %v3247 = vadd.f32 0.0, %v3246
      %v3248 = vpop.f32.mrb[0].mxu0
      %v3249 = vpop.f32.mrb[0].mxu0
      %v3250 = vadd.f32 0.0, %v3249
      %v3251 = vpop.f32.mrb[0].mxu0
      %3252 = vmatprep.mubr.bf16.mxu0 %v3079
      %3253 = vmatmul.mubr.bf16.gmra.mrb[0].mxu0 %v3078
      %v3254 = vpop.f32.mrb[0].mxu0
      %v3255 = vadd.f32 0.0, %v3254
      %v3256 = vpop.f32.mrb[0].mxu0
      %v3257 = vpop.f32.mrb[0].mxu0
      %v3258 = vadd.f32 0.0, %v3257
      %v3259 = vpop.f32.mrb[0].mxu0
      %3260 = vmatprep.mubr.bf16.mxu0 %v3081
      %3261 = vmatmul.mubr.bf16.gmra.mrb[0].mxu0 %v3080
      %v3262 = vpop.f32.mrb[0].mxu0
      %v3263 = vadd.f32 0.0, %v3262
      %v3264 = vpop.f32.mrb[0].mxu0
      %v3265 = vpop.f32.mrb[0].mxu0
      %v3266 = vadd.f32 0.0, %v3265
      %v3267 = vpop.f32.mrb[0].mxu0
      %3268 = vmatprep.mubr.bf16.mxu0 %v3083
      %3269 = vmatmul.mubr.bf16.gmra.mrb[0].mxu0 %v3082
      %v3270 = vpop.f32.mrb[0].mxu0
      %v3271 = vadd.f32 0.0, %v3270
      %v3272 = vpop.f32.mrb[0].mxu0
      %v3273 = vpop.f32.mrb[0].mxu0
      %v3274 = vadd.f32 0.0, %v3273
      %v3275 = vpop.f32.mrb[0].mxu0
      %3276 = vdwg.mxu0
      %v3277 = vadd.f32 %v3030, %v3247
      %v3278 = vadd.f32 %v3033, %v3250
      %v3279 = vadd.f32 %v3038, %v3255
      %v3280 = vadd.f32 %v3041, %v3258
      %v3281 = vadd.f32 %v3046, %v3263
      %v3282 = vadd.f32 %v3049, %v3266
      %v3283 = vadd.f32 %v3054, %v3271
      %v3284 = vadd.f32 %v3057, %v3274
      %v3285 = vld [vmem:[%s2617] sm:$0xff]
      %v3286 = vld [vmem:[%s2617 + $0x10] sm:$0xff]
      %v3287 = vld [vmem:[%s2617 + $0x20] sm:$0xff]
      %v3288 = vld [vmem:[%s2617 + $0x30] sm:$0xff]
      %v3289 = vld [vmem:[%s2617 + $0x40] sm:$0xff]
      %v3290 = vld [vmem:[%s2617 + $0x50] sm:$0xff]
      %v3291 = vld [vmem:[%s2617 + $0x60] sm:$0xff]
      %v3292 = vld [vmem:[%s2617 + $0x70] sm:$0xff]
      %v3293 = vld [vmem:[%s2033 + $0x1] sm:$0xff]
      %v3294 = vld [vmem:[%s2033 + $0x11] sm:$0xff]
      %v3295 = vld [vmem:[%s2033 + $0x21] sm:$0xff]
      %v3296 = vld [vmem:[%s2033 + $0x31] sm:$0xff]
      %v3297 = vld [vmem:[%s2033 + $0x41] sm:$0xff]
      %v3298 = vld [vmem:[%s2033 + $0x51] sm:$0xff]
      %v3299 = vld [vmem:[%s2033 + $0x61] sm:$0xff]
      %v3300 = vld [vmem:[%s2033 + $0x71] sm:$0xff]
      %v3301 = vpack.c.bf16 %v3286, %v3285
      %v3302 = vpack.c.bf16 %v3294, %v3293
      %v3303 = vpack.c.bf16 %v3288, %v3287
      %v3304 = vpack.c.bf16 %v3296, %v3295
      %v3305 = vpack.c.bf16 %v3290, %v3289
      %v3306 = vpack.c.bf16 %v3298, %v3297
      %v3307 = vpack.c.bf16 %v3292, %v3291
      %v3308 = vpack.c.bf16 %v3300, %v3299
      %v3309 = vld [vmem:[%s3 + $0x180] sm:$0xf]
      %v3310 = vld [vmem:[%s3 + $0x184] sm:$0xf]
      %v3311 = vld [vmem:[%s3 + $0x188] sm:$0xf]
      %v3312 = vld [vmem:[%s3 + $0x18c] sm:$0xf]
      %v3313 = vld [vmem:[%s3 + $0x190] sm:$0xf]
      %v3314 = vld [vmem:[%s3 + $0x194] sm:$0xf]
      %v3315 = vld [vmem:[%s3 + $0x198] sm:$0xf]
      %v3316 = vld [vmem:[%s3 + $0x19c] sm:$0xf]
      %v3317 = vld [vmem:[%s3 + $0x1a0] sm:$0xf]
      %v3318 = vld [vmem:[%s3 + $0x1a4] sm:$0xf]
      %v3319 = vld [vmem:[%s3 + $0x1a8] sm:$0xf]
      %v3320 = vld [vmem:[%s3 + $0x1ac] sm:$0xf]
      %v3321 = vld [vmem:[%s3 + $0x1b0] sm:$0xf]
      %v3322 = vld [vmem:[%s3 + $0x1b4] sm:$0xf]
      %v3323 = vld [vmem:[%s3 + $0x1b8] sm:$0xf]
      %v3324 = vld [vmem:[%s3 + $0x1bc] sm:$0xf]
      %v3325 = vld [vmem:[%s3 + $0x1c0] sm:$0xf]
      %v3326 = vld [vmem:[%s3 + $0x1c4] sm:$0xf]
      %v3327 = vld [vmem:[%s3 + $0x1c8] sm:$0xf]
      %v3328 = vld [vmem:[%s3 + $0x1cc] sm:$0xf]
      %v3329 = vld [vmem:[%s3 + $0x1d0] sm:$0xf]
      %v3330 = vld [vmem:[%s3 + $0x1d4] sm:$0xf]
      %v3331 = vld [vmem:[%s3 + $0x1d8] sm:$0xf]
      %v3332 = vld [vmem:[%s3 + $0x1dc] sm:$0xf]
      %v3333 = vld [vmem:[%s3 + $0x1e0] sm:$0xf]
      %v3334 = vld [vmem:[%s3 + $0x1e4] sm:$0xf]
      %v3335 = vld [vmem:[%s3 + $0x1e8] sm:$0xf]
      %v3336 = vld [vmem:[%s3 + $0x1ec] sm:$0xf]
      %v3337 = vld [vmem:[%s3 + $0x1f0] sm:$0xf]
      %v3338 = vld [vmem:[%s3 + $0x1f4] sm:$0xf]
      %v3339 = vld [vmem:[%s3 + $0x1f8] sm:$0xf]
      %v3340 = vld [vmem:[%s3 + $0x1fc] sm:$0xf]
      %v3373 = vunpack.c.l.b16 %v3309
      %v3374 = vunpack.c.l.b16 %v3310
      %v3375 = vunpack.c.l.b16 %v3311
      %v3376 = vunpack.c.l.b16 %v3312
      %v3377 = vunpack.c.l.b16 %v3313
      %v3378 = vunpack.c.l.b16 %v3314
      %v3379 = vunpack.c.l.b16 %v3315
      %v3380 = vunpack.c.l.b16 %v3316
      %v3381 = vunpack.c.l.b16 %v3317
      %v3382 = vunpack.c.l.b16 %v3318
      %v3383 = vunpack.c.l.b16 %v3319
      %v3384 = vunpack.c.l.b16 %v3320
      %v3385 = vunpack.c.l.b16 %v3321
      %v3386 = vunpack.c.l.b16 %v3322
      %v3387 = vunpack.c.l.b16 %v3323
      %v3388 = vunpack.c.l.b16 %v3324
      %v3389 = vunpack.c.l.b16 %v3325
      %v3390 = vunpack.c.l.b16 %v3326
      %v3391 = vunpack.c.l.b16 %v3327
      %v3392 = vunpack.c.l.b16 %v3328
      %v3393 = vunpack.c.l.b16 %v3329
      %v3394 = vunpack.c.l.b16 %v3330
      %v3395 = vunpack.c.l.b16 %v3331
      %v3396 = vunpack.c.l.b16 %v3332
      %v3397 = vunpack.c.l.b16 %v3333
      %v3398 = vunpack.c.l.b16 %v3334
      %v3399 = vunpack.c.l.b16 %v3335
      %v3400 = vunpack.c.l.b16 %v3336
      %v3401 = vunpack.c.l.b16 %v3337
      %v3402 = vunpack.c.l.b16 %v3338
      %v3403 = vunpack.c.l.b16 %v3339
      %v3404 = vunpack.c.l.b16 %v3340
      %v3405 = vpack.c.b16 %v3374, %v3373
      %v3406 = vpack.c.b16 %v3376, %v3375
      %v3407 = vpack.c.b16 %v3378, %v3377
      %v3408 = vpack.c.b16 %v3380, %v3379
      %v3409 = vpack.c.b16 %v3382, %v3381
      %v3410 = vpack.c.b16 %v3384, %v3383
      %v3411 = vpack.c.b16 %v3386, %v3385
      %v3412 = vpack.c.b16 %v3388, %v3387
      %v3413 = vpack.c.b16 %v3390, %v3389
      %v3414 = vpack.c.b16 %v3392, %v3391
      %v3415 = vpack.c.b16 %v3394, %v3393
      %v3416 = vpack.c.b16 %v3396, %v3395
      %v3417 = vpack.c.b16 %v3398, %v3397
      %v3418 = vpack.c.b16 %v3400, %v3399
      %v3419 = vpack.c.b16 %v3402, %v3401
      %v3420 = vpack.c.b16 %v3404, %v3403
      %3437 = vmatprep.subr.bf16.mxu0 0
      %3438 = vmatpush1.bf16.msra.mxu0 %v3405
      %3439 = vmatprep.subr.bf16.mxu0 0
      %3440 = vmatpush1.bf16.msra.mxu0 %v3406
      %3441 = vmatprep.subr.bf16.mxu0 0
      %3442 = vmatpush1.bf16.msra.mxu0 %v3407
      %3443 = vmatprep.subr.bf16.mxu0 0
      %3444 = vmatpush1.bf16.msra.mxu0 %v3408
      %3445 = vmatprep.subr.bf16.mxu0 0
      %3446 = vmatpush1.bf16.msra.mxu0 %v3409
      %3447 = vmatprep.subr.bf16.mxu0 0
      %3448 = vmatpush1.bf16.msra.mxu0 %v3410
      %3449 = vmatprep.subr.bf16.mxu0 0
      %3450 = vmatpush1.bf16.msra.mxu0 %v3411
      %3451 = vmatprep.subr.bf16.mxu0 0
      %3452 = vmatpush1.bf16.msra.mxu0 %v3412
      %3453 = vmatprep.subr.bf16.mxu0 0
      %3454 = vmatpush1.bf16.msra.mxu0 %v3413
      %3455 = vmatprep.subr.bf16.mxu0 0
      %3456 = vmatpush1.bf16.msra.mxu0 %v3414
      %3457 = vmatprep.subr.bf16.mxu0 0
      %3458 = vmatpush1.bf16.msra.mxu0 %v3415
      %3459 = vmatprep.subr.bf16.mxu0 0
      %3460 = vmatpush1.bf16.msra.mxu0 %v3416
      %3461 = vmatprep.subr.bf16.mxu0 0
      %3462 = vmatpush1.bf16.msra.mxu0 %v3417
      %3463 = vmatprep.subr.bf16.mxu0 0
      %3464 = vmatpush1.bf16.msra.mxu0 %v3418
      %3465 = vmatprep.subr.bf16.mxu0 0
      %3466 = vmatpush1.bf16.msra.mxu0 %v3419
      %3467 = vmatprep.subr.bf16.mxu0 0
      %3468 = vmatpush1.bf16.msra.mxu0 %v3420
      %3469 = vmatprep.mubr.bf16.mxu0 %v3302
      %3470 = vmatmul.mubr.bf16.gmra.mrb[0].mxu0 %v3301
      %v3471 = vpop.f32.mrb[0].mxu0
      %v3472 = vadd.f32 0.0, %v3471
      %v3473 = vpop.f32.mrb[0].mxu0
      %v3474 = vpop.f32.mrb[0].mxu0
      %v3475 = vadd.f32 0.0, %v3474
      %v3476 = vpop.f32.mrb[0].mxu0
      %3477 = vmatprep.mubr.bf16.mxu0 %v3304
      %3478 = vmatmul.mubr.bf16.gmra.mrb[0].mxu0 %v3303
      %v3479 = vpop.f32.mrb[0].mxu0
      %v3480 = vadd.f32 0.0, %v3479
      %v3481 = vpop.f32.mrb[0].mxu0
      %v3482 = vpop.f32.mrb[0].mxu0
      %v3483 = vadd.f32 0.0, %v3482
      %v3484 = vpop.f32.mrb[0].mxu0
      %3485 = vmatprep.mubr.bf16.mxu0 %v3306
      %3486 = vmatmul.mubr.bf16.gmra.mrb[0].mxu0 %v3305
      %v3487 = vpop.f32.mrb[0].mxu0
      %v3488 = vadd.f32 0.0, %v3487
      %v3489 = vpop.f32.mrb[0].mxu0
      %v3490 = vpop.f32.mrb[0].mxu0
      %v3491 = vadd.f32 0.0, %v3490
      %v3492 = vpop.f32.mrb[0].mxu0
      %3493 = vmatprep.mubr.bf16.mxu0 %v3308
      %3494 = vmatmul.mubr.bf16.gmra.mrb[0].mxu0 %v3307
      %v3495 = vpop.f32.mrb[0].mxu0
      %v3496 = vadd.f32 0.0, %v3495
      %v3497 = vpop.f32.mrb[0].mxu0
      %v3498 = vpop.f32.mrb[0].mxu0
      %v3499 = vadd.f32 0.0, %v3498
      %v3500 = vpop.f32.mrb[0].mxu0
      %3501 = vdwg.mxu0
      %v3502 = vadd.f32 %v3277, %v3472
      %v3503 = vadd.f32 %v3278, %v3475
      %v3504 = vadd.f32 %v3279, %v3480
      %v3505 = vadd.f32 %v3280, %v3483
      %v3506 = vadd.f32 %v3281, %v3488
      %v3507 = vadd.f32 %v3282, %v3491
      %v3508 = vadd.f32 %v3283, %v3496
      %v3509 = vadd.f32 %v3284, %v3499
      %v3510 = vld [vmem:[%s2617 + $0x1] sm:$0xff]
      %v3511 = vld [vmem:[%s2617 + $0x11] sm:$0xff]
      %v3512 = vld [vmem:[%s2617 + $0x21] sm:$0xff]
      %v3513 = vld [vmem:[%s2617 + $0x31] sm:$0xff]
      %v3514 = vld [vmem:[%s2617 + $0x41] sm:$0xff]
      %v3515 = vld [vmem:[%s2617 + $0x51] sm:$0xff]
      %v3516 = vld [vmem:[%s2617 + $0x61] sm:$0xff]
      %v3517 = vld [vmem:[%s2617 + $0x71] sm:$0xff]
      %v3518 = vpack.c.bf16 %v3511, %v3510
      %v3519 = vpack.c.bf16 %v3513, %v3512
      %v3520 = vpack.c.bf16 %v3515, %v3514
      %v3521 = vpack.c.bf16 %v3517, %v3516
      %v3522 = vld [vmem:[%s3 + $0x200] sm:$0xf]
      %v3523 = vld [vmem:[%s3 + $0x204] sm:$0xf]
      %v3524 = vld [vmem:[%s3 + $0x208] sm:$0xf]
      %v3525 = vld [vmem:[%s3 + $0x20c] sm:$0xf]
      %v3526 = vld [vmem:[%s3 + $0x210] sm:$0xf]
      %v3527 = vld [vmem:[%s3 + $0x214] sm:$0xf]
      %v3528 = vld [vmem:[%s3 + $0x218] sm:$0xf]
      %v3529 = vld [vmem:[%s3 + $0x21c] sm:$0xf]
      %v3530 = vld [vmem:[%s3 + $0x220] sm:$0xf]
      %v3531 = vld [vmem:[%s3 + $0x224] sm:$0xf]
      %v3532 = vld [vmem:[%s3 + $0x228] sm:$0xf]
      %v3533 = vld [vmem:[%s3 + $0x22c] sm:$0xf]
      %v3534 = vld [vmem:[%s3 + $0x230] sm:$0xf]
      %v3535 = vld [vmem:[%s3 + $0x234] sm:$0xf]
      %v3536 = vld [vmem:[%s3 + $0x238] sm:$0xf]
      %v3537 = vld [vmem:[%s3 + $0x23c] sm:$0xf]
      %v3554 = vunpack.c.l.b16 %v3522
      %v3555 = vunpack.c.l.b16 %v3523
      %v3556 = vunpack.c.l.b16 %v3524
      %v3557 = vunpack.c.l.b16 %v3525
      %v3558 = vunpack.c.l.b16 %v3526
      %v3559 = vunpack.c.l.b16 %v3527
      %v3560 = vunpack.c.l.b16 %v3528
      %v3561 = vunpack.c.l.b16 %v3529
      %v3562 = vunpack.c.l.b16 %v3530
      %v3563 = vunpack.c.l.b16 %v3531
      %v3564 = vunpack.c.l.b16 %v3532
      %v3565 = vunpack.c.l.b16 %v3533
      %v3566 = vunpack.c.l.b16 %v3534
      %v3567 = vunpack.c.l.b16 %v3535
      %v3568 = vunpack.c.l.b16 %v3536
      %v3569 = vunpack.c.l.b16 %v3537
      %v3570 = vpack.c.b16 %v3555, %v3554
      %v3571 = vpack.c.b16 %v3557, %v3556
      %v3572 = vpack.c.b16 %v3559, %v3558
      %v3573 = vpack.c.b16 %v3561, %v3560
      %v3574 = vpack.c.b16 %v3563, %v3562
      %v3575 = vpack.c.b16 %v3565, %v3564
      %v3576 = vpack.c.b16 %v3567, %v3566
      %v3577 = vpack.c.b16 %v3569, %v3568
      %3586 = vmatprep.subr.bf16.mxu0 0
      %3587 = vmatpush1.bf16.msra.mxu0 %v3570
      %3588 = vmatprep.subr.bf16.mxu0 0
      %3589 = vmatpush1.bf16.msra.mxu0 %v3571
      %3590 = vmatprep.subr.bf16.mxu0 0
      %3591 = vmatpush1.bf16.msra.mxu0 %v3572
      %3592 = vmatprep.subr.bf16.mxu0 0
      %3593 = vmatpush1.bf16.msra.mxu0 %v3573
      %3594 = vmatprep.subr.bf16.mxu0 0
      %3595 = vmatpush1.bf16.msra.mxu0 %v3574
      %3596 = vmatprep.subr.bf16.mxu0 0
      %3597 = vmatpush1.bf16.msra.mxu0 %v3575
      %3598 = vmatprep.subr.bf16.mxu0 0
      %3599 = vmatpush1.bf16.msra.mxu0 %v3576
      %3600 = vmatprep.subr.bf16.mxu0 0
      %3601 = vmatpush1.bf16.msra.mxu0 %v3577
      %3602 = vmatprep.subr.bf16.mxu0 0
      %3603 = vmatpush1.bf16.msra.mxu0 0
      %3604 = vmatprep.subr.bf16.mxu0 0
      %3605 = vmatpush1.bf16.msra.mxu0 0
      %3606 = vmatprep.subr.bf16.mxu0 0
      %3607 = vmatpush1.bf16.msra.mxu0 0
      %3608 = vmatprep.subr.bf16.mxu0 0
      %3609 = vmatpush1.bf16.msra.mxu0 0
      %3610 = vmatprep.subr.bf16.mxu0 0
      %3611 = vmatpush1.bf16.msra.mxu0 0
      %3612 = vmatprep.subr.bf16.mxu0 0
      %3613 = vmatpush1.bf16.msra.mxu0 0
      %3614 = vmatprep.subr.bf16.mxu0 0
      %3615 = vmatpush1.bf16.msra.mxu0 0
      %3616 = vmatprep.subr.bf16.mxu0 0
      %3617 = vmatpush1.bf16.msra.mxu0 0
      %3618 = vmatprep.mubr.bf16.mxu0 0
      %3619 = vmatmul.mubr.bf16.gmra.mrb[0].mxu0 %v3518
      %v3620 = vpop.f32.mrb[0].mxu0
      %v3621 = vadd.f32 0.0, %v3620
      %v3622 = vpop.f32.mrb[0].mxu0
      %v3623 = vpop.f32.mrb[0].mxu0
      %v3624 = vadd.f32 0.0, %v3623
      %v3625 = vpop.f32.mrb[0].mxu0
      %3626 = vmatprep.mubr.bf16.mxu0 0
      %3627 = vmatmul.mubr.bf16.gmra.mrb[0].mxu0 %v3519
      %v3628 = vpop.f32.mrb[0].mxu0
      %v3629 = vadd.f32 0.0, %v3628
      %v3630 = vpop.f32.mrb[0].mxu0
      %v3631 = vpop.f32.mrb[0].mxu0
      %v3632 = vadd.f32 0.0, %v3631
      %v3633 = vpop.f32.mrb[0].mxu0
      %3634 = vmatprep.mubr.bf16.mxu0 0
      %3635 = vmatmul.mubr.bf16.gmra.mrb[0].mxu0 %v3520
      %v3636 = vpop.f32.mrb[0].mxu0
      %v3637 = vadd.f32 0.0, %v3636
      %v3638 = vpop.f32.mrb[0].mxu0
      %v3639 = vpop.f32.mrb[0].mxu0
      %v3640 = vadd.f32 0.0, %v3639
      %v3641 = vpop.f32.mrb[0].mxu0
      %3642 = vmatprep.mubr.bf16.mxu0 0
      %3643 = vmatmul.mubr.bf16.gmra.mrb[0].mxu0 %v3521
      %v3644 = vpop.f32.mrb[0].mxu0
      %v3645 = vadd.f32 0.0, %v3644
      %v3646 = vpop.f32.mrb[0].mxu0
      %v3647 = vpop.f32.mrb[0].mxu0
      %v3648 = vadd.f32 0.0, %v3647
      %v3649 = vpop.f32.mrb[0].mxu0
      %3650 = vdwg.mxu0
      %v3651 = vadd.f32 %v3502, %v3621
      %v3652 = vadd.f32 %v3503, %v3624
      %v3653 = vadd.f32 %v3504, %v3629
      %v3654 = vadd.f32 %v3505, %v3632
      %v3655 = vadd.f32 %v3506, %v3637
      %v3656 = vadd.f32 %v3507, %v3640
      %v3657 = vadd.f32 %v3508, %v3645
      %v3658 = vadd.f32 %v3509, %v3648
      %v3659 = vld [vmem:[%s4] sm:$0x1]
      %v3661 = vlaneseq
      %v3662 = vshrl.u32 %v3661, 7
      %v3663 = vsub.s32 0, %v3662
      %v3664 = vrot.slane %v3659, %v3663
      %v3666 = vadd.f32 %v3651, %v3664
      %v3667 = vadd.f32 %v3652, %v3664
      %v3668 = vadd.f32 %v3653, %v3664
      %v3669 = vadd.f32 %v3654, %v3664
      %v3670 = vadd.f32 %v3655, %v3664
      %v3671 = vadd.f32 %v3656, %v3664
      %v3672 = vadd.f32 %v3657, %v3664
      %v3673 = vadd.f32 %v3658, %v3664
      %v3674 = vxor.u32 %v3666, 2147483648
      %v3675 = vxor.u32 %v3667, 2147483648
      %v3676 = vxor.u32 %v3668, 2147483648
      %v3677 = vxor.u32 %v3669, 2147483648
      %v3678 = vxor.u32 %v3670, 2147483648
      %v3679 = vxor.u32 %v3671, 2147483648
      %v3680 = vxor.u32 %v3672, 2147483648
      %v3681 = vxor.u32 %v3673, 2147483648
      %v3682 = vmul.f32 %v3674, 1.442695
      %v3683 = vpow.pop %v3682
      %v3684 = vmul.f32 %v3675, 1.442695
      %v3685 = vpow.pop %v3684
      %v3686 = vmul.f32 %v3676, 1.442695
      %v3687 = vpow.pop %v3686
      %v3688 = vmul.f32 %v3677, 1.442695
      %v3689 = vpow.pop %v3688
      %v3690 = vmul.f32 %v3678, 1.442695
      %v3691 = vpow.pop %v3690
      %v3692 = vmul.f32 %v3679, 1.442695
      %v3693 = vpow.pop %v3692
      %v3694 = vmul.f32 %v3680, 1.442695
      %v3695 = vpow.pop %v3694
      %v3696 = vmul.f32 %v3681, 1.442695
      %v3697 = vpow.pop %v3696
      %v3698 = vadd.f32 %v3683, 1.0
      %v3699 = vadd.f32 %v3685, 1.0
      %v3700 = vadd.f32 %v3687, 1.0
      %v3701 = vadd.f32 %v3689, 1.0
      %v3702 = vadd.f32 %v3691, 1.0
      %v3703 = vadd.f32 %v3693, 1.0
      %v3704 = vadd.f32 %v3695, 1.0
      %v3705 = vadd.f32 %v3697, 1.0
      %v3706 = vrcp.pop %v3698
      %v3707 = vmul.f32 1.0, %v3706
      %v3708 = vrcp.pop %v3699
      %v3709 = vmul.f32 1.0, %v3708
      %v3710 = vrcp.pop %v3700
      %v3711 = vmul.f32 1.0, %v3710
      %v3712 = vrcp.pop %v3701
      %v3713 = vmul.f32 1.0, %v3712
      %v3714 = vrcp.pop %v3702
      %v3715 = vmul.f32 1.0, %v3714
      %v3716 = vrcp.pop %v3703
      %v3717 = vmul.f32 1.0, %v3716
      %v3718 = vrcp.pop %v3704
      %v3719 = vmul.f32 1.0, %v3718
      %v3720 = vrcp.pop %v3705
      %v3721 = vmul.f32 1.0, %v3720
      %v3722 = vmul.f32 %v3666, %v3707
      %v3723 = vmul.f32 %v3667, %v3709
      %v3724 = vmul.f32 %v3668, %v3711
      %v3725 = vmul.f32 %v3669, %v3713
      %v3726 = vmul.f32 %v3670, %v3715
      %v3727 = vmul.f32 %v3671, %v3717
      %v3728 = vmul.f32 %v3672, %v3719
      %v3729 = vmul.f32 %v3673, %v3721
      %v3730 = vpack.c.bf16 %v3723, %v3722
      %v3731 = vpack.c.bf16 %v3725, %v3724
      %v3732 = vpack.c.bf16 %v3727, %v3726
      %v3733 = vpack.c.bf16 %v3729, %v3728
      %v3738 = vunpack.c.l.b16 %v3730
      %v3739 = vunpack.c.h.b16 %v3730
      %v3740 = vunpack.c.l.b16 %v3731
      %v3741 = vunpack.c.h.b16 %v3731
      %v3742 = vunpack.c.l.b16 %v3732
      %v3743 = vunpack.c.h.b16 %v3732
      %v3744 = vunpack.c.l.b16 %v3733
      %v3745 = vunpack.c.h.b16 %v3733
      %v3746 = vpack.c.b16 %v3738, %v3738
      %v3747 = vpack.c.b16 %v3739, %v3739
      %v3748 = vpack.c.b16 %v3740, %v3740
      %v3749 = vpack.c.b16 %v3741, %v3741
      %v3750 = vpack.c.b16 %v3742, %v3742
      %v3751 = vpack.c.b16 %v3743, %v3743
      %v3752 = vpack.c.b16 %v3744, %v3744
      %v3753 = vpack.c.b16 %v3745, %v3745
      %3762 = vst [vmem:[%s224] sm:$0xf] %v3746
      %3763 = vst [vmem:[%s224 + $0x4] sm:$0xf] %v3747
      %3764 = vst [vmem:[%s224 + $0x8] sm:$0xf] %v3748
      %3765 = vst [vmem:[%s224 + $0xc] sm:$0xf] %v3749
      %3766 = vst [vmem:[%s224 + $0x10] sm:$0xf] %v3750
      %3767 = vst [vmem:[%s224 + $0x14] sm:$0xf] %v3751
      %3768 = vst [vmem:[%s224 + $0x18] sm:$0xf] %v3752
      %3769 = vst [vmem:[%s224 + $0x1c] sm:$0xf] %v3753
      %p3770 = scmp.lt.s32.totalorder %s16, 1
      %s3771 = scalar_select %p3770, %s16, 1
      %s3772 = smul.addr %s3771, 8
      %s3773 = smul.addr %s3772, 4
      %s3774 = scalar_lea.vmem %s5, %s3773
      // Predicated region
      $region41: #{backbone_forward_pallas.2} parent=39 // pred_check
        %p3775 = pneg %p144
      $region42: #{backbone_forward_pallas.2} parent=39 // pred_check_branch
        %3777 = sbr.rel (%p3775) target = $region44
      $region43: #{backbone_forward_pallas.2} parent=39 // pred_region
        _
      $region44: #{backbone_forward_pallas.2} parent=39 // pred_fallthru
        _
    $region40: #{backbone_forward_pallas.2} parent=5 // pred_fallthru
      _
    %p3778 = scmp.le.s32.totalorder 2, %s11
    // Predicated region
    $region45: #{backbone_forward_pallas.2} parent=5 // pred_check
      %p3779 = pneg %p3778
    $region46: #{backbone_forward_pallas.2} parent=5 // pred_check_branch
      %3781 = sbr.rel (%p3779) target = $region48
    $region47: #{backbone_forward_pallas.2} parent=5 // pred_region
      %s3782 = ssub.s32 %s11, 2
      // Predicated region
      $region49: #{backbone_forward_pallas.2} parent=47 // pred_check
        %p3783 = pneg %p150
      $region50: #{backbone_forward_pallas.2} parent=47 // pred_check_branch
        %3785 = sbr.rel (%p3783) target = $region52
      $region51: #{backbone_forward_pallas.2} parent=47 // pred_region
        %p3786 = scmp.lt.s32.totalorder %s17, 1
        %s3787 = scalar_select %p3786, %s17, 1
        %s3788 = smul.addr %s3787, 8
        %s3789 = smul.addr %s3788, 4
        %s3790 = scalar_lea.vmem %s5, %s3789
      $region52: #{backbone_forward_pallas.2} parent=47 // pred_fallthru
        _
    $region48: #{backbone_forward_pallas.2} parent=5 // pred_fallthru
      _
  $region6: #{backbone_forward_pallas.2} parent=0 // loop_footer
    %s15 = sadd.s32 1, %s11
  $region7: #{backbone_forward_pallas.2} parent=0 // loop_footer_branch
    %10 = sbr.rel target = $region3
  $region8: #{backbone_forward_pallas.2} parent=0 // loop_exit
    _

</llo_original>
